<compile_context>
chip_gen: v5e
topology: v5e:2x2
jax: 0.10.0
libtpu: 0.0.40
codegen_flags: <defaults>
</compile_context>

<pallas_src>
import jax
import jax.numpy as jnp
from jax.experimental import pallas as pl
from jax.experimental.pallas import tpu as pltpu

EPS = 1e-5                    # PyTorch BatchNorm2d default
H_TRUE, H_PAD = 500, 512      # fc hidden width, padded to a lane multiple
OUT_TRUE, OUT_PAD = 5, 128    # fc output width, padded to a full lane tile
CONV_CH = (1, 4, 8, 8)        # channel progression of cnn1


def _vmem_spec():
    return pl.BlockSpec(memory_space=pltpu.MemorySpace.VMEM)


# ---------------------------------------------------------------------------
# Kernel 1: fused cnn1 stack (3x [reflect-pad -> conv3x3 -> ReLU -> BatchNorm])
# ---------------------------------------------------------------------------
def _make_cnn_kernel(n, s, n1):
    hp = wp = s + 2
    m = n * hp * wp
    margin = 2 * wp
    cnt_a = float(n1 * s * s)           # BN count for branch 1 (per channel)
    cnt_b = float((n - n1) * s * s)     # BN count for branch 2

    def kernel(x_ref, row_ref, col_ref, ma_ref, mb_ref,
               w1_ref, b1_ref, g1_ref, t1_ref,
               w2_ref, b2_ref, g2_ref, t2_ref,
               w3_ref, b3_ref, g3_ref, t3_ref,
               out_ref):
        row = row_ref[...]              # (1, M) int32 padded-row index
        col = col_ref[...]              # (1, M) int32 padded-col index
        ma = ma_ref[...]                # (1, M) f32: interior & branch-1 mask
        mb = mb_ref[...]                # (1, M) f32: interior & branch-2 mask

        def extend(v):                  # zero margin so lane shifts are plain slices
            z = jnp.zeros((v.shape[0], margin), v.dtype)
            return jnp.concatenate([z, v, z], axis=1)

        def shifted(ext, d):            # shifted[:, p] == orig[:, p + d] (valid p)
            return ext[:, margin + d: margin + d + m]

        def conv_relu_bn(f, w_ref_, b_ref_, g_ref_, t_ref_):
            w = w_ref_[...]             # (Cout, 9*Cin) bf16
            b = b_ref_[...]             # (Cout, 1) f32 conv bias
            g = g_ref_[...]             # (Cout, 1) f32 BN weight
            t = t_ref_[...]             # (Cout, 1) f32 BN bias
            ext = extend(f)
            taps = [shifted(ext, (ky - 1) * wp + (kx - 1))
                    for ky in range(3) for kx in range(3)]
            # single MXU matmul per layer (taps collapsed along K)
            cols = jnp.concatenate(taps, axis=0).astype(jnp.bfloat16)    # (9Cin, M)
            acc = jnp.dot(w, cols, preferred_element_type=jnp.float32)   # (Cout, M)
            h = jnp.maximum(acc + b, 0.0)                                # bias + ReLU

            # BatchNorm2d (training-mode batch stats, biased variance), computed
            # per siamese branch over that branch's interior positions only, then
            # applied as a single fused scale/shift pass.
            def bn_affine(mask, cnt):
                mean = jnp.sum(h * mask, axis=1, keepdims=True) / cnt
                var = jnp.sum(mask * jnp.square(h - mean), axis=1,
                              keepdims=True) / cnt
                scale = g * jax.lax.rsqrt(var + EPS)
                return scale, t - mean * scale

            sa, fa = bn_affine(ma, cnt_a)
            sb, fb = bn_affine(mb, cnt_b)
            # borders (both masks zero) become exactly 0
            return h * (sa * ma + sb * mb) + (fa * ma + fb * mb)

        def reflect_pad(y):             # rewrite the padding ring from interior values
            ext = extend(y)
            y = jnp.where(row == 0, shifted(ext, 2 * wp), y)
            y = jnp.where(row == hp - 1, shifted(ext, -2 * wp), y)
            ext = extend(y)
            y = jnp.where(col == 0, shifted(ext, 2), y)
            y = jnp.where(col == wp - 1, shifted(ext, -2), y)
            return y

        y = conv_relu_bn(x_ref[...], w1_ref, b1_ref, g1_ref, t1_ref)      # (4, M)
        y = conv_relu_bn(reflect_pad(y), w2_ref, b2_ref, g2_ref, t2_ref)  # (8, M)
        y = conv_relu_bn(reflect_pad(y), w3_ref, b3_ref, g3_ref, t3_ref)  # (8, M)
        out_ref[...] = y.astype(out_ref.dtype)                            # lane-dense store

    return kernel


# ---------------------------------------------------------------------------
# Kernel 2: fc1 = Linear -> ReLU -> Linear -> ReLU -> Linear
# (grid over the 8 conv channels = K-tiling of the first Linear)
# ---------------------------------------------------------------------------
def _mlp_kernel(x_ref, w1_ref, b1_ref, w2_ref, b2_ref, w3_ref, b3_ref,
                out_ref, acc_ref):
    c = pl.program_id(0)

    @pl.when(c == 0)
    def _():
        acc_ref[...] = jnp.zeros_like(acc_ref)

    # one channel-block of W1 per grid step, f32 accumulation in VMEM scratch
    acc_ref[...] += jnp.dot(x_ref[0], w1_ref[0],
                            preferred_element_type=jnp.float32)

    @pl.when(c == pl.num_programs(0) - 1)
    def _():
        h = jnp.maximum(acc_ref[...] + b1_ref[...], 0.0)
        h = jnp.dot(h.astype(jnp.bfloat16), w2_ref[...],
                    preferred_element_type=jnp.float32) + b2_ref[...]
        h = jnp.maximum(h, 0.0)
        out_ref[...] = jnp.dot(h.astype(jnp.bfloat16), w3_ref[...],
                               preferred_element_type=jnp.float32) + b3_ref[...]


# ---------------------------------------------------------------------------
# Wrapper (layout plumbing only; all hot-path compute is in the two kernels)
# ---------------------------------------------------------------------------
def _forward_batched(x_nchw, n1, params):
    n, _, s, _ = x_nchw.shape
    hp = wp = s + 2
    m = n * hp * wp

    # ReflectionPad2d(1) of the raw input (tiny, once); the two inner pads happen
    # inside the fused kernel.  Flat channel-major lane-dense layout (Cin=1, M).
    xpad = jnp.pad(x_nchw[:, 0].astype(jnp.float32),
                   ((0, 0), (1, 1), (1, 1)), mode="reflect")
    xflat = xpad.reshape(1, m)

    pos = jnp.arange(m, dtype=jnp.int32)
    col = pos % wp
    row = (pos // wp) % hp
    img = pos // (hp * wp)
    interior = (row >= 1) & (row <= s) & (col >= 1) & (col <= s)
    mask_a = (interior & (img < n1)).astype(jnp.float32).reshape(1, m)
    mask_b = (interior & (img >= n1)).astype(jnp.float32).reshape(1, m)
    row = row.reshape(1, m)
    col = col.reshape(1, m)

    conv_args = []
    for (w, b, g, t) in params["convs"]:
        conv_args += [w, b, g, t]

    feats = pl.pallas_call(
        _make_cnn_kernel(n, s, n1),
        out_shape=jax.ShapeDtypeStruct((CONV_CH[-1], m), jnp.bfloat16),
        in_specs=[_vmem_spec() for _ in range(5 + len(conv_args))],
        out_specs=_vmem_spec(),
    )(xflat, row, col, mask_a, mask_b, *conv_args)
    # TODO(synk): at the real 100x100 size, shard the conv over batch images with a
    # 'parallel' grid axis (v7x megacore) and turn BN into an accumulated-stats
    # two-pass reduction across tiles.

    # (C, M) -> (C, N, Hp*Wp): trailing split only, no relayout / transpose.
    feats = feats.reshape(CONV_CH[-1], n, hp * wp)

    w1, b1, w2, b2, w3, b3 = params["fc"]
    k = hp * wp
    logits = pl.pallas_call(
        _mlp_kernel,
        out_shape=jax.ShapeDtypeStruct((n, OUT_PAD), jnp.float32),
        grid_spec=pltpu.PrefetchScalarGridSpec(
            num_scalar_prefetch=0,
            grid=(CONV_CH[-1],),
            in_specs=[
                pl.BlockSpec((1, n, k), lambda c: (c, 0, 0)),
                pl.BlockSpec((1, k, H_PAD), lambda c: (c, 0, 0)),
                pl.BlockSpec((1, H_PAD), lambda c: (0, 0)),
                pl.BlockSpec((H_PAD, H_PAD), lambda c: (0, 0)),
                pl.BlockSpec((1, H_PAD), lambda c: (0, 0)),
                pl.BlockSpec((H_PAD, OUT_PAD), lambda c: (0, 0)),
                pl.BlockSpec((1, OUT_PAD), lambda c: (0, 0)),
            ],
            out_specs=pl.BlockSpec((n, OUT_PAD), lambda c: (0, 0)),
            scratch_shapes=[pltpu.VMEM((n, H_PAD), jnp.float32)],
        ),
        compiler_params=pltpu.CompilerParams(
            dimension_semantics=("arbitrary",)),
    )(feats, w1, b1, w2, b2, w3, b3)
    # TODO(synk): at fc_in = 8*100*100 each channel block of W1 is ~10.7 MB bf16;
    # sub-tile the K axis further and raise vmem_limit_bytes (v5e/v7x) before
    # scaling this demo up to the reference's 100x100 input.

    return logits[:, :OUT_TRUE]


def siamese_forward(input1, input2, params):
    """forward(input1, input2) -> (forward_once(input1), forward_once(input2))."""
    n1 = input1.shape[0]
    x = jnp.concatenate([input1, input2], axis=0)   # batch the two branches
    out = _forward_batched(x, n1, params)
    return out[:n1], out[n1:]


# ---------------------------------------------------------------------------
# Deterministic parameter initialization (shapes from the module's __init__)
# ---------------------------------------------------------------------------
def init_params(key, spatial):
    s = spatial
    hp = wp = s + 2

    def conv_p(k, cin, cout):
        kw, kb = jax.random.split(k)
        # PyTorch layout (cout, cin, 3, 3) -> (cout, ky, kx, cin) -> (cout, 9*cin)
        w_pt = jax.random.normal(kw, (cout, cin, 3, 3), jnp.float32) * 0.1
        w = jnp.transpose(w_pt, (0, 2, 3, 1)).reshape(cout, 9 * cin)
        b = jax.random.normal(kb, (cout, 1), jnp.float32) * 0.1
        gamma = jnp.ones((cout, 1), jnp.float32)    # BatchNorm weight
        beta = jnp.zeros((cout, 1), jnp.float32)    # BatchNorm bias
        return (w.astype(jnp.bfloat16), b, gamma, beta)

    def fc1_p(k):
        fc_in = 8 * s * s                           # Linear(8 * H * W, 500)
        kw, kb = jax.random.split(k)
        w = jax.random.normal(kw, (fc_in, H_TRUE), jnp.float32) * (fc_in ** -0.5)
        b = jax.random.normal(kb, (H_TRUE,), jnp.float32) * 0.01
        # Permute/zero-pad W1 rows ONCE at init into the kernel's padded
        # channel-major layout (8, Hp*Wp, 512).  Rows at padding positions are
        # zero, interior rows follow PyTorch's channel-major .view(N,-1) order,
        # so no transpose is needed on the hot path.
        w = w.reshape(8, s, s, H_TRUE)
        w = jnp.pad(w, ((0, 0), (1, 1), (1, 1), (0, H_PAD - H_TRUE)))
        w = w.reshape(8, hp * wp, H_PAD).astype(jnp.bfloat16)
        b = jnp.pad(b, (0, H_PAD - H_TRUE)).reshape(1, H_PAD)
        return w, b

    def fc2_p(k):
        kw, kb = jax.random.split(k)
        w = jax.random.normal(kw, (H_TRUE, H_TRUE), jnp.float32) * (H_TRUE ** -0.5)
        b = jax.random.normal(kb, (H_TRUE,), jnp.float32) * 0.01
        w = jnp.pad(w, ((0, H_PAD - H_TRUE), (0, H_PAD - H_TRUE))).astype(jnp.bfloat16)
        b = jnp.pad(b, (0, H_PAD - H_TRUE)).reshape(1, H_PAD)
        return w, b

    def fc3_p(k):
        kw, kb = jax.random.split(k)
        w = jax.random.normal(kw, (H_TRUE, OUT_TRUE), jnp.float32) * (H_TRUE ** -0.5)
        b = jax.random.normal(kb, (OUT_TRUE,), jnp.float32) * 0.01
        w = jnp.pad(w, ((0, H_PAD - H_TRUE), (0, OUT_PAD - OUT_TRUE))).astype(jnp.bfloat16)
        b = jnp.pad(b, (0, OUT_PAD - OUT_TRUE)).reshape(1, OUT_PAD)
        return w, b

    ks = jax.random.split(key, 6)
    convs = [conv_p(ks[0], 1, 4), conv_p(ks[1], 4, 8), conv_p(ks[2], 8, 8)]
    w1, b1 = fc1_p(ks[3])
    w2, b2 = fc2_p(ks[4])
    w3, b3 = fc3_p(ks[5])
    return {"convs": convs, "fc": (w1, b1, w2, b2, w3, b3)}


# ---------------------------------------------------------------------------
if __name__ == "__main__":
    SPATIAL = 16   # reference implies 100x100; kept small (fc_in = 8*16*16)
    BATCH = 2

    key = jax.random.PRNGKey(0)
    kp, k1, k2 = jax.random.split(key, 3)
    params = init_params(kp, SPATIAL)

    # NCHW inputs, 1 channel, like the PyTorch reference.
    input1 = jax.random.normal(k1, (BATCH, 1, SPATIAL, SPATIAL), jnp.float32)
    input2 = jax.random.normal(k2, (BATCH, 1, SPATIAL, SPATIAL), jnp.float32)

    out1, out2 = jax.jit(siamese_forward)(input1, input2, params)
    jax.block_until_ready((out1, out2))

    assert out1.shape == (BATCH, 5) and out2.shape == (BATCH, 5)
    assert bool(jnp.all(jnp.isfinite(out1))) and bool(jnp.all(jnp.isfinite(out2)))
    print("KERNEL_OK")
</pallas_src>

<mosaic_0001>
module attributes {stable_mosaic.version = 11 : i64} {
  func.func @_mlp_kernel(%arg0: i32, %arg1: memref<1x4x324xbf16, #tpu.memory_space<vmem>>, %arg2: memref<1x324x512xbf16, #tpu.memory_space<vmem>>, %arg3: memref<1x512xf32, #tpu.memory_space<vmem>>, %arg4: memref<512x512xbf16, #tpu.memory_space<vmem>>, %arg5: memref<1x512xf32, #tpu.memory_space<vmem>>, %arg6: memref<512x128xbf16, #tpu.memory_space<vmem>>, %arg7: memref<1x128xf32, #tpu.memory_space<vmem>>, %arg8: memref<4x128xf32, #tpu.memory_space<vmem>>, %arg9: memref<4x512xf32, #tpu.memory_space<vmem>>) attributes {dimension_semantics = [#tpu.dimension_semantics<arbitrary>], iteration_bounds = array<i64: 8>, scalar_prefetch = 0 : i64, scratch_operands = 1 : i64, tpu.core_type = #tpu.core_type<tc>, window_params = [{transform_indices = @transform_0, window_bounds = array<i64: 1, 4, 324>}, {transform_indices = @transform_1, window_bounds = array<i64: 1, 324, 512>}, {pipeline_mode = #tpu.pipeline_mode<synchronous>, transform_indices = @transform_2, window_bounds = array<i64: 1, 512>}, {pipeline_mode = #tpu.pipeline_mode<synchronous>, transform_indices = @transform_3, window_bounds = array<i64: 512, 512>}, {pipeline_mode = #tpu.pipeline_mode<synchronous>, transform_indices = @transform_4, window_bounds = array<i64: 1, 512>}, {pipeline_mode = #tpu.pipeline_mode<synchronous>, transform_indices = @transform_5, window_bounds = array<i64: 512, 128>}, {pipeline_mode = #tpu.pipeline_mode<synchronous>, transform_indices = @transform_6, window_bounds = array<i64: 1, 128>}, {pipeline_mode = #tpu.pipeline_mode<synchronous>, transform_indices = @transform_7, window_bounds = array<i64: 4, 128>}]} {
    %c0_i32 = arith.constant 0 : i32
    %0 = arith.cmpi eq, %arg0, %c0_i32 : i32
    %1 = arith.extui %0 : i1 to i32
    %c0_i32_0 = arith.constant 0 : i32
    %2 = arith.cmpi ne, %1, %c0_i32_0 : i32
    scf.if %2 {
      %cst_11 = arith.constant 0.000000e+00 : f32
      %14 = vector.broadcast %cst_11 : f32 to vector<4x512xf32>
      %c0_12 = arith.constant 0 : index
      %c0_13 = arith.constant 0 : index
      %15 = vector.load %arg9[%c0_12, %c0_13] : memref<4x512xf32, #tpu.memory_space<vmem>>, vector<4x512xf32>
      tpu.vector_store %arg9[%c0_12, %c0_13], %14 {strides = array<i32>} : memref<4x512xf32, #tpu.memory_space<vmem>>, vector<4x512xf32>,
    } else {
    }
    %c0 = arith.constant 0 : index
    %c0_1 = arith.constant 0 : index
    %3 = vector.load %arg9[%c0, %c0_1] : memref<4x512xf32, #tpu.memory_space<vmem>>, vector<4x512xf32>
    %c0_2 = arith.constant 0 : index
    %c0_3 = arith.constant 0 : index
    %c0_4 = arith.constant 0 : index
    %4 = vector.load %arg1[%c0_2, %c0_3, %c0_4] : memref<1x4x324xbf16, #tpu.memory_space<vmem>>, vector<1x4x324xbf16>
    %5 = vector.shape_cast %4 : vector<1x4x324xbf16> to vector<4x324xbf16>
    %c0_5 = arith.constant 0 : index
    %c0_6 = arith.constant 0 : index
    %c0_7 = arith.constant 0 : index
    %6 = vector.load %arg2[%c0_5, %c0_6, %c0_7] : memref<1x324x512xbf16, #tpu.memory_space<vmem>>, vector<1x324x512xbf16>
    %7 = vector.shape_cast %6 : vector<1x324x512xbf16> to vector<324x512xbf16>
    %cst = arith.constant dense<0.000000e+00> : vector<4x512xf32>
    %8 = tpu.matmul %5, %7, %cst {dimension_numbers = #tpu.dot_dimension_numbers<[1], [0], [0], [1], [0, 0, 1, 1], [], []>} : vector<4x324xbf16>, vector<324x512xbf16>, vector<4x512xf32> -> vector<4x512xf32>
    %9 = arith.addf %3, %8 : vector<4x512xf32>
    %c0_8 = arith.constant 0 : index
    %c0_9 = arith.constant 0 : index
    %10 = vector.load %arg9[%c0_8, %c0_9] : memref<4x512xf32, #tpu.memory_space<vmem>>, vector<4x512xf32>
    tpu.vector_store %arg9[%c0_8, %c0_9], %9 {strides = array<i32>} : memref<4x512xf32, #tpu.memory_space<vmem>>, vector<4x512xf32>,
    %c7_i32 = arith.constant 7 : i32
    %11 = arith.cmpi eq, %arg0, %c7_i32 : i32
    %12 = arith.extui %11 : i1 to i32
    %c0_i32_10 = arith.constant 0 : i32
    %13 = arith.cmpi ne, %12, %c0_i32_10 : i32
    scf.if %13 {
      %c0_11 = arith.constant 0 : index
      %c0_12 = arith.constant 0 : index
      %14 = vector.load %arg9[%c0_11, %c0_12] : memref<4x512xf32, #tpu.memory_space<vmem>>, vector<4x512xf32>
      %c0_13 = arith.constant 0 : index
      %c0_14 = arith.constant 0 : index
      %15 = vector.load %arg3[%c0_13, %c0_14] : memref<1x512xf32, #tpu.memory_space<vmem>>, vector<1x512xf32>
      %16 = vector.broadcast %15 : vector<1x512xf32> to vector<4x512xf32>
      %17 = arith.addf %14, %16 : vector<4x512xf32>
      %cst_15 = arith.constant 0.000000e+00 : f32
      %18 = vector.broadcast %cst_15 : f32 to vector<4x512xf32>
      %19 = arith.maximumf %17, %18 : vector<4x512xf32>
      %20 = arith.truncf %19 : vector<4x512xf32> to vector<4x512xbf16>
      %c0_16 = arith.constant 0 : index
      %c0_17 = arith.constant 0 : index
      %21 = vector.load %arg4[%c0_16, %c0_17] : memref<512x512xbf16, #tpu.memory_space<vmem>>, vector<512x512xbf16>
      %cst_18 = arith.constant dense<0.000000e+00> : vector<4x512xf32>
      %22 = tpu.matmul %20, %21, %cst_18 {dimension_numbers = #tpu.dot_dimension_numbers<[1], [0], [0], [1], [0, 0, 1, 1], [], []>} : vector<4x512xbf16>, vector<512x512xbf16>, vector<4x512xf32> -> vector<4x512xf32>
      %c0_19 = arith.constant 0 : index
      %c0_20 = arith.constant 0 : index
      %23 = vector.load %arg5[%c0_19, %c0_20] : memref<1x512xf32, #tpu.memory_space<vmem>>, vector<1x512xf32>
      %24 = vector.broadcast %23 : vector<1x512xf32> to vector<4x512xf32>
      %25 = arith.addf %22, %24 : vector<4x512xf32>
      %cst_21 = arith.constant 0.000000e+00 : f32
      %26 = vector.broadcast %cst_21 : f32 to vector<4x512xf32>
      %27 = arith.maximumf %25, %26 : vector<4x512xf32>
      %28 = arith.truncf %27 : vector<4x512xf32> to vector<4x512xbf16>
      %c0_22 = arith.constant 0 : index
      %c0_23 = arith.constant 0 : index
      %29 = vector.load %arg6[%c0_22, %c0_23] : memref<512x128xbf16, #tpu.memory_space<vmem>>, vector<512x128xbf16>
      %cst_24 = arith.constant dense<0.000000e+00> : vector<4x128xf32>
      %30 = tpu.matmul %28, %29, %cst_24 {dimension_numbers = #tpu.dot_dimension_numbers<[1], [0], [0], [1], [0, 0, 1, 1], [], []>} : vector<4x512xbf16>, vector<512x128xbf16>, vector<4x128xf32> -> vector<4x128xf32>
      %c0_25 = arith.constant 0 : index
      %c0_26 = arith.constant 0 : index
      %31 = vector.load %arg7[%c0_25, %c0_26] : memref<1x128xf32, #tpu.memory_space<vmem>>, vector<1x128xf32>
      %32 = vector.broadcast %31 : vector<1x128xf32> to vector<4x128xf32>
      %33 = arith.addf %30, %32 : vector<4x128xf32>
      %c0_27 = arith.constant 0 : index
      %c0_28 = arith.constant 0 : index
      %34 = vector.load %arg8[%c0_27, %c0_28] : memref<4x128xf32, #tpu.memory_space<vmem>>, vector<4x128xf32>
      tpu.vector_store %arg8[%c0_27, %c0_28], %33 {strides = array<i32>} : memref<4x128xf32, #tpu.memory_space<vmem>>, vector<4x128xf32>,
    } else {
    }
    return
  }
  func.func @transform_0(%arg0: i32) -> (i32, i32, i32) {
    %c0_i32 = arith.constant 0 : i32
    %c0_i32_0 = arith.constant 0 : i32
    %c0_i32_1 = arith.constant 0 : i32
    return %arg0, %c0_i32, %c0_i32_0 : i32, i32, i32
  }
  func.func @transform_1(%arg0: i32) -> (i32, i32, i32) {
    %c0_i32 = arith.constant 0 : i32
    %c0_i32_0 = arith.constant 0 : i32
    %c0_i32_1 = arith.constant 0 : i32
    return %arg0, %c0_i32, %c0_i32_0 : i32, i32, i32
  }
  func.func @transform_2(%arg0: i32) -> (i32, i32) {
    %c0_i32 = arith.constant 0 : i32
    %c0_i32_0 = arith.constant 0 : i32
    %c0_i32_1 = arith.constant 0 : i32
    return %c0_i32, %c0_i32_0 : i32, i32
  }
  func.func @transform_3(%arg0: i32) -> (i32, i32) {
    %c0_i32 = arith.constant 0 : i32
    %c0_i32_0 = arith.constant 0 : i32
    %c0_i32_1 = arith.constant 0 : i32
    return %c0_i32, %c0_i32_0 : i32, i32
  }
  func.func @transform_4(%arg0: i32) -> (i32, i32) {
    %c0_i32 = arith.constant 0 : i32
    %c0_i32_0 = arith.constant 0 : i32
    %c0_i32_1 = arith.constant 0 : i32
    return %c0_i32, %c0_i32_0 : i32, i32
  }
  func.func @transform_5(%arg0: i32) -> (i32, i32) {
    %c0_i32 = arith.constant 0 : i32
    %c0_i32_0 = arith.constant 0 : i32
    %c0_i32_1 = arith.constant 0 : i32
    return %c0_i32, %c0_i32_0 : i32, i32
  }
  func.func @transform_6(%arg0: i32) -> (i32, i32) {
    %c0_i32 = arith.constant 0 : i32
    %c0_i32_0 = arith.constant 0 : i32
    %c0_i32_1 = arith.constant 0 : i32
    return %c0_i32, %c0_i32_0 : i32, i32
  }
  func.func @transform_7(%arg0: i32) -> (i32, i32) {
    %c0_i32 = arith.constant 0 : i32
    %c0_i32_0 = arith.constant 0 : i32
    %c0_i32_1 = arith.constant 0 : i32
    return %c0_i32, %c0_i32_0 : i32, i32
  }
}

module attributes {stable_mosaic.version = 11 : i64} {
  func.func @kernel(%arg0: memref<1x1296xf32, #tpu.memory_space<vmem>>, %arg1: memref<1x1296xi32, #tpu.memory_space<vmem>>, %arg2: memref<1x1296xi32, #tpu.memory_space<vmem>>, %arg3: memref<1x1296xf32, #tpu.memory_space<vmem>>, %arg4: memref<1x1296xf32, #tpu.memory_space<vmem>>, %arg5: memref<4x9xbf16, #tpu.memory_space<vmem>>, %arg6: memref<4x1xf32, #tpu.memory_space<vmem>>, %arg7: memref<4x1xf32, #tpu.memory_space<vmem>>, %arg8: memref<4x1xf32, #tpu.memory_space<vmem>>, %arg9: memref<8x36xbf16, #tpu.memory_space<vmem>>, %arg10: memref<8x1xf32, #tpu.memory_space<vmem>>, %arg11: memref<8x1xf32, #tpu.memory_space<vmem>>, %arg12: memref<8x1xf32, #tpu.memory_space<vmem>>, %arg13: memref<8x72xbf16, #tpu.memory_space<vmem>>, %arg14: memref<8x1xf32, #tpu.memory_space<vmem>>, %arg15: memref<8x1xf32, #tpu.memory_space<vmem>>, %arg16: memref<8x1xf32, #tpu.memory_space<vmem>>, %arg17: memref<8x1296xbf16, #tpu.memory_space<vmem>>) attributes {dimension_semantics = [], scalar_prefetch = 0 : i64, scratch_operands = 0 : i64, tpu.core_type = #tpu.core_type<tc>} {
    %c0 = arith.constant 0 : index
    %c0_0 = arith.constant 0 : index
    %0 = vector.load %arg1[%c0, %c0_0] : memref<1x1296xi32, #tpu.memory_space<vmem>>, vector<1x1296xi32>
    %c0_1 = arith.constant 0 : index
    %c0_2 = arith.constant 0 : index
    %1 = vector.load %arg2[%c0_1, %c0_2] : memref<1x1296xi32, #tpu.memory_space<vmem>>, vector<1x1296xi32>
    %c0_3 = arith.constant 0 : index
    %c0_4 = arith.constant 0 : index
    %2 = vector.load %arg3[%c0_3, %c0_4] : memref<1x1296xf32, #tpu.memory_space<vmem>>, vector<1x1296xf32>
    %c0_5 = arith.constant 0 : index
    %c0_6 = arith.constant 0 : index
    %3 = vector.load %arg4[%c0_5, %c0_6] : memref<1x1296xf32, #tpu.memory_space<vmem>>, vector<1x1296xf32>
    %c0_7 = arith.constant 0 : index
    %c0_8 = arith.constant 0 : index
    %4 = vector.load %arg0[%c0_7, %c0_8] : memref<1x1296xf32, #tpu.memory_space<vmem>>, vector<1x1296xf32>
    %c0_9 = arith.constant 0 : index
    %c0_10 = arith.constant 0 : index
    %5 = vector.load %arg5[%c0_9, %c0_10] : memref<4x9xbf16, #tpu.memory_space<vmem>>, vector<4x9xbf16>
    %c0_11 = arith.constant 0 : index
    %c0_12 = arith.constant 0 : index
    %6 = vector.load %arg6[%c0_11, %c0_12] : memref<4x1xf32, #tpu.memory_space<vmem>>, vector<4x1xf32>
    %c0_13 = arith.constant 0 : index
    %c0_14 = arith.constant 0 : index
    %7 = vector.load %arg7[%c0_13, %c0_14] : memref<4x1xf32, #tpu.memory_space<vmem>>, vector<4x1xf32>
    %c0_15 = arith.constant 0 : index
    %c0_16 = arith.constant 0 : index
    %8 = vector.load %arg8[%c0_15, %c0_16] : memref<4x1xf32, #tpu.memory_space<vmem>>, vector<4x1xf32>
    %cst = arith.constant 0.000000e+00 : f32
    %9 = vector.broadcast %cst : f32 to vector<1x36xf32>
    %10 = tpu.concatenate %9, %4, %9 in 1 : vector<1x36xf32>, vector<1x1296xf32>, vector<1x36xf32> -> vector<1x1368xf32>
    %11 = vector.extract_strided_slice %10 {offsets = [0, 17], sizes = [1, 1296], strides = [1, 1]} : vector<1x1368xf32> to vector<1x1296xf32>
    %12 = vector.extract_strided_slice %10 {offsets = [0, 18], sizes = [1, 1296], strides = [1, 1]} : vector<1x1368xf32> to vector<1x1296xf32>
    %13 = vector.extract_strided_slice %10 {offsets = [0, 19], sizes = [1, 1296], strides = [1, 1]} : vector<1x1368xf32> to vector<1x1296xf32>
    %14 = vector.extract_strided_slice %10 {offsets = [0, 35], sizes = [1, 1296], strides = [1, 1]} : vector<1x1368xf32> to vector<1x1296xf32>
    %15 = vector.extract_strided_slice %10 {offsets = [0, 36], sizes = [1, 1296], strides = [1, 1]} : vector<1x1368xf32> to vector<1x1296xf32>
    %16 = vector.extract_strided_slice %10 {offsets = [0, 37], sizes = [1, 1296], strides = [1, 1]} : vector<1x1368xf32> to vector<1x1296xf32>
    %17 = vector.extract_strided_slice %10 {offsets = [0, 53], sizes = [1, 1296], strides = [1, 1]} : vector<1x1368xf32> to vector<1x1296xf32>
    %18 = vector.extract_strided_slice %10 {offsets = [0, 54], sizes = [1, 1296], strides = [1, 1]} : vector<1x1368xf32> to vector<1x1296xf32>
    %19 = vector.extract_strided_slice %10 {offsets = [0, 55], sizes = [1, 1296], strides = [1, 1]} : vector<1x1368xf32> to vector<1x1296xf32>
    %20 = tpu.concatenate %11, %12, %13, %14, %15, %16, %17, %18, %19 in 0 : vector<1x1296xf32>, vector<1x1296xf32>, vector<1x1296xf32>, vector<1x1296xf32>, vector<1x1296xf32>, vector<1x1296xf32>, vector<1x1296xf32>, vector<1x1296xf32>, vector<1x1296xf32> -> vector<9x1296xf32>
    %21 = arith.truncf %20 : vector<9x1296xf32> to vector<9x1296xbf16>
    %cst_17 = arith.constant dense<0.000000e+00> : vector<4x1296xf32>
    %22 = tpu.matmul %5, %21, %cst_17 {dimension_numbers = #tpu.dot_dimension_numbers<[1], [0], [0], [1], [0, 0, 1, 1], [], []>} : vector<4x9xbf16>, vector<9x1296xbf16>, vector<4x1296xf32> -> vector<4x1296xf32>
    %23 = vector.broadcast %6 : vector<4x1xf32> to vector<4x1296xf32>
    %24 = arith.addf %22, %23 : vector<4x1296xf32>
    %cst_18 = arith.constant 0.000000e+00 : f32
    %25 = vector.broadcast %cst_18 : f32 to vector<4x1296xf32>
    %26 = arith.maximumf %24, %25 : vector<4x1296xf32>
    %27 = vector.broadcast %2 : vector<1x1296xf32> to vector<4x1296xf32>
    %28 = arith.mulf %26, %27 : vector<4x1296xf32>
    %cst_19 = arith.constant dense<0.000000e+00> : vector<4xf32>
    %29 = vector.multi_reduction <add>, %28, %cst_19 [1] : vector<4x1296xf32> to vector<4xf32>
    %30 = vector.shape_cast %29 : vector<4xf32> to vector<4x1xf32>
    %cst_20 = arith.constant 5.120000e+02 : f32
    %31 = vector.broadcast %cst_20 : f32 to vector<4x1xf32>
    %32 = arith.divf %30, %31 : vector<4x1xf32>
    %33 = vector.broadcast %32 : vector<4x1xf32> to vector<4x1296xf32>
    %34 = arith.subf %26, %33 : vector<4x1296xf32>
    %35 = arith.mulf %34, %34 : vector<4x1296xf32>
    %36 = vector.broadcast %2 : vector<1x1296xf32> to vector<4x1296xf32>
    %37 = arith.mulf %36, %35 : vector<4x1296xf32>
    %cst_21 = arith.constant dense<0.000000e+00> : vector<4xf32>
    %38 = vector.multi_reduction <add>, %37, %cst_21 [1] : vector<4x1296xf32> to vector<4xf32>
    %39 = vector.shape_cast %38 : vector<4xf32> to vector<4x1xf32>
    %cst_22 = arith.constant 5.120000e+02 : f32
    %40 = vector.broadcast %cst_22 : f32 to vector<4x1xf32>
    %41 = arith.divf %39, %40 : vector<4x1xf32>
    %cst_23 = arith.constant 9.99999974E-6 : f32
    %42 = vector.broadcast %cst_23 : f32 to vector<4x1xf32>
    %43 = arith.addf %41, %42 : vector<4x1xf32>
    %44 = math.rsqrt %43 : vector<4x1xf32>
    %45 = arith.mulf %7, %44 : vector<4x1xf32>
    %46 = arith.mulf %32, %45 : vector<4x1xf32>
    %47 = arith.subf %8, %46 : vector<4x1xf32>
    %48 = vector.broadcast %3 : vector<1x1296xf32> to vector<4x1296xf32>
    %49 = arith.mulf %26, %48 : vector<4x1296xf32>
    %cst_24 = arith.constant dense<0.000000e+00> : vector<4xf32>
    %50 = vector.multi_reduction <add>, %49, %cst_24 [1] : vector<4x1296xf32> to vector<4xf32>
    %51 = vector.shape_cast %50 : vector<4xf32> to vector<4x1xf32>
    %cst_25 = arith.constant 5.120000e+02 : f32
    %52 = vector.broadcast %cst_25 : f32 to vector<4x1xf32>
    %53 = arith.divf %51, %52 : vector<4x1xf32>
    %54 = vector.broadcast %53 : vector<4x1xf32> to vector<4x1296xf32>
    %55 = arith.subf %26, %54 : vector<4x1296xf32>
    %56 = arith.mulf %55, %55 : vector<4x1296xf32>
    %57 = vector.broadcast %3 : vector<1x1296xf32> to vector<4x1296xf32>
    %58 = arith.mulf %57, %56 : vector<4x1296xf32>
    %cst_26 = arith.constant dense<0.000000e+00> : vector<4xf32>
    %59 = vector.multi_reduction <add>, %58, %cst_26 [1] : vector<4x1296xf32> to vector<4xf32>
    %60 = vector.shape_cast %59 : vector<4xf32> to vector<4x1xf32>
    %cst_27 = arith.constant 5.120000e+02 : f32
    %61 = vector.broadcast %cst_27 : f32 to vector<4x1xf32>
    %62 = arith.divf %60, %61 : vector<4x1xf32>
    %cst_28 = arith.constant 9.99999974E-6 : f32
    %63 = vector.broadcast %cst_28 : f32 to vector<4x1xf32>
    %64 = arith.addf %62, %63 : vector<4x1xf32>
    %65 = math.rsqrt %64 : vector<4x1xf32>
    %66 = arith.mulf %7, %65 : vector<4x1xf32>
    %67 = arith.mulf %53, %66 : vector<4x1xf32>
    %68 = arith.subf %8, %67 : vector<4x1xf32>
    %69 = vector.broadcast %45 : vector<4x1xf32> to vector<4x1296xf32>
    %70 = vector.broadcast %2 : vector<1x1296xf32> to vector<4x1296xf32>
    %71 = arith.mulf %69, %70 : vector<4x1296xf32>
    %72 = vector.broadcast %66 : vector<4x1xf32> to vector<4x1296xf32>
    %73 = vector.broadcast %3 : vector<1x1296xf32> to vector<4x1296xf32>
    %74 = arith.mulf %72, %73 : vector<4x1296xf32>
    %75 = arith.addf %71, %74 : vector<4x1296xf32>
    %76 = arith.mulf %26, %75 : vector<4x1296xf32>
    %77 = vector.broadcast %47 : vector<4x1xf32> to vector<4x1296xf32>
    %78 = vector.broadcast %2 : vector<1x1296xf32> to vector<4x1296xf32>
    %79 = arith.mulf %77, %78 : vector<4x1296xf32>
    %80 = vector.broadcast %68 : vector<4x1xf32> to vector<4x1296xf32>
    %81 = vector.broadcast %3 : vector<1x1296xf32> to vector<4x1296xf32>
    %82 = arith.mulf %80, %81 : vector<4x1296xf32>
    %83 = arith.addf %79, %82 : vector<4x1296xf32>
    %84 = arith.addf %76, %83 : vector<4x1296xf32>
    %cst_29 = arith.constant 0.000000e+00 : f32
    %85 = vector.broadcast %cst_29 : f32 to vector<4x36xf32>
    %86 = tpu.concatenate %85, %84, %85 in 1 : vector<4x36xf32>, vector<4x1296xf32>, vector<4x36xf32> -> vector<4x1368xf32>
    %c0_i32 = arith.constant 0 : i32
    %87 = vector.broadcast %c0_i32 : i32 to vector<1x1296xi32>
    %88 = arith.cmpi eq, %0, %87 : vector<1x1296xi32>
    %89 = vector.extract_strided_slice %86 {offsets = [0, 72], sizes = [4, 1296], strides = [1, 1]} : vector<4x1368xf32> to vector<4x1296xf32>
    %90 = vector.shape_cast %88 : vector<1x1296xi1> to vector<1x1296xi1>
    %91 = vector.broadcast %90 : vector<1x1296xi1> to vector<4x1296xi1>
    %92 = arith.select %91, %89, %84 : vector<4x1296xi1>, vector<4x1296xf32>
    %c17_i32 = arith.constant 17 : i32
    %93 = vector.broadcast %c17_i32 : i32 to vector<1x1296xi32>
    %94 = arith.cmpi eq, %0, %93 : vector<1x1296xi32>
    %95 = vector.extract_strided_slice %86 {offsets = [0, 0], sizes = [4, 1296], strides = [1, 1]} : vector<4x1368xf32> to vector<4x1296xf32>
    %96 = vector.shape_cast %94 : vector<1x1296xi1> to vector<1x1296xi1>
    %97 = vector.broadcast %96 : vector<1x1296xi1> to vector<4x1296xi1>
    %98 = arith.select %97, %95, %92 : vector<4x1296xi1>, vector<4x1296xf32>
    %cst_30 = arith.constant 0.000000e+00 : f32
    %99 = vector.broadcast %cst_30 : f32 to vector<4x36xf32>
    %100 = tpu.concatenate %99, %98, %99 in 1 : vector<4x36xf32>, vector<4x1296xf32>, vector<4x36xf32> -> vector<4x1368xf32>
    %c0_i32_31 = arith.constant 0 : i32
    %101 = vector.broadcast %c0_i32_31 : i32 to vector<1x1296xi32>
    %102 = arith.cmpi eq, %1, %101 : vector<1x1296xi32>
    %103 = vector.extract_strided_slice %100 {offsets = [0, 38], sizes = [4, 1296], strides = [1, 1]} : vector<4x1368xf32> to vector<4x1296xf32>
    %104 = vector.shape_cast %102 : vector<1x1296xi1> to vector<1x1296xi1>
    %105 = vector.broadcast %104 : vector<1x1296xi1> to vector<4x1296xi1>
    %106 = arith.select %105, %103, %98 : vector<4x1296xi1>, vector<4x1296xf32>
    %c17_i32_32 = arith.constant 17 : i32
    %107 = vector.broadcast %c17_i32_32 : i32 to vector<1x1296xi32>
    %108 = arith.cmpi eq, %1, %107 : vector<1x1296xi32>
    %109 = vector.extract_strided_slice %100 {offsets = [0, 34], sizes = [4, 1296], strides = [1, 1]} : vector<4x1368xf32> to vector<4x1296xf32>
    %110 = vector.shape_cast %108 : vector<1x1296xi1> to vector<1x1296xi1>
    %111 = vector.broadcast %110 : vector<1x1296xi1> to vector<4x1296xi1>
    %112 = arith.select %111, %109, %106 : vector<4x1296xi1>, vector<4x1296xf32>
    %c0_33 = arith.constant 0 : index
    %c0_34 = arith.constant 0 : index
    %113 = vector.load %arg9[%c0_33, %c0_34] : memref<8x36xbf16, #tpu.memory_space<vmem>>, vector<8x36xbf16>
    %c0_35 = arith.constant 0 : index
    %c0_36 = arith.constant 0 : index
    %114 = vector.load %arg10[%c0_35, %c0_36] : memref<8x1xf32, #tpu.memory_space<vmem>>, vector<8x1xf32>
    %c0_37 = arith.constant 0 : index
    %c0_38 = arith.constant 0 : index
    %115 = vector.load %arg11[%c0_37, %c0_38] : memref<8x1xf32, #tpu.memory_space<vmem>>, vector<8x1xf32>
    %c0_39 = arith.constant 0 : index
    %c0_40 = arith.constant 0 : index
    %116 = vector.load %arg12[%c0_39, %c0_40] : memref<8x1xf32, #tpu.memory_space<vmem>>, vector<8x1xf32>
    %cst_41 = arith.constant 0.000000e+00 : f32
    %117 = vector.broadcast %cst_41 : f32 to vector<4x36xf32>
    %118 = tpu.concatenate %117, %112, %117 in 1 : vector<4x36xf32>, vector<4x1296xf32>, vector<4x36xf32> -> vector<4x1368xf32>
    %119 = vector.extract_strided_slice %118 {offsets = [0, 17], sizes = [4, 1296], strides = [1, 1]} : vector<4x1368xf32> to vector<4x1296xf32>
    %120 = vector.extract_strided_slice %118 {offsets = [0, 18], sizes = [4, 1296], strides = [1, 1]} : vector<4x1368xf32> to vector<4x1296xf32>
    %121 = vector.extract_strided_slice %118 {offsets = [0, 19], sizes = [4, 1296], strides = [1, 1]} : vector<4x1368xf32> to vector<4x1296xf32>
    %122 = vector.extract_strided_slice %118 {offsets = [0, 35], sizes = [4, 1296], strides = [1, 1]} : vector<4x1368xf32> to vector<4x1296xf32>
    %123 = vector.extract_strided_slice %118 {offsets = [0, 36], sizes = [4, 1296], strides = [1, 1]} : vector<4x1368xf32> to vector<4x1296xf32>
    %124 = vector.extract_strided_slice %118 {offsets = [0, 37], sizes = [4, 1296], strides = [1, 1]} : vector<4x1368xf32> to vector<4x1296xf32>
    %125 = vector.extract_strided_slice %118 {offsets = [0, 53], sizes = [4, 1296], strides = [1, 1]} : vector<4x1368xf32> to vector<4x1296xf32>
    %126 = vector.extract_strided_slice %118 {offsets = [0, 54], sizes = [4, 1296], strides = [1, 1]} : vector<4x1368xf32> to vector<4x1296xf32>
    %127 = vector.extract_strided_slice %118 {offsets = [0, 55], sizes = [4, 1296], strides = [1, 1]} : vector<4x1368xf32> to vector<4x1296xf32>
    %128 = tpu.concatenate %119, %120, %121, %122, %123, %124, %125, %126, %127 in 0 : vector<4x1296xf32>, vector<4x1296xf32>, vector<4x1296xf32>, vector<4x1296xf32>, vector<4x1296xf32>, vector<4x1296xf32>, vector<4x1296xf32>, vector<4x1296xf32>, vector<4x1296xf32> -> vector<36x1296xf32>
    %129 = arith.truncf %128 : vector<36x1296xf32> to vector<36x1296xbf16>
    %cst_42 = arith.constant dense<0.000000e+00> : vector<8x1296xf32>
    %130 = tpu.matmul %113, %129, %cst_42 {dimension_numbers = #tpu.dot_dimension_numbers<[1], [0], [0], [1], [0, 0, 1, 1], [], []>} : vector<8x36xbf16>, vector<36x1296xbf16>, vector<8x1296xf32> -> vector<8x1296xf32>
    %131 = vector.broadcast %114 : vector<8x1xf32> to vector<8x1296xf32>
    %132 = arith.addf %130, %131 : vector<8x1296xf32>
    %cst_43 = arith.constant 0.000000e+00 : f32
    %133 = vector.broadcast %cst_43 : f32 to vector<8x1296xf32>
    %134 = arith.maximumf %132, %133 : vector<8x1296xf32>
    %135 = vector.broadcast %2 : vector<1x1296xf32> to vector<8x1296xf32>
    %136 = arith.mulf %134, %135 : vector<8x1296xf32>
    %cst_44 = arith.constant dense<0.000000e+00> : vector<8xf32>
    %137 = vector.multi_reduction <add>, %136, %cst_44 [1] : vector<8x1296xf32> to vector<8xf32>
    %138 = vector.shape_cast %137 : vector<8xf32> to vector<8x1xf32>
    %cst_45 = arith.constant 5.120000e+02 : f32
    %139 = vector.broadcast %cst_45 : f32 to vector<8x1xf32>
    %140 = arith.divf %138, %139 : vector<8x1xf32>
    %141 = vector.broadcast %140 : vector<8x1xf32> to vector<8x1296xf32>
    %142 = arith.subf %134, %141 : vector<8x1296xf32>
    %143 = arith.mulf %142, %142 : vector<8x1296xf32>
    %144 = vector.broadcast %2 : vector<1x1296xf32> to vector<8x1296xf32>
    %145 = arith.mulf %144, %143 : vector<8x1296xf32>
    %cst_46 = arith.constant dense<0.000000e+00> : vector<8xf32>
    %146 = vector.multi_reduction <add>, %145, %cst_46 [1] : vector<8x1296xf32> to vector<8xf32>
    %147 = vector.shape_cast %146 : vector<8xf32> to vector<8x1xf32>
    %cst_47 = arith.constant 5.120000e+02 : f32
    %148 = vector.broadcast %cst_47 : f32 to vector<8x1xf32>
    %149 = arith.divf %147, %148 : vector<8x1xf32>
    %cst_48 = arith.constant 9.99999974E-6 : f32
    %150 = vector.broadcast %cst_48 : f32 to vector<8x1xf32>
    %151 = arith.addf %149, %150 : vector<8x1xf32>
    %152 = math.rsqrt %151 : vector<8x1xf32>
    %153 = arith.mulf %115, %152 : vector<8x1xf32>
    %154 = arith.mulf %140, %153 : vector<8x1xf32>
    %155 = arith.subf %116, %154 : vector<8x1xf32>
    %156 = vector.broadcast %3 : vector<1x1296xf32> to vector<8x1296xf32>
    %157 = arith.mulf %134, %156 : vector<8x1296xf32>
    %cst_49 = arith.constant dense<0.000000e+00> : vector<8xf32>
    %158 = vector.multi_reduction <add>, %157, %cst_49 [1] : vector<8x1296xf32> to vector<8xf32>
    %159 = vector.shape_cast %158 : vector<8xf32> to vector<8x1xf32>
    %cst_50 = arith.constant 5.120000e+02 : f32
    %160 = vector.broadcast %cst_50 : f32 to vector<8x1xf32>
    %161 = arith.divf %159, %160 : vector<8x1xf32>
    %162 = vector.broadcast %161 : vector<8x1xf32> to vector<8x1296xf32>
    %163 = arith.subf %134, %162 : vector<8x1296xf32>
    %164 = arith.mulf %163, %163 : vector<8x1296xf32>
    %165 = vector.broadcast %3 : vector<1x1296xf32> to vector<8x1296xf32>
    %166 = arith.mulf %165, %164 : vector<8x1296xf32>
    %cst_51 = arith.constant dense<0.000000e+00> : vector<8xf32>
    %167 = vector.multi_reduction <add>, %166, %cst_51 [1] : vector<8x1296xf32> to vector<8xf32>
    %168 = vector.shape_cast %167 : vector<8xf32> to vector<8x1xf32>
    %cst_52 = arith.constant 5.120000e+02 : f32
    %169 = vector.broadcast %cst_52 : f32 to vector<8x1xf32>
    %170 = arith.divf %168, %169 : vector<8x1xf32>
    %cst_53 = arith.constant 9.99999974E-6 : f32
    %171 = vector.broadcast %cst_53 : f32 to vector<8x1xf32>
    %172 = arith.addf %170, %171 : vector<8x1xf32>
    %173 = math.rsqrt %172 : vector<8x1xf32>
    %174 = arith.mulf %115, %173 : vector<8x1xf32>
    %175 = arith.mulf %161, %174 : vector<8x1xf32>
    %176 = arith.subf %116, %175 : vector<8x1xf32>
    %177 = vector.broadcast %153 : vector<8x1xf32> to vector<8x1296xf32>
    %178 = vector.broadcast %2 : vector<1x1296xf32> to vector<8x1296xf32>
    %179 = arith.mulf %177, %178 : vector<8x1296xf32>
    %180 = vector.broadcast %174 : vector<8x1xf32> to vector<8x1296xf32>
    %181 = vector.broadcast %3 : vector<1x1296xf32> to vector<8x1296xf32>
    %182 = arith.mulf %180, %181 : vector<8x1296xf32>
    %183 = arith.addf %179, %182 : vector<8x1296xf32>
    %184 = arith.mulf %134, %183 : vector<8x1296xf32>
    %185 = vector.broadcast %155 : vector<8x1xf32> to vector<8x1296xf32>
    %186 = vector.broadcast %2 : vector<1x1296xf32> to vector<8x1296xf32>
    %187 = arith.mulf %185, %186 : vector<8x1296xf32>
    %188 = vector.broadcast %176 : vector<8x1xf32> to vector<8x1296xf32>
    %189 = vector.broadcast %3 : vector<1x1296xf32> to vector<8x1296xf32>
    %190 = arith.mulf %188, %189 : vector<8x1296xf32>
    %191 = arith.addf %187, %190 : vector<8x1296xf32>
    %192 = arith.addf %184, %191 : vector<8x1296xf32>
    %cst_54 = arith.constant 0.000000e+00 : f32
    %193 = vector.broadcast %cst_54 : f32 to vector<8x36xf32>
    %194 = tpu.concatenate %193, %192, %193 in 1 : vector<8x36xf32>, vector<8x1296xf32>, vector<8x36xf32> -> vector<8x1368xf32>
    %c0_i32_55 = arith.constant 0 : i32
    %195 = vector.broadcast %c0_i32_55 : i32 to vector<1x1296xi32>
    %196 = arith.cmpi eq, %0, %195 : vector<1x1296xi32>
    %197 = vector.extract_strided_slice %194 {offsets = [0, 72], sizes = [8, 1296], strides = [1, 1]} : vector<8x1368xf32> to vector<8x1296xf32>
    %198 = vector.shape_cast %196 : vector<1x1296xi1> to vector<1x1296xi1>
    %199 = vector.broadcast %198 : vector<1x1296xi1> to vector<8x1296xi1>
    %200 = arith.select %199, %197, %192 : vector<8x1296xi1>, vector<8x1296xf32>
    %c17_i32_56 = arith.constant 17 : i32
    %201 = vector.broadcast %c17_i32_56 : i32 to vector<1x1296xi32>
    %202 = arith.cmpi eq, %0, %201 : vector<1x1296xi32>
    %203 = vector.extract_strided_slice %194 {offsets = [0, 0], sizes = [8, 1296], strides = [1, 1]} : vector<8x1368xf32> to vector<8x1296xf32>
    %204 = vector.shape_cast %202 : vector<1x1296xi1> to vector<1x1296xi1>
    %205 = vector.broadcast %204 : vector<1x1296xi1> to vector<8x1296xi1>
    %206 = arith.select %205, %203, %200 : vector<8x1296xi1>, vector<8x1296xf32>
    %cst_57 = arith.constant 0.000000e+00 : f32
    %207 = vector.broadcast %cst_57 : f32 to vector<8x36xf32>
    %208 = tpu.concatenate %207, %206, %207 in 1 : vector<8x36xf32>, vector<8x1296xf32>, vector<8x36xf32> -> vector<8x1368xf32>
    %c0_i32_58 = arith.constant 0 : i32
    %209 = vector.broadcast %c0_i32_58 : i32 to vector<1x1296xi32>
    %210 = arith.cmpi eq, %1, %209 : vector<1x1296xi32>
    %211 = vector.extract_strided_slice %208 {offsets = [0, 38], sizes = [8, 1296], strides = [1, 1]} : vector<8x1368xf32> to vector<8x1296xf32>
    %212 = vector.shape_cast %210 : vector<1x1296xi1> to vector<1x1296xi1>
    %213 = vector.broadcast %212 : vector<1x1296xi1> to vector<8x1296xi1>
    %214 = arith.select %213, %211, %206 : vector<8x1296xi1>, vector<8x1296xf32>
    %c17_i32_59 = arith.constant 17 : i32
    %215 = vector.broadcast %c17_i32_59 : i32 to vector<1x1296xi32>
    %216 = arith.cmpi eq, %1, %215 : vector<1x1296xi32>
    %217 = vector.extract_strided_slice %208 {offsets = [0, 34], sizes = [8, 1296], strides = [1, 1]} : vector<8x1368xf32> to vector<8x1296xf32>
    %218 = vector.shape_cast %216 : vector<1x1296xi1> to vector<1x1296xi1>
    %219 = vector.broadcast %218 : vector<1x1296xi1> to vector<8x1296xi1>
    %220 = arith.select %219, %217, %214 : vector<8x1296xi1>, vector<8x1296xf32>
    %c0_60 = arith.constant 0 : index
    %c0_61 = arith.constant 0 : index
    %221 = vector.load %arg13[%c0_60, %c0_61] : memref<8x72xbf16, #tpu.memory_space<vmem>>, vector<8x72xbf16>
    %c0_62 = arith.constant 0 : index
    %c0_63 = arith.constant 0 : index
    %222 = vector.load %arg14[%c0_62, %c0_63] : memref<8x1xf32, #tpu.memory_space<vmem>>, vector<8x1xf32>
    %c0_64 = arith.constant 0 : index
    %c0_65 = arith.constant 0 : index
    %223 = vector.load %arg15[%c0_64, %c0_65] : memref<8x1xf32, #tpu.memory_space<vmem>>, vector<8x1xf32>
    %c0_66 = arith.constant 0 : index
    %c0_67 = arith.constant 0 : index
    %224 = vector.load %arg16[%c0_66, %c0_67] : memref<8x1xf32, #tpu.memory_space<vmem>>, vector<8x1xf32>
    %cst_68 = arith.constant 0.000000e+00 : f32
    %225 = vector.broadcast %cst_68 : f32 to vector<8x36xf32>
    %226 = tpu.concatenate %225, %220, %225 in 1 : vector<8x36xf32>, vector<8x1296xf32>, vector<8x36xf32> -> vector<8x1368xf32>
    %227 = vector.extract_strided_slice %226 {offsets = [0, 17], sizes = [8, 1296], strides = [1, 1]} : vector<8x1368xf32> to vector<8x1296xf32>
    %228 = vector.extract_strided_slice %226 {offsets = [0, 18], sizes = [8, 1296], strides = [1, 1]} : vector<8x1368xf32> to vector<8x1296xf32>
    %229 = vector.extract_strided_slice %226 {offsets = [0, 19], sizes = [8, 1296], strides = [1, 1]} : vector<8x1368xf32> to vector<8x1296xf32>
    %230 = vector.extract_strided_slice %226 {offsets = [0, 35], sizes = [8, 1296], strides = [1, 1]} : vector<8x1368xf32> to vector<8x1296xf32>
    %231 = vector.extract_strided_slice %226 {offsets = [0, 36], sizes = [8, 1296], strides = [1, 1]} : vector<8x1368xf32> to vector<8x1296xf32>
    %232 = vector.extract_strided_slice %226 {offsets = [0, 37], sizes = [8, 1296], strides = [1, 1]} : vector<8x1368xf32> to vector<8x1296xf32>
    %233 = vector.extract_strided_slice %226 {offsets = [0, 53], sizes = [8, 1296], strides = [1, 1]} : vector<8x1368xf32> to vector<8x1296xf32>
    %234 = vector.extract_strided_slice %226 {offsets = [0, 54], sizes = [8, 1296], strides = [1, 1]} : vector<8x1368xf32> to vector<8x1296xf32>
    %235 = vector.extract_strided_slice %226 {offsets = [0, 55], sizes = [8, 1296], strides = [1, 1]} : vector<8x1368xf32> to vector<8x1296xf32>
    %236 = tpu.concatenate %227, %228, %229, %230, %231, %232, %233, %234, %235 in 0 : vector<8x1296xf32>, vector<8x1296xf32>, vector<8x1296xf32>, vector<8x1296xf32>, vector<8x1296xf32>, vector<8x1296xf32>, vector<8x1296xf32>, vector<8x1296xf32>, vector<8x1296xf32> -> vector<72x1296xf32>
    %237 = arith.truncf %236 : vector<72x1296xf32> to vector<72x1296xbf16>
    %cst_69 = arith.constant dense<0.000000e+00> : vector<8x1296xf32>
    %238 = tpu.matmul %221, %237, %cst_69 {dimension_numbers = #tpu.dot_dimension_numbers<[1], [0], [0], [1], [0, 0, 1, 1], [], []>} : vector<8x72xbf16>, vector<72x1296xbf16>, vector<8x1296xf32> -> vector<8x1296xf32>
    %239 = vector.broadcast %222 : vector<8x1xf32> to vector<8x1296xf32>
    %240 = arith.addf %238, %239 : vector<8x1296xf32>
    %cst_70 = arith.constant 0.000000e+00 : f32
    %241 = vector.broadcast %cst_70 : f32 to vector<8x1296xf32>
    %242 = arith.maximumf %240, %241 : vector<8x1296xf32>
    %243 = vector.broadcast %2 : vector<1x1296xf32> to vector<8x1296xf32>
    %244 = arith.mulf %242, %243 : vector<8x1296xf32>
    %cst_71 = arith.constant dense<0.000000e+00> : vector<8xf32>
    %245 = vector.multi_reduction <add>, %244, %cst_71 [1] : vector<8x1296xf32> to vector<8xf32>
    %246 = vector.shape_cast %245 : vector<8xf32> to vector<8x1xf32>
    %cst_72 = arith.constant 5.120000e+02 : f32
    %247 = vector.broadcast %cst_72 : f32 to vector<8x1xf32>
    %248 = arith.divf %246, %247 : vector<8x1xf32>
    %249 = vector.broadcast %248 : vector<8x1xf32> to vector<8x1296xf32>
    %250 = arith.subf %242, %249 : vector<8x1296xf32>
    %251 = arith.mulf %250, %250 : vector<8x1296xf32>
    %252 = vector.broadcast %2 : vector<1x1296xf32> to vector<8x1296xf32>
    %253 = arith.mulf %252, %251 : vector<8x1296xf32>
    %cst_73 = arith.constant dense<0.000000e+00> : vector<8xf32>
    %254 = vector.multi_reduction <add>, %253, %cst_73 [1] : vector<8x1296xf32> to vector<8xf32>
    %255 = vector.shape_cast %254 : vector<8xf32> to vector<8x1xf32>
    %cst_74 = arith.constant 5.120000e+02 : f32
    %256 = vector.broadcast %cst_74 : f32 to vector<8x1xf32>
    %257 = arith.divf %255, %256 : vector<8x1xf32>
    %cst_75 = arith.constant 9.99999974E-6 : f32
    %258 = vector.broadcast %cst_75 : f32 to vector<8x1xf32>
    %259 = arith.addf %257, %258 : vector<8x1xf32>
    %260 = math.rsqrt %259 : vector<8x1xf32>
    %261 = arith.mulf %223, %260 : vector<8x1xf32>
    %262 = arith.mulf %248, %261 : vector<8x1xf32>
    %263 = arith.subf %224, %262 : vector<8x1xf32>
    %264 = vector.broadcast %3 : vector<1x1296xf32> to vector<8x1296xf32>
    %265 = arith.mulf %242, %264 : vector<8x1296xf32>
    %cst_76 = arith.constant dense<0.000000e+00> : vector<8xf32>
    %266 = vector.multi_reduction <add>, %265, %cst_76 [1] : vector<8x1296xf32> to vector<8xf32>
    %267 = vector.shape_cast %266 : vector<8xf32> to vector<8x1xf32>
    %cst_77 = arith.constant 5.120000e+02 : f32
    %268 = vector.broadcast %cst_77 : f32 to vector<8x1xf32>
    %269 = arith.divf %267, %268 : vector<8x1xf32>
    %270 = vector.broadcast %269 : vector<8x1xf32> to vector<8x1296xf32>
    %271 = arith.subf %242, %270 : vector<8x1296xf32>
    %272 = arith.mulf %271, %271 : vector<8x1296xf32>
    %273 = vector.broadcast %3 : vector<1x1296xf32> to vector<8x1296xf32>
    %274 = arith.mulf %273, %272 : vector<8x1296xf32>
    %cst_78 = arith.constant dense<0.000000e+00> : vector<8xf32>
    %275 = vector.multi_reduction <add>, %274, %cst_78 [1] : vector<8x1296xf32> to vector<8xf32>
    %276 = vector.shape_cast %275 : vector<8xf32> to vector<8x1xf32>
    %cst_79 = arith.constant 5.120000e+02 : f32
    %277 = vector.broadcast %cst_79 : f32 to vector<8x1xf32>
    %278 = arith.divf %276, %277 : vector<8x1xf32>
    %cst_80 = arith.constant 9.99999974E-6 : f32
    %279 = vector.broadcast %cst_80 : f32 to vector<8x1xf32>
    %280 = arith.addf %278, %279 : vector<8x1xf32>
    %281 = math.rsqrt %280 : vector<8x1xf32>
    %282 = arith.mulf %223, %281 : vector<8x1xf32>
    %283 = arith.mulf %269, %282 : vector<8x1xf32>
    %284 = arith.subf %224, %283 : vector<8x1xf32>
    %285 = vector.broadcast %261 : vector<8x1xf32> to vector<8x1296xf32>
    %286 = vector.broadcast %2 : vector<1x1296xf32> to vector<8x1296xf32>
    %287 = arith.mulf %285, %286 : vector<8x1296xf32>
    %288 = vector.broadcast %282 : vector<8x1xf32> to vector<8x1296xf32>
    %289 = vector.broadcast %3 : vector<1x1296xf32> to vector<8x1296xf32>
    %290 = arith.mulf %288, %289 : vector<8x1296xf32>
    %291 = arith.addf %287, %290 : vector<8x1296xf32>
    %292 = arith.mulf %242, %291 : vector<8x1296xf32>
    %293 = vector.broadcast %263 : vector<8x1xf32> to vector<8x1296xf32>
    %294 = vector.broadcast %2 : vector<1x1296xf32> to vector<8x1296xf32>
    %295 = arith.mulf %293, %294 : vector<8x1296xf32>
    %296 = vector.broadcast %284 : vector<8x1xf32> to vector<8x1296xf32>
    %297 = vector.broadcast %3 : vector<1x1296xf32> to vector<8x1296xf32>
    %298 = arith.mulf %296, %297 : vector<8x1296xf32>
    %299 = arith.addf %295, %298 : vector<8x1296xf32>
    %300 = arith.addf %292, %299 : vector<8x1296xf32>
    %301 = arith.truncf %300 : vector<8x1296xf32> to vector<8x1296xbf16>
    %c0_81 = arith.constant 0 : index
    %c0_82 = arith.constant 0 : index
    %302 = vector.load %arg17[%c0_81, %c0_82] : memref<8x1296xbf16, #tpu.memory_space<vmem>>, vector<8x1296xbf16>
    tpu.vector_store %arg17[%c0_81, %c0_82], %301 {strides = array<i32>} : memref<8x1296xbf16, #tpu.memory_space<vmem>>, vector<8x1296xbf16>,
    return
  }
}

</mosaic_0001>

<llo_original>
// kernel: siamese_forward.3
$region0: #{siamese_forward.3}
  #allocation0 [shape = 'u32[]', space=smem, size = 0x4, offset = 0x4, fixed_abs, tag = 'smem constant byte address 0x4 - core index']
  #allocation1 [shape = 'u32[72,128]{1,0:T(1,128)}', space=vmem, size = 0x9000, scoped, tag = 'internal scratch']
  #allocation2 [shape = 'f32[4,512]{1,0:T(4,128)}', space=vmem, size = 0x2000, scoped, tag = 'scratch operand']
  %s0 = inlined_call_operand.vmem [shape: bf16[8,4,324], index: 0, kind: input, shape index: {}]
  %s1 = inlined_call_operand.vmem [shape: bf16[8,324,512], index: 1, kind: input, shape index: {}]
  %s2 = inlined_call_operand.vmem [shape: f32[1,512], index: 2, kind: input, shape index: {}]
  %s3 = inlined_call_operand.vmem [shape: bf16[512,512], index: 3, kind: input, shape index: {}]
  %s4 = inlined_call_operand.vmem [shape: f32[1,512], index: 4, kind: input, shape index: {}]
  %s5 = inlined_call_operand.vmem [shape: bf16[512,128], index: 5, kind: input, shape index: {}]
  %s6 = inlined_call_operand.vmem [shape: f32[1,128], index: 6, kind: input, shape index: {}]
  %s7 = inlined_call_operand.vmem [shape: f32[4,128], index: 7, kind: output, shape index: {}]
  %s8 = sld [smem:[#allocation0]]
  $region69: #{siamese_forward.3} parent=0
    _
  %s10 = ssub.s32 1, %s8
  %s11 = scalar_select 0, %s10, %s8
  loop: start=0, step=1, limit=10
  $region2: #{siamese_forward.3} parent=0 // loop_pre_header
    _
  $region3: #{siamese_forward.3} parent=0 // loop_header
    %s13 = sphi 0, %s17
    %p14 = scmp.ge.s32.totalorder %s13, 10
    %s23 = sphi 0, %s25
    %s26 = sphi 0, %s23
    %s27 = sphi 0, %s26
    %s43 = sphi 0, %s27
    %s49 = sphi 0, %s51
    %s52 = sphi 0, %s49
    %s53 = sphi 0, %s52
    %s69 = sphi 0, %s53
    %s73 = sphi 0, %s73
    %s75 = sphi 0, %s73
    %s76 = sphi 0, %s75
    %s90 = sphi 0, %s76
    %s94 = sphi 0, %s94
    %s96 = sphi 0, %s94
    %s97 = sphi 0, %s96
    %s111 = sphi 0, %s97
    %s115 = sphi 0, %s115
    %s117 = sphi 0, %s115
    %s118 = sphi 0, %s117
    %s132 = sphi 0, %s118
    %s136 = sphi 0, %s136
    %s138 = sphi 0, %s136
    %s139 = sphi 0, %s138
    %s153 = sphi 0, %s139
    %s157 = sphi 0, %s157
    %s159 = sphi 0, %s157
    %s160 = sphi 0, %s159
    %s174 = sphi 0, %s160
    %s178 = sphi 0, %s178
    %s180 = sphi 0, %s178
    %s181 = sphi 0, %s180
    %s195 = sphi 0, %s181
  $region4: #{siamese_forward.3} parent=0 // loop_header_branch
    %16 = sbr.rel (%p14) target = $region8
  $region5: #{siamese_forward.3} parent=0 // loop_body
    %s18 = ssub.s32 %s13, 1
    %s19 = ssub.s32 %s13, 2
    %s20 = sadd.s32 %s13, 1
    %s21 = ssub.s32 %s13, %s20
    %p22 = scmp.eq.s32.totalorder %s21, 0
    %s24 = sadd.s32 %s23, 1
    %s25 = scalar_select %p22, %s23, %s24
    %p28 = pneg %p22
    %p29 = scmp.eq.s32.totalorder %s13, 7
    %p30 = por %p28, %p29
    %p31 = scmp.ne.s32.totalorder %s23, %s26
    %p32 = scmp.eq.s32.totalorder %s13, 0
    %p33 = por %p31, %p32
    %p34 = scmp.ne.s32.totalorder %s23, %s26
    %p35 = scmp.eq.s32.totalorder %s18, 7
    %p36 = por %p34, %p35
    %p37 = scmp.ne.s32.totalorder %s26, %s27
    %p38 = scmp.eq.s32.totalorder %s18, 0
    %p39 = por %p37, %p38
    %p40 = scmp.ne.s32.totalorder %s26, %s27
    %p41 = scmp.eq.s32.totalorder %s19, 7
    %p42 = por %p40, %p41
    %p44 = scmp.ne.s32.totalorder %s27, %s43
    %p45 = scmp.eq.s32.totalorder %s19, 0
    %p46 = por %p44, %p45
    %s47 = ssub.s32 %s13, %s20
    %p48 = scmp.eq.s32.totalorder %s47, 0
    %s50 = sadd.s32 %s49, 1
    %s51 = scalar_select %p48, %s49, %s50
    %p54 = pneg %p48
    %p55 = scmp.eq.s32.totalorder %s13, 7
    %p56 = por %p54, %p55
    %p57 = scmp.ne.s32.totalorder %s49, %s52
    %p58 = scmp.eq.s32.totalorder %s13, 0
    %p59 = por %p57, %p58
    %p60 = scmp.ne.s32.totalorder %s49, %s52
    %p61 = scmp.eq.s32.totalorder %s18, 7
    %p62 = por %p60, %p61
    %p63 = scmp.ne.s32.totalorder %s52, %s53
    %p64 = scmp.eq.s32.totalorder %s18, 0
    %p65 = por %p63, %p64
    %p66 = scmp.ne.s32.totalorder %s52, %s53
    %p67 = scmp.eq.s32.totalorder %s19, 7
    %p68 = por %p66, %p67
    %p70 = scmp.ne.s32.totalorder %s53, %s69
    %p71 = scmp.eq.s32.totalorder %s19, 0
    %p72 = por %p70, %p71
    %s74 = sadd.s32 %s73, 1
    %p77 = scmp.eq.s32.totalorder %s13, 7
    %p78 = scmp.ne.s32.totalorder %s73, %s75
    %p79 = scmp.eq.s32.totalorder %s13, 0
    %p80 = por %p78, %p79
    %p81 = scmp.ne.s32.totalorder %s73, %s75
    %p82 = scmp.eq.s32.totalorder %s18, 7
    %p83 = por %p81, %p82
    %p84 = scmp.ne.s32.totalorder %s75, %s76
    %p85 = scmp.eq.s32.totalorder %s18, 0
    %p86 = por %p84, %p85
    %p87 = scmp.ne.s32.totalorder %s75, %s76
    %p88 = scmp.eq.s32.totalorder %s19, 7
    %p89 = por %p87, %p88
    %p91 = scmp.ne.s32.totalorder %s76, %s90
    %p92 = scmp.eq.s32.totalorder %s19, 0
    %p93 = por %p91, %p92
    %s95 = sadd.s32 %s94, 1
    %p98 = scmp.eq.s32.totalorder %s13, 7
    %p99 = scmp.ne.s32.totalorder %s94, %s96
    %p100 = scmp.eq.s32.totalorder %s13, 0
    %p101 = por %p99, %p100
    %p102 = scmp.ne.s32.totalorder %s94, %s96
    %p103 = scmp.eq.s32.totalorder %s18, 7
    %p104 = por %p102, %p103
    %p105 = scmp.ne.s32.totalorder %s96, %s97
    %p106 = scmp.eq.s32.totalorder %s18, 0
    %p107 = por %p105, %p106
    %p108 = scmp.ne.s32.totalorder %s96, %s97
    %p109 = scmp.eq.s32.totalorder %s19, 7
    %p110 = por %p108, %p109
    %p112 = scmp.ne.s32.totalorder %s97, %s111
    %p113 = scmp.eq.s32.totalorder %s19, 0
    %p114 = por %p112, %p113
    %s116 = sadd.s32 %s115, 1
    %p119 = scmp.eq.s32.totalorder %s13, 7
    %p120 = scmp.ne.s32.totalorder %s115, %s117
    %p121 = scmp.eq.s32.totalorder %s13, 0
    %p122 = por %p120, %p121
    %p123 = scmp.ne.s32.totalorder %s115, %s117
    %p124 = scmp.eq.s32.totalorder %s18, 7
    %p125 = por %p123, %p124
    %p126 = scmp.ne.s32.totalorder %s117, %s118
    %p127 = scmp.eq.s32.totalorder %s18, 0
    %p128 = por %p126, %p127
    %p129 = scmp.ne.s32.totalorder %s117, %s118
    %p130 = scmp.eq.s32.totalorder %s19, 7
    %p131 = por %p129, %p130
    %p133 = scmp.ne.s32.totalorder %s118, %s132
    %p134 = scmp.eq.s32.totalorder %s19, 0
    %p135 = por %p133, %p134
    %s137 = sadd.s32 %s136, 1
    %p140 = scmp.eq.s32.totalorder %s13, 7
    %p141 = scmp.ne.s32.totalorder %s136, %s138
    %p142 = scmp.eq.s32.totalorder %s13, 0
    %p143 = por %p141, %p142
    %p144 = scmp.ne.s32.totalorder %s136, %s138
    %p145 = scmp.eq.s32.totalorder %s18, 7
    %p146 = por %p144, %p145
    %p147 = scmp.ne.s32.totalorder %s138, %s139
    %p148 = scmp.eq.s32.totalorder %s18, 0
    %p149 = por %p147, %p148
    %p150 = scmp.ne.s32.totalorder %s138, %s139
    %p151 = scmp.eq.s32.totalorder %s19, 7
    %p152 = por %p150, %p151
    %p154 = scmp.ne.s32.totalorder %s139, %s153
    %p155 = scmp.eq.s32.totalorder %s19, 0
    %p156 = por %p154, %p155
    %s158 = sadd.s32 %s157, 1
    %p161 = scmp.eq.s32.totalorder %s13, 7
    %p162 = scmp.ne.s32.totalorder %s157, %s159
    %p163 = scmp.eq.s32.totalorder %s13, 0
    %p164 = por %p162, %p163
    %p165 = scmp.ne.s32.totalorder %s157, %s159
    %p166 = scmp.eq.s32.totalorder %s18, 7
    %p167 = por %p165, %p166
    %p168 = scmp.ne.s32.totalorder %s159, %s160
    %p169 = scmp.eq.s32.totalorder %s18, 0
    %p170 = por %p168, %p169
    %p171 = scmp.ne.s32.totalorder %s159, %s160
    %p172 = scmp.eq.s32.totalorder %s19, 7
    %p173 = por %p171, %p172
    %p175 = scmp.ne.s32.totalorder %s160, %s174
    %p176 = scmp.eq.s32.totalorder %s19, 0
    %p177 = por %p175, %p176
    %s179 = sadd.s32 %s178, 1
    %p182 = scmp.eq.s32.totalorder %s13, 7
    %p183 = scmp.ne.s32.totalorder %s178, %s180
    %p184 = scmp.eq.s32.totalorder %s13, 0
    %p185 = por %p183, %p184
    %p186 = scmp.ne.s32.totalorder %s178, %s180
    %p187 = scmp.eq.s32.totalorder %s18, 7
    %p188 = por %p186, %p187
    %p189 = scmp.ne.s32.totalorder %s180, %s181
    %p190 = scmp.eq.s32.totalorder %s18, 0
    %p191 = por %p189, %p190
    %p192 = scmp.ne.s32.totalorder %s180, %s181
    %p193 = scmp.eq.s32.totalorder %s19, 7
    %p194 = por %p192, %p193
    %p196 = scmp.ne.s32.totalorder %s181, %s195
    %p197 = scmp.eq.s32.totalorder %s19, 0
    %p198 = por %p196, %p197
    %p199 = scmp.le.s32.totalorder 1, %s13
    %p200 = scmp.lt.s32.totalorder %s13, 9
    %p201 = pnand %p199, %p200
    %p202 = pneg %p201
    // Predicated region
    $region9: #{siamese_forward.3} parent=5 // pred_check
      _
    $region10: #{siamese_forward.3} parent=5 // pred_check_branch
      %204 = sbr.rel (%p201) target = $region12
    $region11: #{siamese_forward.3} parent=5 // pred_region
      %s205 = ssub.s32 %s13, 1
      // Predicated region
      $region13: #{siamese_forward.3} parent=11 // pred_check
        %p206 = pneg %p86
      $region14: #{siamese_forward.3} parent=11 // pred_check_branch
        %208 = sbr.rel (%p206) target = $region16
      $region15: #{siamese_forward.3} parent=11 // pred_region
        _
      $region16: #{siamese_forward.3} parent=11 // pred_fallthru
        _
      // Predicated region
      $region17: #{siamese_forward.3} parent=11 // pred_check
        %p209 = pneg %p107
      $region18: #{siamese_forward.3} parent=11 // pred_check_branch
        %211 = sbr.rel (%p209) target = $region20
      $region19: #{siamese_forward.3} parent=11 // pred_region
        _
      $region20: #{siamese_forward.3} parent=11 // pred_fallthru
        _
      // Predicated region
      $region21: #{siamese_forward.3} parent=11 // pred_check
        %p212 = pneg %p128
      $region22: #{siamese_forward.3} parent=11 // pred_check_branch
        %214 = sbr.rel (%p212) target = $region24
      $region23: #{siamese_forward.3} parent=11 // pred_region
        _
      $region24: #{siamese_forward.3} parent=11 // pred_fallthru
        _
      // Predicated region
      $region25: #{siamese_forward.3} parent=11 // pred_check
        %p215 = pneg %p149
      $region26: #{siamese_forward.3} parent=11 // pred_check_branch
        %217 = sbr.rel (%p215) target = $region28
      $region27: #{siamese_forward.3} parent=11 // pred_region
        _
      $region28: #{siamese_forward.3} parent=11 // pred_fallthru
        _
      // Predicated region
      $region29: #{siamese_forward.3} parent=11 // pred_check
        %p218 = pneg %p170
      $region30: #{siamese_forward.3} parent=11 // pred_check_branch
        %220 = sbr.rel (%p218) target = $region32
      $region31: #{siamese_forward.3} parent=11 // pred_region
        _
      $region32: #{siamese_forward.3} parent=11 // pred_fallthru
        _
    $region12: #{siamese_forward.3} parent=5 // pred_fallthru
      _
    %p221 = scmp.lt.s32.totalorder %s13, 8
    // Predicated region
    $region33: #{siamese_forward.3} parent=5 // pred_check
      %p222 = pneg %p221
    $region34: #{siamese_forward.3} parent=5 // pred_check_branch
      %224 = sbr.rel (%p222) target = $region36
    $region35: #{siamese_forward.3} parent=5 // pred_region
      // Predicated region
      $region37: #{siamese_forward.3} parent=35 // pred_check
        %p225 = pneg %p33
      $region38: #{siamese_forward.3} parent=35 // pred_check_branch
        %227 = sbr.rel (%p225) target = $region40
      $region39: #{siamese_forward.3} parent=35 // pred_region
        %p228 = scmp.lt.s32.totalorder %s13, 7
        %s229 = scalar_select %p228, %s13, 7
        %s230 = smul.addr %s229, 3
        %s231 = smul.addr %s230, 2
        %s232 = scalar_lea.vmem %s0, %s231
      $region40: #{siamese_forward.3} parent=35 // pred_fallthru
        _
      // Predicated region
      $region41: #{siamese_forward.3} parent=35 // pred_check
        %p233 = pneg %p59
      $region42: #{siamese_forward.3} parent=35 // pred_check_branch
        %235 = sbr.rel (%p233) target = $region44
      $region43: #{siamese_forward.3} parent=35 // pred_region
        %p236 = scmp.lt.s32.totalorder %s13, 7
        %s237 = scalar_select %p236, %s13, 7
        %s238 = smul.addr %s237, 164
        %s239 = smul.addr %s238, 4
        %s240 = scalar_lea.vmem %s1, %s239
      $region44: #{siamese_forward.3} parent=35 // pred_fallthru
        _
    $region36: #{siamese_forward.3} parent=5 // pred_fallthru
      _
    %p241 = scmp.le.s32.totalorder 1, %s13
    %p242 = scmp.lt.s32.totalorder %s13, 9
    %p243 = pnand %p241, %p242
    %p244 = pneg %p243
    // Predicated region
    $region45: #{siamese_forward.3} parent=5 // pred_check
      _
    $region46: #{siamese_forward.3} parent=5 // pred_check_branch
      %246 = sbr.rel (%p243) target = $region48
    $region47: #{siamese_forward.3} parent=5 // pred_region
      %s247 = ssub.s32 %s13, 1
      %p248 = scmp.lt.s32.totalorder %s18, 7
      %s249 = scalar_select %p248, %s18, 7
      %s250 = smul.addr %s249, 3
      %s251 = smul.addr %s250, 2
      %s252 = scalar_lea.vmem %s0, %s251
      %p253 = pneg %p39
      %p254 = pneg %p36
      %p255 = scmp.lt.s32.totalorder %s18, 7
      %s256 = scalar_select %p255, %s18, 7
      %s257 = smul.addr %s256, 164
      %s258 = smul.addr %s257, 4
      %s259 = scalar_lea.vmem %s1, %s258
      %p260 = pneg %p65
      %p261 = pneg %p62
      %p262 = pneg %p86
      %p263 = pneg %p83
      %p264 = pneg %p107
      %p265 = pneg %p104
      %p266 = pneg %p128
      %p267 = pneg %p125
      %p268 = pneg %p149
      %p269 = pneg %p146
      %p270 = pneg %p170
      %p271 = pneg %p167
      %p272 = pneg %p191
      %p273 = pneg %p188
      %p274 = scmp.lt.s32.totalorder %s18, 7
      %s275 = scalar_select %p274, %s18, 7
      %s276 = smul.addr %s275, 3
      %s277 = smul.addr %s276, 2
      %s278 = scalar_lea.vmem %s0, %s277
      %p279 = scmp.lt.s32.totalorder %s18, 7
      %s280 = scalar_select %p279, %s18, 7
      %s281 = smul.addr %s280, 164
      %s282 = smul.addr %s281, 4
      %s283 = scalar_lea.vmem %s1, %s282
      %p285 = scmp.eq.s32.totalorder %s18, 0
      // Predicated region
      $region49: #{siamese_forward.3} parent=47 // pred_check
        %p286 = pneg %p285
      $region50: #{siamese_forward.3} parent=47 // pred_check_branch
        %288 = sbr.rel (%p286) target = $region52
      $region51: #{siamese_forward.3} parent=47 // pred_region
        %289 = vst [vmem:[#allocation2] sm:$0xff] 0.0
        %290 = vst [vmem:[#allocation2 + $0x8] sm:$0xff] 0.0
      $region52: #{siamese_forward.3} parent=47 // pred_fallthru
        _
      %v291 = vld [vmem:[#allocation2] sm:$0xff]
      %v292 = vld [vmem:[#allocation2 + $0x8] sm:$0xff]
      %v293 = vld [vmem:[%s278] sm:$0x3f]
      %v294 = vld [vmem:[%s283] sm:$0xff]
      %v295 = vld [vmem:[%s283 + $0x8] sm:$0xff]
      %v296 = vld [vmem:[%s283 + $0x10] sm:$0xff]
      %v297 = vld [vmem:[%s283 + $0x18] sm:$0xff]
      %v298 = vld [vmem:[%s283 + $0x20] sm:$0xff]
      %v299 = vld [vmem:[%s283 + $0x28] sm:$0xff]
      %v300 = vld [vmem:[%s283 + $0x30] sm:$0xff]
      %v301 = vld [vmem:[%s283 + $0x38] sm:$0xff]
      %v302 = vld [vmem:[%s283 + $0x40] sm:$0xff]
      %v303 = vld [vmem:[%s283 + $0x48] sm:$0xff]
      %v304 = vld [vmem:[%s283 + $0x50] sm:$0xff]
      %v305 = vld [vmem:[%s283 + $0x58] sm:$0xff]
      %v306 = vld [vmem:[%s283 + $0x60] sm:$0xff]
      %v307 = vld [vmem:[%s283 + $0x68] sm:$0xff]
      %v308 = vld [vmem:[%s283 + $0x70] sm:$0xff]
      %v309 = vld [vmem:[%s283 + $0x78] sm:$0xff]
      %v310 = vld [vmem:[%s283 + $0x80] sm:$0xff]
      %v311 = vld [vmem:[%s283 + $0x88] sm:$0xff]
      %v312 = vld [vmem:[%s283 + $0x90] sm:$0xff]
      %v313 = vld [vmem:[%s283 + $0x98] sm:$0xff]
      %v314 = vld [vmem:[%s283 + $0xa0] sm:$0xff]
      %v315 = vld [vmem:[%s283 + $0xa8] sm:$0xff]
      %v316 = vld [vmem:[%s283 + $0xb0] sm:$0xff]
      %v317 = vld [vmem:[%s283 + $0xb8] sm:$0xff]
      %v318 = vld [vmem:[%s283 + $0xc0] sm:$0xff]
      %v319 = vld [vmem:[%s283 + $0xc8] sm:$0xff]
      %v320 = vld [vmem:[%s283 + $0xd0] sm:$0xff]
      %v321 = vld [vmem:[%s283 + $0xd8] sm:$0xff]
      %v322 = vld [vmem:[%s283 + $0xe0] sm:$0xff]
      %v323 = vld [vmem:[%s283 + $0xe8] sm:$0xff]
      %v324 = vld [vmem:[%s283 + $0xf0] sm:$0xff]
      %v325 = vld [vmem:[%s283 + $0xf8] sm:$0xff]
      %v326 = vld [vmem:[%s283 + $0x100] sm:$0xff]
      %v327 = vld [vmem:[%s283 + $0x108] sm:$0xff]
      %v328 = vld [vmem:[%s283 + $0x110] sm:$0xff]
      %v329 = vld [vmem:[%s283 + $0x118] sm:$0xff]
      %v330 = vld [vmem:[%s283 + $0x120] sm:$0xff]
      %v331 = vld [vmem:[%s283 + $0x128] sm:$0xff]
      %v332 = vld [vmem:[%s283 + $0x130] sm:$0xff]
      %v333 = vld [vmem:[%s283 + $0x138] sm:$0xff]
      %v334 = vld [vmem:[%s283 + $0x140] sm:$0xff]
      %v335 = vld [vmem:[%s283 + $0x148] sm:$0xff]
      %v336 = vld [vmem:[%s283 + $0x150] sm:$0xff]
      %v337 = vld [vmem:[%s283 + $0x158] sm:$0xff]
      %v338 = vld [vmem:[%s283 + $0x160] sm:$0xff]
      %v339 = vld [vmem:[%s283 + $0x168] sm:$0xff]
      %v340 = vld [vmem:[%s283 + $0x170] sm:$0xff]
      %v341 = vld [vmem:[%s283 + $0x178] sm:$0xff]
      %v342 = vld [vmem:[%s283 + $0x180] sm:$0xff]
      %v343 = vld [vmem:[%s283 + $0x188] sm:$0xff]
      %v344 = vld [vmem:[%s283 + $0x190] sm:$0xff]
      %v345 = vld [vmem:[%s283 + $0x198] sm:$0xff]
      %v346 = vld [vmem:[%s283 + $0x1a0] sm:$0xff]
      %v347 = vld [vmem:[%s283 + $0x1a8] sm:$0xff]
      %v348 = vld [vmem:[%s283 + $0x1b0] sm:$0xff]
      %v349 = vld [vmem:[%s283 + $0x1b8] sm:$0xff]
      %v350 = vld [vmem:[%s283 + $0x1c0] sm:$0xff]
      %v351 = vld [vmem:[%s283 + $0x1c8] sm:$0xff]
      %v352 = vld [vmem:[%s283 + $0x1d0] sm:$0xff]
      %v353 = vld [vmem:[%s283 + $0x1d8] sm:$0xff]
      %v354 = vld [vmem:[%s283 + $0x1e0] sm:$0xff]
      %v355 = vld [vmem:[%s283 + $0x1e8] sm:$0xff]
      %v356 = vld [vmem:[%s283 + $0x1f0] sm:$0xff]
      %v357 = vld [vmem:[%s283 + $0x1f8] sm:$0xff]
      %v358 = vld [vmem:[%s283 + $0x200] sm:$0xff]
      %v359 = vld [vmem:[%s283 + $0x208] sm:$0xff]
      %v360 = vld [vmem:[%s283 + $0x210] sm:$0xff]
      %v361 = vld [vmem:[%s283 + $0x218] sm:$0xff]
      %v362 = vld [vmem:[%s283 + $0x220] sm:$0xff]
      %v363 = vld [vmem:[%s283 + $0x228] sm:$0xff]
      %v364 = vld [vmem:[%s283 + $0x230] sm:$0xff]
      %v365 = vld [vmem:[%s283 + $0x238] sm:$0xff]
      %v366 = vld [vmem:[%s283 + $0x240] sm:$0xff]
      %v367 = vld [vmem:[%s283 + $0x248] sm:$0xff]
      %v368 = vld [vmem:[%s283 + $0x250] sm:$0xff]
      %v369 = vld [vmem:[%s283 + $0x258] sm:$0xff]
      %v370 = vld [vmem:[%s283 + $0x260] sm:$0xff]
      %v371 = vld [vmem:[%s283 + $0x268] sm:$0xff]
      %v372 = vld [vmem:[%s283 + $0x270] sm:$0xff]
      %v373 = vld [vmem:[%s283 + $0x278] sm:$0xff]
      %v374 = vld [vmem:[%s283 + $0x280] sm:$0x33]
      %v375 = vld [vmem:[%s283 + $0x288] sm:$0x33]
      %377 = vst [vmem:[#allocation1] ss:$4 sm:$0xff] %v293
      %v378 = vld.sshfl [vmem:[#allocation1] sm:$0xff pattern:$0x73625140]
      %v379 = vld.sshfl [vmem:[#allocation1 + $0x8] sm:$0xff pattern:$0x73625140]
      %v380 = vld.sshfl [vmem:[#allocation1 + $0x10] sm:$0xff pattern:$0x73625140]
      %v465 = vunpack.c.l.b16 %v294
      %v466 = vunpack.c.h.b16 %v294
      %v467 = vunpack.c.l.b16 %v295
      %v468 = vunpack.c.h.b16 %v295
      %v469 = vunpack.c.l.b16 %v296
      %v470 = vunpack.c.h.b16 %v296
      %v471 = vunpack.c.l.b16 %v297
      %v472 = vunpack.c.h.b16 %v297
      %v473 = vunpack.c.l.b16 %v298
      %v474 = vunpack.c.h.b16 %v298
      %v475 = vunpack.c.l.b16 %v299
      %v476 = vunpack.c.h.b16 %v299
      %v477 = vunpack.c.l.b16 %v300
      %v478 = vunpack.c.h.b16 %v300
      %v479 = vunpack.c.l.b16 %v301
      %v480 = vunpack.c.h.b16 %v301
      %v481 = vunpack.c.l.b16 %v302
      %v482 = vunpack.c.h.b16 %v302
      %v483 = vunpack.c.l.b16 %v303
      %v484 = vunpack.c.h.b16 %v303
      %v485 = vunpack.c.l.b16 %v304
      %v486 = vunpack.c.h.b16 %v304
      %v487 = vunpack.c.l.b16 %v305
      %v488 = vunpack.c.h.b16 %v305
      %v489 = vunpack.c.l.b16 %v306
      %v490 = vunpack.c.h.b16 %v306
      %v491 = vunpack.c.l.b16 %v307
      %v492 = vunpack.c.h.b16 %v307
      %v493 = vunpack.c.l.b16 %v308
      %v494 = vunpack.c.h.b16 %v308
      %v495 = vunpack.c.l.b16 %v309
      %v496 = vunpack.c.h.b16 %v309
      %v497 = vunpack.c.l.b16 %v310
      %v498 = vunpack.c.h.b16 %v310
      %v499 = vunpack.c.l.b16 %v311
      %v500 = vunpack.c.h.b16 %v311
      %v501 = vunpack.c.l.b16 %v312
      %v502 = vunpack.c.h.b16 %v312
      %v503 = vunpack.c.l.b16 %v313
      %v504 = vunpack.c.h.b16 %v313
      %v505 = vunpack.c.l.b16 %v314
      %v506 = vunpack.c.h.b16 %v314
      %v507 = vunpack.c.l.b16 %v315
      %v508 = vunpack.c.h.b16 %v315
      %v509 = vunpack.c.l.b16 %v316
      %v510 = vunpack.c.h.b16 %v316
      %v511 = vunpack.c.l.b16 %v317
      %v512 = vunpack.c.h.b16 %v317
      %v513 = vunpack.c.l.b16 %v318
      %v514 = vunpack.c.h.b16 %v318
      %v515 = vunpack.c.l.b16 %v319
      %v516 = vunpack.c.h.b16 %v319
      %v517 = vunpack.c.l.b16 %v320
      %v518 = vunpack.c.h.b16 %v320
      %v519 = vunpack.c.l.b16 %v321
      %v520 = vunpack.c.h.b16 %v321
      %v521 = vunpack.c.l.b16 %v322
      %v522 = vunpack.c.h.b16 %v322
      %v523 = vunpack.c.l.b16 %v323
      %v524 = vunpack.c.h.b16 %v323
      %v525 = vunpack.c.l.b16 %v324
      %v526 = vunpack.c.h.b16 %v324
      %v527 = vunpack.c.l.b16 %v325
      %v528 = vunpack.c.h.b16 %v325
      %v529 = vunpack.c.l.b16 %v326
      %v530 = vunpack.c.h.b16 %v326
      %v531 = vunpack.c.l.b16 %v327
      %v532 = vunpack.c.h.b16 %v327
      %v533 = vunpack.c.l.b16 %v328
      %v534 = vunpack.c.h.b16 %v328
      %v535 = vunpack.c.l.b16 %v329
      %v536 = vunpack.c.h.b16 %v329
      %v537 = vunpack.c.l.b16 %v330
      %v538 = vunpack.c.h.b16 %v330
      %v539 = vunpack.c.l.b16 %v331
      %v540 = vunpack.c.h.b16 %v331
      %v541 = vunpack.c.l.b16 %v332
      %v542 = vunpack.c.h.b16 %v332
      %v543 = vunpack.c.l.b16 %v333
      %v544 = vunpack.c.h.b16 %v333
      %v545 = vunpack.c.l.b16 %v334
      %v546 = vunpack.c.h.b16 %v334
      %v547 = vunpack.c.l.b16 %v335
      %v548 = vunpack.c.h.b16 %v335
      %v549 = vunpack.c.l.b16 %v336
      %v550 = vunpack.c.h.b16 %v336
      %v551 = vunpack.c.l.b16 %v337
      %v552 = vunpack.c.h.b16 %v337
      %v553 = vunpack.c.l.b16 %v338
      %v554 = vunpack.c.h.b16 %v338
      %v555 = vunpack.c.l.b16 %v339
      %v556 = vunpack.c.h.b16 %v339
      %v557 = vunpack.c.l.b16 %v340
      %v558 = vunpack.c.h.b16 %v340
      %v559 = vunpack.c.l.b16 %v341
      %v560 = vunpack.c.h.b16 %v341
      %v561 = vunpack.c.l.b16 %v342
      %v562 = vunpack.c.h.b16 %v342
      %v563 = vunpack.c.l.b16 %v343
      %v564 = vunpack.c.h.b16 %v343
      %v565 = vunpack.c.l.b16 %v344
      %v566 = vunpack.c.h.b16 %v344
      %v567 = vunpack.c.l.b16 %v345
      %v568 = vunpack.c.h.b16 %v345
      %v569 = vunpack.c.l.b16 %v346
      %v570 = vunpack.c.h.b16 %v346
      %v571 = vunpack.c.l.b16 %v347
      %v572 = vunpack.c.h.b16 %v347
      %v573 = vunpack.c.l.b16 %v348
      %v574 = vunpack.c.h.b16 %v348
      %v575 = vunpack.c.l.b16 %v349
      %v576 = vunpack.c.h.b16 %v349
      %v577 = vunpack.c.l.b16 %v350
      %v578 = vunpack.c.h.b16 %v350
      %v579 = vunpack.c.l.b16 %v351
      %v580 = vunpack.c.h.b16 %v351
      %v581 = vunpack.c.l.b16 %v352
      %v582 = vunpack.c.h.b16 %v352
      %v583 = vunpack.c.l.b16 %v353
      %v584 = vunpack.c.h.b16 %v353
      %v585 = vunpack.c.l.b16 %v354
      %v586 = vunpack.c.h.b16 %v354
      %v587 = vunpack.c.l.b16 %v355
      %v588 = vunpack.c.h.b16 %v355
      %v589 = vunpack.c.l.b16 %v356
      %v590 = vunpack.c.h.b16 %v356
      %v591 = vunpack.c.l.b16 %v357
      %v592 = vunpack.c.h.b16 %v357
      %v593 = vunpack.c.l.b16 %v358
      %v594 = vunpack.c.h.b16 %v358
      %v595 = vunpack.c.l.b16 %v359
      %v596 = vunpack.c.h.b16 %v359
      %v597 = vunpack.c.l.b16 %v360
      %v598 = vunpack.c.h.b16 %v360
      %v599 = vunpack.c.l.b16 %v361
      %v600 = vunpack.c.h.b16 %v361
      %v601 = vunpack.c.l.b16 %v362
      %v602 = vunpack.c.h.b16 %v362
      %v603 = vunpack.c.l.b16 %v363
      %v604 = vunpack.c.h.b16 %v363
      %v605 = vunpack.c.l.b16 %v364
      %v606 = vunpack.c.h.b16 %v364
      %v607 = vunpack.c.l.b16 %v365
      %v608 = vunpack.c.h.b16 %v365
      %v609 = vunpack.c.l.b16 %v366
      %v610 = vunpack.c.h.b16 %v366
      %v611 = vunpack.c.l.b16 %v367
      %v612 = vunpack.c.h.b16 %v367
      %v613 = vunpack.c.l.b16 %v368
      %v614 = vunpack.c.h.b16 %v368
      %v615 = vunpack.c.l.b16 %v369
      %v616 = vunpack.c.h.b16 %v369
      %v617 = vunpack.c.l.b16 %v370
      %v618 = vunpack.c.h.b16 %v370
      %v619 = vunpack.c.l.b16 %v371
      %v620 = vunpack.c.h.b16 %v371
      %v621 = vunpack.c.l.b16 %v372
      %v622 = vunpack.c.h.b16 %v372
      %v623 = vunpack.c.l.b16 %v373
      %v624 = vunpack.c.h.b16 %v373
      %v625 = vunpack.c.l.b16 %v374
      %v626 = vunpack.c.h.b16 %v374
      %v627 = vunpack.c.l.b16 %v375
      %v628 = vunpack.c.h.b16 %v375
      %v629 = vpack.c.b16 %v469, %v465
      %v630 = vpack.c.b16 %v470, %v466
      %v631 = vpack.c.b16 %v471, %v467
      %v632 = vpack.c.b16 %v472, %v468
      %v633 = vpack.c.b16 %v477, %v473
      %v634 = vpack.c.b16 %v478, %v474
      %v635 = vpack.c.b16 %v479, %v475
      %v636 = vpack.c.b16 %v480, %v476
      %v637 = vpack.c.b16 %v485, %v481
      %v638 = vpack.c.b16 %v486, %v482
      %v639 = vpack.c.b16 %v487, %v483
      %v640 = vpack.c.b16 %v488, %v484
      %v641 = vpack.c.b16 %v493, %v489
      %v642 = vpack.c.b16 %v494, %v490
      %v643 = vpack.c.b16 %v495, %v491
      %v644 = vpack.c.b16 %v496, %v492
      %v645 = vpack.c.b16 %v501, %v497
      %v646 = vpack.c.b16 %v502, %v498
      %v647 = vpack.c.b16 %v503, %v499
      %v648 = vpack.c.b16 %v504, %v500
      %v649 = vpack.c.b16 %v509, %v505
      %v650 = vpack.c.b16 %v510, %v506
      %v651 = vpack.c.b16 %v511, %v507
      %v652 = vpack.c.b16 %v512, %v508
      %v653 = vpack.c.b16 %v517, %v513
      %v654 = vpack.c.b16 %v518, %v514
      %v655 = vpack.c.b16 %v519, %v515
      %v656 = vpack.c.b16 %v520, %v516
      %v657 = vpack.c.b16 %v525, %v521
      %v658 = vpack.c.b16 %v526, %v522
      %v659 = vpack.c.b16 %v527, %v523
      %v660 = vpack.c.b16 %v528, %v524
      %v661 = vpack.c.b16 %v533, %v529
      %v662 = vpack.c.b16 %v534, %v530
      %v663 = vpack.c.b16 %v535, %v531
      %v664 = vpack.c.b16 %v536, %v532
      %v665 = vpack.c.b16 %v541, %v537
      %v666 = vpack.c.b16 %v542, %v538
      %v667 = vpack.c.b16 %v543, %v539
      %v668 = vpack.c.b16 %v544, %v540
      %v669 = vpack.c.b16 %v549, %v545
      %v670 = vpack.c.b16 %v550, %v546
      %v671 = vpack.c.b16 %v551, %v547
      %v672 = vpack.c.b16 %v552, %v548
      %v673 = vpack.c.b16 %v557, %v553
      %v674 = vpack.c.b16 %v558, %v554
      %v675 = vpack.c.b16 %v559, %v555
      %v676 = vpack.c.b16 %v560, %v556
      %v677 = vpack.c.b16 %v565, %v561
      %v678 = vpack.c.b16 %v566, %v562
      %v679 = vpack.c.b16 %v567, %v563
      %v680 = vpack.c.b16 %v568, %v564
      %v681 = vpack.c.b16 %v573, %v569
      %v682 = vpack.c.b16 %v574, %v570
      %v683 = vpack.c.b16 %v575, %v571
      %v684 = vpack.c.b16 %v576, %v572
      %v685 = vpack.c.b16 %v581, %v577
      %v686 = vpack.c.b16 %v582, %v578
      %v687 = vpack.c.b16 %v583, %v579
      %v688 = vpack.c.b16 %v584, %v580
      %v689 = vpack.c.b16 %v589, %v585
      %v690 = vpack.c.b16 %v590, %v586
      %v691 = vpack.c.b16 %v591, %v587
      %v692 = vpack.c.b16 %v592, %v588
      %v693 = vpack.c.b16 %v597, %v593
      %v694 = vpack.c.b16 %v598, %v594
      %v695 = vpack.c.b16 %v599, %v595
      %v696 = vpack.c.b16 %v600, %v596
      %v697 = vpack.c.b16 %v605, %v601
      %v698 = vpack.c.b16 %v606, %v602
      %v699 = vpack.c.b16 %v607, %v603
      %v700 = vpack.c.b16 %v608, %v604
      %v701 = vpack.c.b16 %v613, %v609
      %v702 = vpack.c.b16 %v614, %v610
      %v703 = vpack.c.b16 %v615, %v611
      %v704 = vpack.c.b16 %v616, %v612
      %v705 = vpack.c.b16 %v621, %v617
      %v706 = vpack.c.b16 %v622, %v618
      %v707 = vpack.c.b16 %v623, %v619
      %v708 = vpack.c.b16 %v624, %v620
      %v709 = vpack.c.b16 %v625, %v625
      %v710 = vpack.c.b16 %v626, %v626
      %v711 = vpack.c.b16 %v627, %v627
      %v712 = vpack.c.b16 %v628, %v628
      %vm793 = vcmask 556032
      %v794 = vsel %vm793, %v380, 0
      %vm796 = vcmask 1041408
      %v798 = vsel %vm796, %v709, 0
      %v801 = vsel %vm796, %v710, 0
      %v804 = vsel %vm796, %v711, 0
      %v807 = vsel %vm796, %v712, 0
      %809 = vmatpush.bf16.msra.mxu0 %v657
      %810 = vmatpush.bf16.msra.mxu0 %v653
      %811 = vmatpush.bf16.msra.mxu0 %v649
      %812 = vmatpush.bf16.msra.mxu0 %v645
      %813 = vmatpush.bf16.msra.mxu0 %v641
      %814 = vmatpush.bf16.msra.mxu0 %v637
      %815 = vmatpush.bf16.msra.mxu0 %v633
      %816 = vmatpush.bf16.msra.mxu0 %v629
      %817 = vmatmul.bf16.gmra.mxu0 %v378
      %v818 = vpop.f32.mrf.mxu0
      %v819 = vadd.f32 0.0, %v818
      %v820 = vpop.f32.mrf.mxu0
      %821 = vdwg.mxu0
      %822 = vmatpush.bf16.msra.mxu0 %v689
      %823 = vmatpush.bf16.msra.mxu0 %v685
      %824 = vmatpush.bf16.msra.mxu0 %v681
      %825 = vmatpush.bf16.msra.mxu0 %v677
      %826 = vmatpush.bf16.msra.mxu0 %v673
      %827 = vmatpush.bf16.msra.mxu0 %v669
      %828 = vmatpush.bf16.msra.mxu0 %v665
      %829 = vmatpush.bf16.msra.mxu0 %v661
      %830 = vmatmul.bf16.gmra.mxu0 %v379
      %v831 = vpop.f32.mrf.mxu0
      %v832 = vadd.f32 %v819, %v831
      %v833 = vpop.f32.mrf.mxu0
      %834 = vdwg.mxu0
      %835 = vmatpush.bf16.msra.mxu0 0
      %836 = vmatpush.bf16.msra.mxu0 0
      %837 = vmatpush.bf16.msra.mxu0 0
      %838 = vmatpush.bf16.msra.mxu0 %v798
      %839 = vmatpush.bf16.msra.mxu0 %v705
      %840 = vmatpush.bf16.msra.mxu0 %v701
      %841 = vmatpush.bf16.msra.mxu0 %v697
      %842 = vmatpush.bf16.msra.mxu0 %v693
      %843 = vmatmul.bf16.gmra.mxu0 %v794
      %v844 = vpop.f32.mrf.mxu0
      %v845 = vadd.f32 %v832, %v844
      %v846 = vpop.f32.mrf.mxu0
      %847 = vdwg.mxu0
      %848 = vmatpush.bf16.msra.mxu0 %v658
      %849 = vmatpush.bf16.msra.mxu0 %v654
      %850 = vmatpush.bf16.msra.mxu0 %v650
      %851 = vmatpush.bf16.msra.mxu0 %v646
      %852 = vmatpush.bf16.msra.mxu0 %v642
      %853 = vmatpush.bf16.msra.mxu0 %v638
      %854 = vmatpush.bf16.msra.mxu0 %v634
      %855 = vmatpush.bf16.msra.mxu0 %v630
      %856 = vmatmul.bf16.gmra.mxu0 %v378
      %v857 = vpop.f32.mrf.mxu0
      %v858 = vadd.f32 0.0, %v857
      %v859 = vpop.f32.mrf.mxu0
      %860 = vdwg.mxu0
      %861 = vmatpush.bf16.msra.mxu0 %v690
      %862 = vmatpush.bf16.msra.mxu0 %v686
      %863 = vmatpush.bf16.msra.mxu0 %v682
      %864 = vmatpush.bf16.msra.mxu0 %v678
      %865 = vmatpush.bf16.msra.mxu0 %v674
      %866 = vmatpush.bf16.msra.mxu0 %v670
      %867 = vmatpush.bf16.msra.mxu0 %v666
      %868 = vmatpush.bf16.msra.mxu0 %v662
      %869 = vmatmul.bf16.gmra.mxu0 %v379
      %v870 = vpop.f32.mrf.mxu0
      %v871 = vadd.f32 %v858, %v870
      %v872 = vpop.f32.mrf.mxu0
      %873 = vdwg.mxu0
      %874 = vmatpush.bf16.msra.mxu0 0
      %875 = vmatpush.bf16.msra.mxu0 0
      %876 = vmatpush.bf16.msra.mxu0 0
      %877 = vmatpush.bf16.msra.mxu0 %v801
      %878 = vmatpush.bf16.msra.mxu0 %v706
      %879 = vmatpush.bf16.msra.mxu0 %v702
      %880 = vmatpush.bf16.msra.mxu0 %v698
      %881 = vmatpush.bf16.msra.mxu0 %v694
      %882 = vmatmul.bf16.gmra.mxu0 %v794
      %v883 = vpop.f32.mrf.mxu0
      %v884 = vadd.f32 %v871, %v883
      %v885 = vpop.f32.mrf.mxu0
      %886 = vdwg.mxu0
      %887 = vmatpush.bf16.msra.mxu0 %v659
      %888 = vmatpush.bf16.msra.mxu0 %v655
      %889 = vmatpush.bf16.msra.mxu0 %v651
      %890 = vmatpush.bf16.msra.mxu0 %v647
      %891 = vmatpush.bf16.msra.mxu0 %v643
      %892 = vmatpush.bf16.msra.mxu0 %v639
      %893 = vmatpush.bf16.msra.mxu0 %v635
      %894 = vmatpush.bf16.msra.mxu0 %v631
      %895 = vmatmul.bf16.gmra.mxu0 %v378
      %v896 = vpop.f32.mrf.mxu0
      %v897 = vadd.f32 0.0, %v896
      %v898 = vpop.f32.mrf.mxu0
      %899 = vdwg.mxu0
      %900 = vmatpush.bf16.msra.mxu0 %v691
      %901 = vmatpush.bf16.msra.mxu0 %v687
      %902 = vmatpush.bf16.msra.mxu0 %v683
      %903 = vmatpush.bf16.msra.mxu0 %v679
      %904 = vmatpush.bf16.msra.mxu0 %v675
      %905 = vmatpush.bf16.msra.mxu0 %v671
      %906 = vmatpush.bf16.msra.mxu0 %v667
      %907 = vmatpush.bf16.msra.mxu0 %v663
      %908 = vmatmul.bf16.gmra.mxu0 %v379
      %v909 = vpop.f32.mrf.mxu0
      %v910 = vadd.f32 %v897, %v909
      %v911 = vpop.f32.mrf.mxu0
      %912 = vdwg.mxu0
      %913 = vmatpush.bf16.msra.mxu0 0
      %914 = vmatpush.bf16.msra.mxu0 0
      %915 = vmatpush.bf16.msra.mxu0 0
      %916 = vmatpush.bf16.msra.mxu0 %v804
      %917 = vmatpush.bf16.msra.mxu0 %v707
      %918 = vmatpush.bf16.msra.mxu0 %v703
      %919 = vmatpush.bf16.msra.mxu0 %v699
      %920 = vmatpush.bf16.msra.mxu0 %v695
      %921 = vmatmul.bf16.gmra.mxu0 %v794
      %v922 = vpop.f32.mrf.mxu0
      %v923 = vadd.f32 %v910, %v922
      %v924 = vpop.f32.mrf.mxu0
      %925 = vdwg.mxu0
      %926 = vmatpush.bf16.msra.mxu0 %v660
      %927 = vmatpush.bf16.msra.mxu0 %v656
      %928 = vmatpush.bf16.msra.mxu0 %v652
      %929 = vmatpush.bf16.msra.mxu0 %v648
      %930 = vmatpush.bf16.msra.mxu0 %v644
      %931 = vmatpush.bf16.msra.mxu0 %v640
      %932 = vmatpush.bf16.msra.mxu0 %v636
      %933 = vmatpush.bf16.msra.mxu0 %v632
      %934 = vmatmul.bf16.gmra.mxu0 %v378
      %v935 = vpop.f32.mrf.mxu0
      %v936 = vadd.f32 0.0, %v935
      %v937 = vpop.f32.mrf.mxu0
      %938 = vdwg.mxu0
      %939 = vmatpush.bf16.msra.mxu0 %v692
      %940 = vmatpush.bf16.msra.mxu0 %v688
      %941 = vmatpush.bf16.msra.mxu0 %v684
      %942 = vmatpush.bf16.msra.mxu0 %v680
      %943 = vmatpush.bf16.msra.mxu0 %v676
      %944 = vmatpush.bf16.msra.mxu0 %v672
      %945 = vmatpush.bf16.msra.mxu0 %v668
      %946 = vmatpush.bf16.msra.mxu0 %v664
      %947 = vmatmul.bf16.gmra.mxu0 %v379
      %v948 = vpop.f32.mrf.mxu0
      %v949 = vadd.f32 %v936, %v948
      %v950 = vpop.f32.mrf.mxu0
      %951 = vdwg.mxu0
      %952 = vmatpush.bf16.msra.mxu0 0
      %953 = vmatpush.bf16.msra.mxu0 0
      %954 = vmatpush.bf16.msra.mxu0 0
      %955 = vmatpush.bf16.msra.mxu0 %v807
      %956 = vmatpush.bf16.msra.mxu0 %v708
      %957 = vmatpush.bf16.msra.mxu0 %v704
      %958 = vmatpush.bf16.msra.mxu0 %v700
      %959 = vmatpush.bf16.msra.mxu0 %v696
      %960 = vmatmul.bf16.gmra.mxu0 %v794
      %v961 = vpop.f32.mrf.mxu0
      %v962 = vadd.f32 %v949, %v961
      %v963 = vpop.f32.mrf.mxu0
      %964 = vdwg.mxu0
      %v969 = vrot.slane %v884, 4
      %v970 = vrot.slane %v962, 4
      %vm971 = vcmask 1043456
      %v972 = vsel %vm971, %v845, %v969
      %v973 = vsel %vm971, %v923, %v970
      %v976 = vadd.f32 %v291, %v972
      %v977 = vadd.f32 %v292, %v973
      %978 = vst [vmem:[#allocation2] sm:$0xff] %v976
      %979 = vst [vmem:[#allocation2 + $0x8] sm:$0xff] %v977
      %p980 = scmp.eq.s32.totalorder %s18, 7
      // Predicated region
      $region53: #{siamese_forward.3} parent=47 // pred_check
        %p981 = pneg %p980
      $region54: #{siamese_forward.3} parent=47 // pred_check_branch
        %983 = sbr.rel (%p981) target = $region56
      $region55: #{siamese_forward.3} parent=47 // pred_region
        %v984 = vld [vmem:[#allocation2] sm:$0xff]
        %v985 = vld [vmem:[#allocation2 + $0x8] sm:$0xff]
        %v986 = vld [vmem:[%s2] sm:$0xf]
        %v988 = vperm.slane %v986, 0
        %v989 = vperm.slane %v986, 1
        %v990 = vperm.slane %v986, 2
        %v991 = vperm.slane %v986, 3
        %v992 = vrot.slane %v989, 4
        %v993 = vrot.slane %v991, 4
        %v994 = vsel %vm971, %v988, %v992
        %v995 = vsel %vm971, %v990, %v993
        %v998 = vadd.f32 %v984, %v994
        %v999 = vadd.f32 %v985, %v995
        %v1000 = vmax.f32 %v998, 0.0
        %v1001 = vmax.f32 %v999, 0.0
        %1004 = vst [vmem:[#allocation1] ss:$2 sm:$0xff] %v1000
        %s1005 = scalar_lea.vmem [#allocation1], 16
        %1006 = vst [vmem:[%s1005] ss:$2 sm:$0xff] %v1001
        %v1007 = vld.sshfl [vmem:[#allocation1] sm:$0xff pattern:$0x75316420]
        %v1008 = vld.sshfl [vmem:[#allocation1 + $0x8] sm:$0xff pattern:$0x75316420]
        %v1009 = vld.sshfl [vmem:[#allocation1 + $0x10] sm:$0xff pattern:$0x75316420]
        %v1010 = vld.sshfl [vmem:[#allocation1 + $0x18] sm:$0xff pattern:$0x75316420]
        %v1015 = vpack.c.bf16 %v1007, %v1007
        %v1016 = vpack.c.bf16 %v1008, %v1008
        %v1017 = vpack.c.bf16 %v1009, %v1009
        %v1018 = vpack.c.bf16 %v1010, %v1010
        %v1019 = vld [vmem:[%s3] sm:$0xff]
        %v1020 = vld [vmem:[%s3 + $0x8] sm:$0xff]
        %v1021 = vld [vmem:[%s3 + $0x10] sm:$0xff]
        %v1022 = vld [vmem:[%s3 + $0x18] sm:$0xff]
        %v1023 = vld [vmem:[%s3 + $0x20] sm:$0xff]
        %v1024 = vld [vmem:[%s3 + $0x28] sm:$0xff]
        %v1025 = vld [vmem:[%s3 + $0x30] sm:$0xff]
        %v1026 = vld [vmem:[%s3 + $0x38] sm:$0xff]
        %v1027 = vld [vmem:[%s3 + $0x40] sm:$0xff]
        %v1028 = vld [vmem:[%s3 + $0x48] sm:$0xff]
        %v1029 = vld [vmem:[%s3 + $0x50] sm:$0xff]
        %v1030 = vld [vmem:[%s3 + $0x58] sm:$0xff]
        %v1031 = vld [vmem:[%s3 + $0x60] sm:$0xff]
        %v1032 = vld [vmem:[%s3 + $0x68] sm:$0xff]
        %v1033 = vld [vmem:[%s3 + $0x70] sm:$0xff]
        %v1034 = vld [vmem:[%s3 + $0x78] sm:$0xff]
        %v1035 = vld [vmem:[%s3 + $0x80] sm:$0xff]
        %v1036 = vld [vmem:[%s3 + $0x88] sm:$0xff]
        %v1037 = vld [vmem:[%s3 + $0x90] sm:$0xff]
        %v1038 = vld [vmem:[%s3 + $0x98] sm:$0xff]
        %v1039 = vld [vmem:[%s3 + $0xa0] sm:$0xff]
        %v1040 = vld [vmem:[%s3 + $0xa8] sm:$0xff]
        %v1041 = vld [vmem:[%s3 + $0xb0] sm:$0xff]
        %v1042 = vld [vmem:[%s3 + $0xb8] sm:$0xff]
        %v1043 = vld [vmem:[%s3 + $0xc0] sm:$0xff]
        %v1044 = vld [vmem:[%s3 + $0xc8] sm:$0xff]
        %v1045 = vld [vmem:[%s3 + $0xd0] sm:$0xff]
        %v1046 = vld [vmem:[%s3 + $0xd8] sm:$0xff]
        %v1047 = vld [vmem:[%s3 + $0xe0] sm:$0xff]
        %v1048 = vld [vmem:[%s3 + $0xe8] sm:$0xff]
        %v1049 = vld [vmem:[%s3 + $0xf0] sm:$0xff]
        %v1050 = vld [vmem:[%s3 + $0xf8] sm:$0xff]
        %v1051 = vld [vmem:[%s3 + $0x100] sm:$0xff]
        %v1052 = vld [vmem:[%s3 + $0x108] sm:$0xff]
        %v1053 = vld [vmem:[%s3 + $0x110] sm:$0xff]
        %v1054 = vld [vmem:[%s3 + $0x118] sm:$0xff]
        %v1055 = vld [vmem:[%s3 + $0x120] sm:$0xff]
        %v1056 = vld [vmem:[%s3 + $0x128] sm:$0xff]
        %v1057 = vld [vmem:[%s3 + $0x130] sm:$0xff]
        %v1058 = vld [vmem:[%s3 + $0x138] sm:$0xff]
        %v1059 = vld [vmem:[%s3 + $0x140] sm:$0xff]
        %v1060 = vld [vmem:[%s3 + $0x148] sm:$0xff]
        %v1061 = vld [vmem:[%s3 + $0x150] sm:$0xff]
        %v1062 = vld [vmem:[%s3 + $0x158] sm:$0xff]
        %v1063 = vld [vmem:[%s3 + $0x160] sm:$0xff]
        %v1064 = vld [vmem:[%s3 + $0x168] sm:$0xff]
        %v1065 = vld [vmem:[%s3 + $0x170] sm:$0xff]
        %v1066 = vld [vmem:[%s3 + $0x178] sm:$0xff]
        %v1067 = vld [vmem:[%s3 + $0x180] sm:$0xff]
        %v1068 = vld [vmem:[%s3 + $0x188] sm:$0xff]
        %v1069 = vld [vmem:[%s3 + $0x190] sm:$0xff]
        %v1070 = vld [vmem:[%s3 + $0x198] sm:$0xff]
        %v1071 = vld [vmem:[%s3 + $0x1a0] sm:$0xff]
        %v1072 = vld [vmem:[%s3 + $0x1a8] sm:$0xff]
        %v1073 = vld [vmem:[%s3 + $0x1b0] sm:$0xff]
        %v1074 = vld [vmem:[%s3 + $0x1b8] sm:$0xff]
        %v1075 = vld [vmem:[%s3 + $0x1c0] sm:$0xff]
        %v1076 = vld [vmem:[%s3 + $0x1c8] sm:$0xff]
        %v1077 = vld [vmem:[%s3 + $0x1d0] sm:$0xff]
        %v1078 = vld [vmem:[%s3 + $0x1d8] sm:$0xff]
        %v1079 = vld [vmem:[%s3 + $0x1e0] sm:$0xff]
        %v1080 = vld [vmem:[%s3 + $0x1e8] sm:$0xff]
        %v1081 = vld [vmem:[%s3 + $0x1f0] sm:$0xff]
        %v1082 = vld [vmem:[%s3 + $0x1f8] sm:$0xff]
        %v1083 = vld [vmem:[%s3 + $0x200] sm:$0xff]
        %v1084 = vld [vmem:[%s3 + $0x208] sm:$0xff]
        %v1085 = vld [vmem:[%s3 + $0x210] sm:$0xff]
        %v1086 = vld [vmem:[%s3 + $0x218] sm:$0xff]
        %v1087 = vld [vmem:[%s3 + $0x220] sm:$0xff]
        %v1088 = vld [vmem:[%s3 + $0x228] sm:$0xff]
        %v1089 = vld [vmem:[%s3 + $0x230] sm:$0xff]
        %v1090 = vld [vmem:[%s3 + $0x238] sm:$0xff]
        %v1091 = vld [vmem:[%s3 + $0x240] sm:$0xff]
        %v1092 = vld [vmem:[%s3 + $0x248] sm:$0xff]
        %v1093 = vld [vmem:[%s3 + $0x250] sm:$0xff]
        %v1094 = vld [vmem:[%s3 + $0x258] sm:$0xff]
        %v1095 = vld [vmem:[%s3 + $0x260] sm:$0xff]
        %v1096 = vld [vmem:[%s3 + $0x268] sm:$0xff]
        %v1097 = vld [vmem:[%s3 + $0x270] sm:$0xff]
        %v1098 = vld [vmem:[%s3 + $0x278] sm:$0xff]
        %v1099 = vld [vmem:[%s3 + $0x280] sm:$0xff]
        %v1100 = vld [vmem:[%s3 + $0x288] sm:$0xff]
        %v1101 = vld [vmem:[%s3 + $0x290] sm:$0xff]
        %v1102 = vld [vmem:[%s3 + $0x298] sm:$0xff]
        %v1103 = vld [vmem:[%s3 + $0x2a0] sm:$0xff]
        %v1104 = vld [vmem:[%s3 + $0x2a8] sm:$0xff]
        %v1105 = vld [vmem:[%s3 + $0x2b0] sm:$0xff]
        %v1106 = vld [vmem:[%s3 + $0x2b8] sm:$0xff]
        %v1107 = vld [vmem:[%s3 + $0x2c0] sm:$0xff]
        %v1108 = vld [vmem:[%s3 + $0x2c8] sm:$0xff]
        %v1109 = vld [vmem:[%s3 + $0x2d0] sm:$0xff]
        %v1110 = vld [vmem:[%s3 + $0x2d8] sm:$0xff]
        %v1111 = vld [vmem:[%s3 + $0x2e0] sm:$0xff]
        %v1112 = vld [vmem:[%s3 + $0x2e8] sm:$0xff]
        %v1113 = vld [vmem:[%s3 + $0x2f0] sm:$0xff]
        %v1114 = vld [vmem:[%s3 + $0x2f8] sm:$0xff]
        %v1115 = vld [vmem:[%s3 + $0x300] sm:$0xff]
        %v1116 = vld [vmem:[%s3 + $0x308] sm:$0xff]
        %v1117 = vld [vmem:[%s3 + $0x310] sm:$0xff]
        %v1118 = vld [vmem:[%s3 + $0x318] sm:$0xff]
        %v1119 = vld [vmem:[%s3 + $0x320] sm:$0xff]
        %v1120 = vld [vmem:[%s3 + $0x328] sm:$0xff]
        %v1121 = vld [vmem:[%s3 + $0x330] sm:$0xff]
        %v1122 = vld [vmem:[%s3 + $0x338] sm:$0xff]
        %v1123 = vld [vmem:[%s3 + $0x340] sm:$0xff]
        %v1124 = vld [vmem:[%s3 + $0x348] sm:$0xff]
        %v1125 = vld [vmem:[%s3 + $0x350] sm:$0xff]
        %v1126 = vld [vmem:[%s3 + $0x358] sm:$0xff]
        %v1127 = vld [vmem:[%s3 + $0x360] sm:$0xff]
        %v1128 = vld [vmem:[%s3 + $0x368] sm:$0xff]
        %v1129 = vld [vmem:[%s3 + $0x370] sm:$0xff]
        %v1130 = vld [vmem:[%s3 + $0x378] sm:$0xff]
        %v1131 = vld [vmem:[%s3 + $0x380] sm:$0xff]
        %v1132 = vld [vmem:[%s3 + $0x388] sm:$0xff]
        %v1133 = vld [vmem:[%s3 + $0x390] sm:$0xff]
        %v1134 = vld [vmem:[%s3 + $0x398] sm:$0xff]
        %v1135 = vld [vmem:[%s3 + $0x3a0] sm:$0xff]
        %v1136 = vld [vmem:[%s3 + $0x3a8] sm:$0xff]
        %v1137 = vld [vmem:[%s3 + $0x3b0] sm:$0xff]
        %v1138 = vld [vmem:[%s3 + $0x3b8] sm:$0xff]
        %v1139 = vld [vmem:[%s3 + $0x3c0] sm:$0xff]
        %v1140 = vld [vmem:[%s3 + $0x3c8] sm:$0xff]
        %v1141 = vld [vmem:[%s3 + $0x3d0] sm:$0xff]
        %v1142 = vld [vmem:[%s3 + $0x3d8] sm:$0xff]
        %v1143 = vld [vmem:[%s3 + $0x3e0] sm:$0xff]
        %v1144 = vld [vmem:[%s3 + $0x3e8] sm:$0xff]
        %v1145 = vld [vmem:[%s3 + $0x3f0] sm:$0xff]
        %v1146 = vld [vmem:[%s3 + $0x3f8] sm:$0xff]
        %v1147 = vld [vmem:[%s4] sm:$0xf]
        %v1149 = vperm.slane %v1147, 0
        %v1150 = vperm.slane %v1147, 1
        %v1151 = vperm.slane %v1147, 2
        %v1152 = vperm.slane %v1147, 3
        %v1285 = vunpack.c.l.b16 %v1019
        %v1286 = vunpack.c.h.b16 %v1019
        %v1287 = vunpack.c.l.b16 %v1020
        %v1288 = vunpack.c.h.b16 %v1020
        %v1289 = vunpack.c.l.b16 %v1021
        %v1290 = vunpack.c.h.b16 %v1021
        %v1291 = vunpack.c.l.b16 %v1022
        %v1292 = vunpack.c.h.b16 %v1022
        %v1293 = vunpack.c.l.b16 %v1023
        %v1294 = vunpack.c.h.b16 %v1023
        %v1295 = vunpack.c.l.b16 %v1024
        %v1296 = vunpack.c.h.b16 %v1024
        %v1297 = vunpack.c.l.b16 %v1025
        %v1298 = vunpack.c.h.b16 %v1025
        %v1299 = vunpack.c.l.b16 %v1026
        %v1300 = vunpack.c.h.b16 %v1026
        %v1301 = vunpack.c.l.b16 %v1027
        %v1302 = vunpack.c.h.b16 %v1027
        %v1303 = vunpack.c.l.b16 %v1028
        %v1304 = vunpack.c.h.b16 %v1028
        %v1305 = vunpack.c.l.b16 %v1029
        %v1306 = vunpack.c.h.b16 %v1029
        %v1307 = vunpack.c.l.b16 %v1030
        %v1308 = vunpack.c.h.b16 %v1030
        %v1309 = vunpack.c.l.b16 %v1031
        %v1310 = vunpack.c.h.b16 %v1031
        %v1311 = vunpack.c.l.b16 %v1032
        %v1312 = vunpack.c.h.b16 %v1032
        %v1313 = vunpack.c.l.b16 %v1033
        %v1314 = vunpack.c.h.b16 %v1033
        %v1315 = vunpack.c.l.b16 %v1034
        %v1316 = vunpack.c.h.b16 %v1034
        %v1317 = vunpack.c.l.b16 %v1035
        %v1318 = vunpack.c.h.b16 %v1035
        %v1319 = vunpack.c.l.b16 %v1036
        %v1320 = vunpack.c.h.b16 %v1036
        %v1321 = vunpack.c.l.b16 %v1037
        %v1322 = vunpack.c.h.b16 %v1037
        %v1323 = vunpack.c.l.b16 %v1038
        %v1324 = vunpack.c.h.b16 %v1038
        %v1325 = vunpack.c.l.b16 %v1039
        %v1326 = vunpack.c.h.b16 %v1039
        %v1327 = vunpack.c.l.b16 %v1040
        %v1328 = vunpack.c.h.b16 %v1040
        %v1329 = vunpack.c.l.b16 %v1041
        %v1330 = vunpack.c.h.b16 %v1041
        %v1331 = vunpack.c.l.b16 %v1042
        %v1332 = vunpack.c.h.b16 %v1042
        %v1333 = vunpack.c.l.b16 %v1043
        %v1334 = vunpack.c.h.b16 %v1043
        %v1335 = vunpack.c.l.b16 %v1044
        %v1336 = vunpack.c.h.b16 %v1044
        %v1337 = vunpack.c.l.b16 %v1045
        %v1338 = vunpack.c.h.b16 %v1045
        %v1339 = vunpack.c.l.b16 %v1046
        %v1340 = vunpack.c.h.b16 %v1046
        %v1341 = vunpack.c.l.b16 %v1047
        %v1342 = vunpack.c.h.b16 %v1047
        %v1343 = vunpack.c.l.b16 %v1048
        %v1344 = vunpack.c.h.b16 %v1048
        %v1345 = vunpack.c.l.b16 %v1049
        %v1346 = vunpack.c.h.b16 %v1049
        %v1347 = vunpack.c.l.b16 %v1050
        %v1348 = vunpack.c.h.b16 %v1050
        %v1349 = vunpack.c.l.b16 %v1051
        %v1350 = vunpack.c.h.b16 %v1051
        %v1351 = vunpack.c.l.b16 %v1052
        %v1352 = vunpack.c.h.b16 %v1052
        %v1353 = vunpack.c.l.b16 %v1053
        %v1354 = vunpack.c.h.b16 %v1053
        %v1355 = vunpack.c.l.b16 %v1054
        %v1356 = vunpack.c.h.b16 %v1054
        %v1357 = vunpack.c.l.b16 %v1055
        %v1358 = vunpack.c.h.b16 %v1055
        %v1359 = vunpack.c.l.b16 %v1056
        %v1360 = vunpack.c.h.b16 %v1056
        %v1361 = vunpack.c.l.b16 %v1057
        %v1362 = vunpack.c.h.b16 %v1057
        %v1363 = vunpack.c.l.b16 %v1058
        %v1364 = vunpack.c.h.b16 %v1058
        %v1365 = vunpack.c.l.b16 %v1059
        %v1366 = vunpack.c.h.b16 %v1059
        %v1367 = vunpack.c.l.b16 %v1060
        %v1368 = vunpack.c.h.b16 %v1060
        %v1369 = vunpack.c.l.b16 %v1061
        %v1370 = vunpack.c.h.b16 %v1061
        %v1371 = vunpack.c.l.b16 %v1062
        %v1372 = vunpack.c.h.b16 %v1062
        %v1373 = vunpack.c.l.b16 %v1063
        %v1374 = vunpack.c.h.b16 %v1063
        %v1375 = vunpack.c.l.b16 %v1064
        %v1376 = vunpack.c.h.b16 %v1064
        %v1377 = vunpack.c.l.b16 %v1065
        %v1378 = vunpack.c.h.b16 %v1065
        %v1379 = vunpack.c.l.b16 %v1066
        %v1380 = vunpack.c.h.b16 %v1066
        %v1381 = vunpack.c.l.b16 %v1067
        %v1382 = vunpack.c.h.b16 %v1067
        %v1383 = vunpack.c.l.b16 %v1068
        %v1384 = vunpack.c.h.b16 %v1068
        %v1385 = vunpack.c.l.b16 %v1069
        %v1386 = vunpack.c.h.b16 %v1069
        %v1387 = vunpack.c.l.b16 %v1070
        %v1388 = vunpack.c.h.b16 %v1070
        %v1389 = vunpack.c.l.b16 %v1071
        %v1390 = vunpack.c.h.b16 %v1071
        %v1391 = vunpack.c.l.b16 %v1072
        %v1392 = vunpack.c.h.b16 %v1072
        %v1393 = vunpack.c.l.b16 %v1073
        %v1394 = vunpack.c.h.b16 %v1073
        %v1395 = vunpack.c.l.b16 %v1074
        %v1396 = vunpack.c.h.b16 %v1074
        %v1397 = vunpack.c.l.b16 %v1075
        %v1398 = vunpack.c.h.b16 %v1075
        %v1399 = vunpack.c.l.b16 %v1076
        %v1400 = vunpack.c.h.b16 %v1076
        %v1401 = vunpack.c.l.b16 %v1077
        %v1402 = vunpack.c.h.b16 %v1077
        %v1403 = vunpack.c.l.b16 %v1078
        %v1404 = vunpack.c.h.b16 %v1078
        %v1405 = vunpack.c.l.b16 %v1079
        %v1406 = vunpack.c.h.b16 %v1079
        %v1407 = vunpack.c.l.b16 %v1080
        %v1408 = vunpack.c.h.b16 %v1080
        %v1409 = vunpack.c.l.b16 %v1081
        %v1410 = vunpack.c.h.b16 %v1081
        %v1411 = vunpack.c.l.b16 %v1082
        %v1412 = vunpack.c.h.b16 %v1082
        %v1413 = vunpack.c.l.b16 %v1083
        %v1414 = vunpack.c.h.b16 %v1083
        %v1415 = vunpack.c.l.b16 %v1084
        %v1416 = vunpack.c.h.b16 %v1084
        %v1417 = vunpack.c.l.b16 %v1085
        %v1418 = vunpack.c.h.b16 %v1085
        %v1419 = vunpack.c.l.b16 %v1086
        %v1420 = vunpack.c.h.b16 %v1086
        %v1421 = vunpack.c.l.b16 %v1087
        %v1422 = vunpack.c.h.b16 %v1087
        %v1423 = vunpack.c.l.b16 %v1088
        %v1424 = vunpack.c.h.b16 %v1088
        %v1425 = vunpack.c.l.b16 %v1089
        %v1426 = vunpack.c.h.b16 %v1089
        %v1427 = vunpack.c.l.b16 %v1090
        %v1428 = vunpack.c.h.b16 %v1090
        %v1429 = vunpack.c.l.b16 %v1091
        %v1430 = vunpack.c.h.b16 %v1091
        %v1431 = vunpack.c.l.b16 %v1092
        %v1432 = vunpack.c.h.b16 %v1092
        %v1433 = vunpack.c.l.b16 %v1093
        %v1434 = vunpack.c.h.b16 %v1093
        %v1435 = vunpack.c.l.b16 %v1094
        %v1436 = vunpack.c.h.b16 %v1094
        %v1437 = vunpack.c.l.b16 %v1095
        %v1438 = vunpack.c.h.b16 %v1095
        %v1439 = vunpack.c.l.b16 %v1096
        %v1440 = vunpack.c.h.b16 %v1096
        %v1441 = vunpack.c.l.b16 %v1097
        %v1442 = vunpack.c.h.b16 %v1097
        %v1443 = vunpack.c.l.b16 %v1098
        %v1444 = vunpack.c.h.b16 %v1098
        %v1445 = vunpack.c.l.b16 %v1099
        %v1446 = vunpack.c.h.b16 %v1099
        %v1447 = vunpack.c.l.b16 %v1100
        %v1448 = vunpack.c.h.b16 %v1100
        %v1449 = vunpack.c.l.b16 %v1101
        %v1450 = vunpack.c.h.b16 %v1101
        %v1451 = vunpack.c.l.b16 %v1102
        %v1452 = vunpack.c.h.b16 %v1102
        %v1453 = vunpack.c.l.b16 %v1103
        %v1454 = vunpack.c.h.b16 %v1103
        %v1455 = vunpack.c.l.b16 %v1104
        %v1456 = vunpack.c.h.b16 %v1104
        %v1457 = vunpack.c.l.b16 %v1105
        %v1458 = vunpack.c.h.b16 %v1105
        %v1459 = vunpack.c.l.b16 %v1106
        %v1460 = vunpack.c.h.b16 %v1106
        %v1461 = vunpack.c.l.b16 %v1107
        %v1462 = vunpack.c.h.b16 %v1107
        %v1463 = vunpack.c.l.b16 %v1108
        %v1464 = vunpack.c.h.b16 %v1108
        %v1465 = vunpack.c.l.b16 %v1109
        %v1466 = vunpack.c.h.b16 %v1109
        %v1467 = vunpack.c.l.b16 %v1110
        %v1468 = vunpack.c.h.b16 %v1110
        %v1469 = vunpack.c.l.b16 %v1111
        %v1470 = vunpack.c.h.b16 %v1111
        %v1471 = vunpack.c.l.b16 %v1112
        %v1472 = vunpack.c.h.b16 %v1112
        %v1473 = vunpack.c.l.b16 %v1113
        %v1474 = vunpack.c.h.b16 %v1113
        %v1475 = vunpack.c.l.b16 %v1114
        %v1476 = vunpack.c.h.b16 %v1114
        %v1477 = vunpack.c.l.b16 %v1115
        %v1478 = vunpack.c.h.b16 %v1115
        %v1479 = vunpack.c.l.b16 %v1116
        %v1480 = vunpack.c.h.b16 %v1116
        %v1481 = vunpack.c.l.b16 %v1117
        %v1482 = vunpack.c.h.b16 %v1117
        %v1483 = vunpack.c.l.b16 %v1118
        %v1484 = vunpack.c.h.b16 %v1118
        %v1485 = vunpack.c.l.b16 %v1119
        %v1486 = vunpack.c.h.b16 %v1119
        %v1487 = vunpack.c.l.b16 %v1120
        %v1488 = vunpack.c.h.b16 %v1120
        %v1489 = vunpack.c.l.b16 %v1121
        %v1490 = vunpack.c.h.b16 %v1121
        %v1491 = vunpack.c.l.b16 %v1122
        %v1492 = vunpack.c.h.b16 %v1122
        %v1493 = vunpack.c.l.b16 %v1123
        %v1494 = vunpack.c.h.b16 %v1123
        %v1495 = vunpack.c.l.b16 %v1124
        %v1496 = vunpack.c.h.b16 %v1124
        %v1497 = vunpack.c.l.b16 %v1125
        %v1498 = vunpack.c.h.b16 %v1125
        %v1499 = vunpack.c.l.b16 %v1126
        %v1500 = vunpack.c.h.b16 %v1126
        %v1501 = vunpack.c.l.b16 %v1127
        %v1502 = vunpack.c.h.b16 %v1127
        %v1503 = vunpack.c.l.b16 %v1128
        %v1504 = vunpack.c.h.b16 %v1128
        %v1505 = vunpack.c.l.b16 %v1129
        %v1506 = vunpack.c.h.b16 %v1129
        %v1507 = vunpack.c.l.b16 %v1130
        %v1508 = vunpack.c.h.b16 %v1130
        %v1509 = vunpack.c.l.b16 %v1131
        %v1510 = vunpack.c.h.b16 %v1131
        %v1511 = vunpack.c.l.b16 %v1132
        %v1512 = vunpack.c.h.b16 %v1132
        %v1513 = vunpack.c.l.b16 %v1133
        %v1514 = vunpack.c.h.b16 %v1133
        %v1515 = vunpack.c.l.b16 %v1134
        %v1516 = vunpack.c.h.b16 %v1134
        %v1517 = vunpack.c.l.b16 %v1135
        %v1518 = vunpack.c.h.b16 %v1135
        %v1519 = vunpack.c.l.b16 %v1136
        %v1520 = vunpack.c.h.b16 %v1136
        %v1521 = vunpack.c.l.b16 %v1137
        %v1522 = vunpack.c.h.b16 %v1137
        %v1523 = vunpack.c.l.b16 %v1138
        %v1524 = vunpack.c.h.b16 %v1138
        %v1525 = vunpack.c.l.b16 %v1139
        %v1526 = vunpack.c.h.b16 %v1139
        %v1527 = vunpack.c.l.b16 %v1140
        %v1528 = vunpack.c.h.b16 %v1140
        %v1529 = vunpack.c.l.b16 %v1141
        %v1530 = vunpack.c.h.b16 %v1141
        %v1531 = vunpack.c.l.b16 %v1142
        %v1532 = vunpack.c.h.b16 %v1142
        %v1533 = vunpack.c.l.b16 %v1143
        %v1534 = vunpack.c.h.b16 %v1143
        %v1535 = vunpack.c.l.b16 %v1144
        %v1536 = vunpack.c.h.b16 %v1144
        %v1537 = vunpack.c.l.b16 %v1145
        %v1538 = vunpack.c.h.b16 %v1145
        %v1539 = vunpack.c.l.b16 %v1146
        %v1540 = vunpack.c.h.b16 %v1146
        %v1541 = vpack.c.b16 %v1289, %v1285
        %v1542 = vpack.c.b16 %v1290, %v1286
        %v1543 = vpack.c.b16 %v1291, %v1287
        %v1544 = vpack.c.b16 %v1292, %v1288
        %v1545 = vpack.c.b16 %v1297, %v1293
        %v1546 = vpack.c.b16 %v1298, %v1294
        %v1547 = vpack.c.b16 %v1299, %v1295
        %v1548 = vpack.c.b16 %v1300, %v1296
        %v1549 = vpack.c.b16 %v1305, %v1301
        %v1550 = vpack.c.b16 %v1306, %v1302
        %v1551 = vpack.c.b16 %v1307, %v1303
        %v1552 = vpack.c.b16 %v1308, %v1304
        %v1553 = vpack.c.b16 %v1313, %v1309
        %v1554 = vpack.c.b16 %v1314, %v1310
        %v1555 = vpack.c.b16 %v1315, %v1311
        %v1556 = vpack.c.b16 %v1316, %v1312
        %v1557 = vpack.c.b16 %v1321, %v1317
        %v1558 = vpack.c.b16 %v1322, %v1318
        %v1559 = vpack.c.b16 %v1323, %v1319
        %v1560 = vpack.c.b16 %v1324, %v1320
        %v1561 = vpack.c.b16 %v1329, %v1325
        %v1562 = vpack.c.b16 %v1330, %v1326
        %v1563 = vpack.c.b16 %v1331, %v1327
        %v1564 = vpack.c.b16 %v1332, %v1328
        %v1565 = vpack.c.b16 %v1337, %v1333
        %v1566 = vpack.c.b16 %v1338, %v1334
        %v1567 = vpack.c.b16 %v1339, %v1335
        %v1568 = vpack.c.b16 %v1340, %v1336
        %v1569 = vpack.c.b16 %v1345, %v1341
        %v1570 = vpack.c.b16 %v1346, %v1342
        %v1571 = vpack.c.b16 %v1347, %v1343
        %v1572 = vpack.c.b16 %v1348, %v1344
        %v1573 = vpack.c.b16 %v1353, %v1349
        %v1574 = vpack.c.b16 %v1354, %v1350
        %v1575 = vpack.c.b16 %v1355, %v1351
        %v1576 = vpack.c.b16 %v1356, %v1352
        %v1577 = vpack.c.b16 %v1361, %v1357
        %v1578 = vpack.c.b16 %v1362, %v1358
        %v1579 = vpack.c.b16 %v1363, %v1359
        %v1580 = vpack.c.b16 %v1364, %v1360
        %v1581 = vpack.c.b16 %v1369, %v1365
        %v1582 = vpack.c.b16 %v1370, %v1366
        %v1583 = vpack.c.b16 %v1371, %v1367
        %v1584 = vpack.c.b16 %v1372, %v1368
        %v1585 = vpack.c.b16 %v1377, %v1373
        %v1586 = vpack.c.b16 %v1378, %v1374
        %v1587 = vpack.c.b16 %v1379, %v1375
        %v1588 = vpack.c.b16 %v1380, %v1376
        %v1589 = vpack.c.b16 %v1385, %v1381
        %v1590 = vpack.c.b16 %v1386, %v1382
        %v1591 = vpack.c.b16 %v1387, %v1383
        %v1592 = vpack.c.b16 %v1388, %v1384
        %v1593 = vpack.c.b16 %v1393, %v1389
        %v1594 = vpack.c.b16 %v1394, %v1390
        %v1595 = vpack.c.b16 %v1395, %v1391
        %v1596 = vpack.c.b16 %v1396, %v1392
        %v1597 = vpack.c.b16 %v1401, %v1397
        %v1598 = vpack.c.b16 %v1402, %v1398
        %v1599 = vpack.c.b16 %v1403, %v1399
        %v1600 = vpack.c.b16 %v1404, %v1400
        %v1601 = vpack.c.b16 %v1409, %v1405
        %v1602 = vpack.c.b16 %v1410, %v1406
        %v1603 = vpack.c.b16 %v1411, %v1407
        %v1604 = vpack.c.b16 %v1412, %v1408
        %v1605 = vpack.c.b16 %v1417, %v1413
        %v1606 = vpack.c.b16 %v1418, %v1414
        %v1607 = vpack.c.b16 %v1419, %v1415
        %v1608 = vpack.c.b16 %v1420, %v1416
        %v1609 = vpack.c.b16 %v1425, %v1421
        %v1610 = vpack.c.b16 %v1426, %v1422
        %v1611 = vpack.c.b16 %v1427, %v1423
        %v1612 = vpack.c.b16 %v1428, %v1424
        %v1613 = vpack.c.b16 %v1433, %v1429
        %v1614 = vpack.c.b16 %v1434, %v1430
        %v1615 = vpack.c.b16 %v1435, %v1431
        %v1616 = vpack.c.b16 %v1436, %v1432
        %v1617 = vpack.c.b16 %v1441, %v1437
        %v1618 = vpack.c.b16 %v1442, %v1438
        %v1619 = vpack.c.b16 %v1443, %v1439
        %v1620 = vpack.c.b16 %v1444, %v1440
        %v1621 = vpack.c.b16 %v1449, %v1445
        %v1622 = vpack.c.b16 %v1450, %v1446
        %v1623 = vpack.c.b16 %v1451, %v1447
        %v1624 = vpack.c.b16 %v1452, %v1448
        %v1625 = vpack.c.b16 %v1457, %v1453
        %v1626 = vpack.c.b16 %v1458, %v1454
        %v1627 = vpack.c.b16 %v1459, %v1455
        %v1628 = vpack.c.b16 %v1460, %v1456
        %v1629 = vpack.c.b16 %v1465, %v1461
        %v1630 = vpack.c.b16 %v1466, %v1462
        %v1631 = vpack.c.b16 %v1467, %v1463
        %v1632 = vpack.c.b16 %v1468, %v1464
        %v1633 = vpack.c.b16 %v1473, %v1469
        %v1634 = vpack.c.b16 %v1474, %v1470
        %v1635 = vpack.c.b16 %v1475, %v1471
        %v1636 = vpack.c.b16 %v1476, %v1472
        %v1637 = vpack.c.b16 %v1481, %v1477
        %v1638 = vpack.c.b16 %v1482, %v1478
        %v1639 = vpack.c.b16 %v1483, %v1479
        %v1640 = vpack.c.b16 %v1484, %v1480
        %v1641 = vpack.c.b16 %v1489, %v1485
        %v1642 = vpack.c.b16 %v1490, %v1486
        %v1643 = vpack.c.b16 %v1491, %v1487
        %v1644 = vpack.c.b16 %v1492, %v1488
        %v1645 = vpack.c.b16 %v1497, %v1493
        %v1646 = vpack.c.b16 %v1498, %v1494
        %v1647 = vpack.c.b16 %v1499, %v1495
        %v1648 = vpack.c.b16 %v1500, %v1496
        %v1649 = vpack.c.b16 %v1505, %v1501
        %v1650 = vpack.c.b16 %v1506, %v1502
        %v1651 = vpack.c.b16 %v1507, %v1503
        %v1652 = vpack.c.b16 %v1508, %v1504
        %v1653 = vpack.c.b16 %v1513, %v1509
        %v1654 = vpack.c.b16 %v1514, %v1510
        %v1655 = vpack.c.b16 %v1515, %v1511
        %v1656 = vpack.c.b16 %v1516, %v1512
        %v1657 = vpack.c.b16 %v1521, %v1517
        %v1658 = vpack.c.b16 %v1522, %v1518
        %v1659 = vpack.c.b16 %v1523, %v1519
        %v1660 = vpack.c.b16 %v1524, %v1520
        %v1661 = vpack.c.b16 %v1529, %v1525
        %v1662 = vpack.c.b16 %v1530, %v1526
        %v1663 = vpack.c.b16 %v1531, %v1527
        %v1664 = vpack.c.b16 %v1532, %v1528
        %v1665 = vpack.c.b16 %v1537, %v1533
        %v1666 = vpack.c.b16 %v1538, %v1534
        %v1667 = vpack.c.b16 %v1539, %v1535
        %v1668 = vpack.c.b16 %v1540, %v1536
        %1797 = vmatpush.bf16.msra.mxu0 %v1569
        %1798 = vmatpush.bf16.msra.mxu0 %v1565
        %1799 = vmatpush.bf16.msra.mxu0 %v1561
        %1800 = vmatpush.bf16.msra.mxu0 %v1557
        %1801 = vmatpush.bf16.msra.mxu0 %v1553
        %1802 = vmatpush.bf16.msra.mxu0 %v1549
        %1803 = vmatpush.bf16.msra.mxu0 %v1545
        %1804 = vmatpush.bf16.msra.mxu0 %v1541
        %1805 = vmatmul.bf16.gmra.mxu0 %v1015
        %v1806 = vpop.f32.mrf.mxu0
        %v1807 = vadd.f32 %v1149, %v1806
        %v1808 = vpop.f32.mrf.mxu0
        %1809 = vdwg.mxu0
        %1810 = vmatpush.bf16.msra.mxu0 %v1601
        %1811 = vmatpush.bf16.msra.mxu0 %v1597
        %1812 = vmatpush.bf16.msra.mxu0 %v1593
        %1813 = vmatpush.bf16.msra.mxu0 %v1589
        %1814 = vmatpush.bf16.msra.mxu0 %v1585
        %1815 = vmatpush.bf16.msra.mxu0 %v1581
        %1816 = vmatpush.bf16.msra.mxu0 %v1577
        %1817 = vmatpush.bf16.msra.mxu0 %v1573
        %1818 = vmatmul.bf16.gmra.mxu0 %v1016
        %v1819 = vpop.f32.mrf.mxu0
        %v1820 = vadd.f32 %v1807, %v1819
        %v1821 = vpop.f32.mrf.mxu0
        %1822 = vdwg.mxu0
        %1823 = vmatpush.bf16.msra.mxu0 %v1633
        %1824 = vmatpush.bf16.msra.mxu0 %v1629
        %1825 = vmatpush.bf16.msra.mxu0 %v1625
        %1826 = vmatpush.bf16.msra.mxu0 %v1621
        %1827 = vmatpush.bf16.msra.mxu0 %v1617
        %1828 = vmatpush.bf16.msra.mxu0 %v1613
        %1829 = vmatpush.bf16.msra.mxu0 %v1609
        %1830 = vmatpush.bf16.msra.mxu0 %v1605
        %1831 = vmatmul.bf16.gmra.mxu0 %v1017
        %v1832 = vpop.f32.mrf.mxu0
        %v1833 = vadd.f32 %v1820, %v1832
        %v1834 = vpop.f32.mrf.mxu0
        %1835 = vdwg.mxu0
        %1836 = vmatpush.bf16.msra.mxu0 %v1665
        %1837 = vmatpush.bf16.msra.mxu0 %v1661
        %1838 = vmatpush.bf16.msra.mxu0 %v1657
        %1839 = vmatpush.bf16.msra.mxu0 %v1653
        %1840 = vmatpush.bf16.msra.mxu0 %v1649
        %1841 = vmatpush.bf16.msra.mxu0 %v1645
        %1842 = vmatpush.bf16.msra.mxu0 %v1641
        %1843 = vmatpush.bf16.msra.mxu0 %v1637
        %1844 = vmatmul.bf16.gmra.mxu0 %v1018
        %v1845 = vpop.f32.mrf.mxu0
        %v1846 = vadd.f32 %v1833, %v1845
        %v1847 = vpop.f32.mrf.mxu0
        %1848 = vdwg.mxu0
        %1849 = vmatpush.bf16.msra.mxu0 %v1570
        %1850 = vmatpush.bf16.msra.mxu0 %v1566
        %1851 = vmatpush.bf16.msra.mxu0 %v1562
        %1852 = vmatpush.bf16.msra.mxu0 %v1558
        %1853 = vmatpush.bf16.msra.mxu0 %v1554
        %1854 = vmatpush.bf16.msra.mxu0 %v1550
        %1855 = vmatpush.bf16.msra.mxu0 %v1546
        %1856 = vmatpush.bf16.msra.mxu0 %v1542
        %1857 = vmatmul.bf16.gmra.mxu0 %v1015
        %v1858 = vpop.f32.mrf.mxu0
        %v1859 = vadd.f32 %v1150, %v1858
        %v1860 = vpop.f32.mrf.mxu0
        %1861 = vdwg.mxu0
        %1862 = vmatpush.bf16.msra.mxu0 %v1602
        %1863 = vmatpush.bf16.msra.mxu0 %v1598
        %1864 = vmatpush.bf16.msra.mxu0 %v1594
        %1865 = vmatpush.bf16.msra.mxu0 %v1590
        %1866 = vmatpush.bf16.msra.mxu0 %v1586
        %1867 = vmatpush.bf16.msra.mxu0 %v1582
        %1868 = vmatpush.bf16.msra.mxu0 %v1578
        %1869 = vmatpush.bf16.msra.mxu0 %v1574
        %1870 = vmatmul.bf16.gmra.mxu0 %v1016
        %v1871 = vpop.f32.mrf.mxu0
        %v1872 = vadd.f32 %v1859, %v1871
        %v1873 = vpop.f32.mrf.mxu0
        %1874 = vdwg.mxu0
        %1875 = vmatpush.bf16.msra.mxu0 %v1634
        %1876 = vmatpush.bf16.msra.mxu0 %v1630
        %1877 = vmatpush.bf16.msra.mxu0 %v1626
        %1878 = vmatpush.bf16.msra.mxu0 %v1622
        %1879 = vmatpush.bf16.msra.mxu0 %v1618
        %1880 = vmatpush.bf16.msra.mxu0 %v1614
        %1881 = vmatpush.bf16.msra.mxu0 %v1610
        %1882 = vmatpush.bf16.msra.mxu0 %v1606
        %1883 = vmatmul.bf16.gmra.mxu0 %v1017
        %v1884 = vpop.f32.mrf.mxu0
        %v1885 = vadd.f32 %v1872, %v1884
        %v1886 = vpop.f32.mrf.mxu0
        %1887 = vdwg.mxu0
        %1888 = vmatpush.bf16.msra.mxu0 %v1666
        %1889 = vmatpush.bf16.msra.mxu0 %v1662
        %1890 = vmatpush.bf16.msra.mxu0 %v1658
        %1891 = vmatpush.bf16.msra.mxu0 %v1654
        %1892 = vmatpush.bf16.msra.mxu0 %v1650
        %1893 = vmatpush.bf16.msra.mxu0 %v1646
        %1894 = vmatpush.bf16.msra.mxu0 %v1642
        %1895 = vmatpush.bf16.msra.mxu0 %v1638
        %1896 = vmatmul.bf16.gmra.mxu0 %v1018
        %v1897 = vpop.f32.mrf.mxu0
        %v1898 = vadd.f32 %v1885, %v1897
        %v1899 = vpop.f32.mrf.mxu0
        %1900 = vdwg.mxu0
        %1901 = vmatpush.bf16.msra.mxu0 %v1571
        %1902 = vmatpush.bf16.msra.mxu0 %v1567
        %1903 = vmatpush.bf16.msra.mxu0 %v1563
        %1904 = vmatpush.bf16.msra.mxu0 %v1559
        %1905 = vmatpush.bf16.msra.mxu0 %v1555
        %1906 = vmatpush.bf16.msra.mxu0 %v1551
        %1907 = vmatpush.bf16.msra.mxu0 %v1547
        %1908 = vmatpush.bf16.msra.mxu0 %v1543
        %1909 = vmatmul.bf16.gmra.mxu0 %v1015
        %v1910 = vpop.f32.mrf.mxu0
        %v1911 = vadd.f32 %v1151, %v1910
        %v1912 = vpop.f32.mrf.mxu0
        %1913 = vdwg.mxu0
        %1914 = vmatpush.bf16.msra.mxu0 %v1603
        %1915 = vmatpush.bf16.msra.mxu0 %v1599
        %1916 = vmatpush.bf16.msra.mxu0 %v1595
        %1917 = vmatpush.bf16.msra.mxu0 %v1591
        %1918 = vmatpush.bf16.msra.mxu0 %v1587
        %1919 = vmatpush.bf16.msra.mxu0 %v1583
        %1920 = vmatpush.bf16.msra.mxu0 %v1579
        %1921 = vmatpush.bf16.msra.mxu0 %v1575
        %1922 = vmatmul.bf16.gmra.mxu0 %v1016
        %v1923 = vpop.f32.mrf.mxu0
        %v1924 = vadd.f32 %v1911, %v1923
        %v1925 = vpop.f32.mrf.mxu0
        %1926 = vdwg.mxu0
        %1927 = vmatpush.bf16.msra.mxu0 %v1635
        %1928 = vmatpush.bf16.msra.mxu0 %v1631
        %1929 = vmatpush.bf16.msra.mxu0 %v1627
        %1930 = vmatpush.bf16.msra.mxu0 %v1623
        %1931 = vmatpush.bf16.msra.mxu0 %v1619
        %1932 = vmatpush.bf16.msra.mxu0 %v1615
        %1933 = vmatpush.bf16.msra.mxu0 %v1611
        %1934 = vmatpush.bf16.msra.mxu0 %v1607
        %1935 = vmatmul.bf16.gmra.mxu0 %v1017
        %v1936 = vpop.f32.mrf.mxu0
        %v1937 = vadd.f32 %v1924, %v1936
        %v1938 = vpop.f32.mrf.mxu0
        %1939 = vdwg.mxu0
        %1940 = vmatpush.bf16.msra.mxu0 %v1667
        %1941 = vmatpush.bf16.msra.mxu0 %v1663
        %1942 = vmatpush.bf16.msra.mxu0 %v1659
        %1943 = vmatpush.bf16.msra.mxu0 %v1655
        %1944 = vmatpush.bf16.msra.mxu0 %v1651
        %1945 = vmatpush.bf16.msra.mxu0 %v1647
        %1946 = vmatpush.bf16.msra.mxu0 %v1643
        %1947 = vmatpush.bf16.msra.mxu0 %v1639
        %1948 = vmatmul.bf16.gmra.mxu0 %v1018
        %v1949 = vpop.f32.mrf.mxu0
        %v1950 = vadd.f32 %v1937, %v1949
        %v1951 = vpop.f32.mrf.mxu0
        %1952 = vdwg.mxu0
        %1953 = vmatpush.bf16.msra.mxu0 %v1572
        %1954 = vmatpush.bf16.msra.mxu0 %v1568
        %1955 = vmatpush.bf16.msra.mxu0 %v1564
        %1956 = vmatpush.bf16.msra.mxu0 %v1560
        %1957 = vmatpush.bf16.msra.mxu0 %v1556
        %1958 = vmatpush.bf16.msra.mxu0 %v1552
        %1959 = vmatpush.bf16.msra.mxu0 %v1548
        %1960 = vmatpush.bf16.msra.mxu0 %v1544
        %1961 = vmatmul.bf16.gmra.mxu0 %v1015
        %v1962 = vpop.f32.mrf.mxu0
        %v1963 = vadd.f32 %v1152, %v1962
        %v1964 = vpop.f32.mrf.mxu0
        %1965 = vdwg.mxu0
        %1966 = vmatpush.bf16.msra.mxu0 %v1604
        %1967 = vmatpush.bf16.msra.mxu0 %v1600
        %1968 = vmatpush.bf16.msra.mxu0 %v1596
        %1969 = vmatpush.bf16.msra.mxu0 %v1592
        %1970 = vmatpush.bf16.msra.mxu0 %v1588
        %1971 = vmatpush.bf16.msra.mxu0 %v1584
        %1972 = vmatpush.bf16.msra.mxu0 %v1580
        %1973 = vmatpush.bf16.msra.mxu0 %v1576
        %1974 = vmatmul.bf16.gmra.mxu0 %v1016
        %v1975 = vpop.f32.mrf.mxu0
        %v1976 = vadd.f32 %v1963, %v1975
        %v1977 = vpop.f32.mrf.mxu0
        %1978 = vdwg.mxu0
        %1979 = vmatpush.bf16.msra.mxu0 %v1636
        %1980 = vmatpush.bf16.msra.mxu0 %v1632
        %1981 = vmatpush.bf16.msra.mxu0 %v1628
        %1982 = vmatpush.bf16.msra.mxu0 %v1624
        %1983 = vmatpush.bf16.msra.mxu0 %v1620
        %1984 = vmatpush.bf16.msra.mxu0 %v1616
        %1985 = vmatpush.bf16.msra.mxu0 %v1612
        %1986 = vmatpush.bf16.msra.mxu0 %v1608
        %1987 = vmatmul.bf16.gmra.mxu0 %v1017
        %v1988 = vpop.f32.mrf.mxu0
        %v1989 = vadd.f32 %v1976, %v1988
        %v1990 = vpop.f32.mrf.mxu0
        %1991 = vdwg.mxu0
        %1992 = vmatpush.bf16.msra.mxu0 %v1668
        %1993 = vmatpush.bf16.msra.mxu0 %v1664
        %1994 = vmatpush.bf16.msra.mxu0 %v1660
        %1995 = vmatpush.bf16.msra.mxu0 %v1656
        %1996 = vmatpush.bf16.msra.mxu0 %v1652
        %1997 = vmatpush.bf16.msra.mxu0 %v1648
        %1998 = vmatpush.bf16.msra.mxu0 %v1644
        %1999 = vmatpush.bf16.msra.mxu0 %v1640
        %2000 = vmatmul.bf16.gmra.mxu0 %v1018
        %v2001 = vpop.f32.mrf.mxu0
        %v2002 = vadd.f32 %v1989, %v2001
        %v2003 = vpop.f32.mrf.mxu0
        %2004 = vdwg.mxu0
        %v2005 = vmax.f32 %v1846, 0.0
        %v2006 = vmax.f32 %v1898, 0.0
        %v2007 = vmax.f32 %v1950, 0.0
        %v2008 = vmax.f32 %v2002, 0.0
        %v2009 = vpack.c.bf16 %v2005, %v2005
        %v2010 = vpack.c.bf16 %v2006, %v2006
        %v2011 = vpack.c.bf16 %v2007, %v2007
        %v2012 = vpack.c.bf16 %v2008, %v2008
        %v2013 = vld [vmem:[%s5] sm:$0xf]
        %v2014 = vld [vmem:[%s5 + $0x4] sm:$0xf]
        %v2015 = vld [vmem:[%s5 + $0x8] sm:$0xf]
        %v2016 = vld [vmem:[%s5 + $0xc] sm:$0xf]
        %v2017 = vld [vmem:[%s5 + $0x10] sm:$0xf]
        %v2018 = vld [vmem:[%s5 + $0x14] sm:$0xf]
        %v2019 = vld [vmem:[%s5 + $0x18] sm:$0xf]
        %v2020 = vld [vmem:[%s5 + $0x1c] sm:$0xf]
        %v2021 = vld [vmem:[%s5 + $0x20] sm:$0xf]
        %v2022 = vld [vmem:[%s5 + $0x24] sm:$0xf]
        %v2023 = vld [vmem:[%s5 + $0x28] sm:$0xf]
        %v2024 = vld [vmem:[%s5 + $0x2c] sm:$0xf]
        %v2025 = vld [vmem:[%s5 + $0x30] sm:$0xf]
        %v2026 = vld [vmem:[%s5 + $0x34] sm:$0xf]
        %v2027 = vld [vmem:[%s5 + $0x38] sm:$0xf]
        %v2028 = vld [vmem:[%s5 + $0x3c] sm:$0xf]
        %v2029 = vld [vmem:[%s5 + $0x40] sm:$0xf]
        %v2030 = vld [vmem:[%s5 + $0x44] sm:$0xf]
        %v2031 = vld [vmem:[%s5 + $0x48] sm:$0xf]
        %v2032 = vld [vmem:[%s5 + $0x4c] sm:$0xf]
        %v2033 = vld [vmem:[%s5 + $0x50] sm:$0xf]
        %v2034 = vld [vmem:[%s5 + $0x54] sm:$0xf]
        %v2035 = vld [vmem:[%s5 + $0x58] sm:$0xf]
        %v2036 = vld [vmem:[%s5 + $0x5c] sm:$0xf]
        %v2037 = vld [vmem:[%s5 + $0x60] sm:$0xf]
        %v2038 = vld [vmem:[%s5 + $0x64] sm:$0xf]
        %v2039 = vld [vmem:[%s5 + $0x68] sm:$0xf]
        %v2040 = vld [vmem:[%s5 + $0x6c] sm:$0xf]
        %v2041 = vld [vmem:[%s5 + $0x70] sm:$0xf]
        %v2042 = vld [vmem:[%s5 + $0x74] sm:$0xf]
        %v2043 = vld [vmem:[%s5 + $0x78] sm:$0xf]
        %v2044 = vld [vmem:[%s5 + $0x7c] sm:$0xf]
        %v2045 = vld [vmem:[%s5 + $0x80] sm:$0xf]
        %v2046 = vld [vmem:[%s5 + $0x84] sm:$0xf]
        %v2047 = vld [vmem:[%s5 + $0x88] sm:$0xf]
        %v2048 = vld [vmem:[%s5 + $0x8c] sm:$0xf]
        %v2049 = vld [vmem:[%s5 + $0x90] sm:$0xf]
        %v2050 = vld [vmem:[%s5 + $0x94] sm:$0xf]
        %v2051 = vld [vmem:[%s5 + $0x98] sm:$0xf]
        %v2052 = vld [vmem:[%s5 + $0x9c] sm:$0xf]
        %v2053 = vld [vmem:[%s5 + $0xa0] sm:$0xf]
        %v2054 = vld [vmem:[%s5 + $0xa4] sm:$0xf]
        %v2055 = vld [vmem:[%s5 + $0xa8] sm:$0xf]
        %v2056 = vld [vmem:[%s5 + $0xac] sm:$0xf]
        %v2057 = vld [vmem:[%s5 + $0xb0] sm:$0xf]
        %v2058 = vld [vmem:[%s5 + $0xb4] sm:$0xf]
        %v2059 = vld [vmem:[%s5 + $0xb8] sm:$0xf]
        %v2060 = vld [vmem:[%s5 + $0xbc] sm:$0xf]
        %v2061 = vld [vmem:[%s5 + $0xc0] sm:$0xf]
        %v2062 = vld [vmem:[%s5 + $0xc4] sm:$0xf]
        %v2063 = vld [vmem:[%s5 + $0xc8] sm:$0xf]
        %v2064 = vld [vmem:[%s5 + $0xcc] sm:$0xf]
        %v2065 = vld [vmem:[%s5 + $0xd0] sm:$0xf]
        %v2066 = vld [vmem:[%s5 + $0xd4] sm:$0xf]
        %v2067 = vld [vmem:[%s5 + $0xd8] sm:$0xf]
        %v2068 = vld [vmem:[%s5 + $0xdc] sm:$0xf]
        %v2069 = vld [vmem:[%s5 + $0xe0] sm:$0xf]
        %v2070 = vld [vmem:[%s5 + $0xe4] sm:$0xf]
        %v2071 = vld [vmem:[%s5 + $0xe8] sm:$0xf]
        %v2072 = vld [vmem:[%s5 + $0xec] sm:$0xf]
        %v2073 = vld [vmem:[%s5 + $0xf0] sm:$0xf]
        %v2074 = vld [vmem:[%s5 + $0xf4] sm:$0xf]
        %v2075 = vld [vmem:[%s5 + $0xf8] sm:$0xf]
        %v2076 = vld [vmem:[%s5 + $0xfc] sm:$0xf]
        %v2077 = vld [vmem:[%s6] sm:$0x1]
        %v2079 = vperm.slane %v2077, 0
        %v2145 = vunpack.c.l.b16 %v2013
        %v2146 = vunpack.c.l.b16 %v2014
        %v2147 = vunpack.c.l.b16 %v2015
        %v2148 = vunpack.c.l.b16 %v2016
        %v2149 = vunpack.c.l.b16 %v2017
        %v2150 = vunpack.c.l.b16 %v2018
        %v2151 = vunpack.c.l.b16 %v2019
        %v2152 = vunpack.c.l.b16 %v2020
        %v2153 = vunpack.c.l.b16 %v2021
        %v2154 = vunpack.c.l.b16 %v2022
        %v2155 = vunpack.c.l.b16 %v2023
        %v2156 = vunpack.c.l.b16 %v2024
        %v2157 = vunpack.c.l.b16 %v2025
        %v2158 = vunpack.c.l.b16 %v2026
        %v2159 = vunpack.c.l.b16 %v2027
        %v2160 = vunpack.c.l.b16 %v2028
        %v2161 = vunpack.c.l.b16 %v2029
        %v2162 = vunpack.c.l.b16 %v2030
        %v2163 = vunpack.c.l.b16 %v2031
        %v2164 = vunpack.c.l.b16 %v2032
        %v2165 = vunpack.c.l.b16 %v2033
        %v2166 = vunpack.c.l.b16 %v2034
        %v2167 = vunpack.c.l.b16 %v2035
        %v2168 = vunpack.c.l.b16 %v2036
        %v2169 = vunpack.c.l.b16 %v2037
        %v2170 = vunpack.c.l.b16 %v2038
        %v2171 = vunpack.c.l.b16 %v2039
        %v2172 = vunpack.c.l.b16 %v2040
        %v2173 = vunpack.c.l.b16 %v2041
        %v2174 = vunpack.c.l.b16 %v2042
        %v2175 = vunpack.c.l.b16 %v2043
        %v2176 = vunpack.c.l.b16 %v2044
        %v2177 = vunpack.c.l.b16 %v2045
        %v2178 = vunpack.c.l.b16 %v2046
        %v2179 = vunpack.c.l.b16 %v2047
        %v2180 = vunpack.c.l.b16 %v2048
        %v2181 = vunpack.c.l.b16 %v2049
        %v2182 = vunpack.c.l.b16 %v2050
        %v2183 = vunpack.c.l.b16 %v2051
        %v2184 = vunpack.c.l.b16 %v2052
        %v2185 = vunpack.c.l.b16 %v2053
        %v2186 = vunpack.c.l.b16 %v2054
        %v2187 = vunpack.c.l.b16 %v2055
        %v2188 = vunpack.c.l.b16 %v2056
        %v2189 = vunpack.c.l.b16 %v2057
        %v2190 = vunpack.c.l.b16 %v2058
        %v2191 = vunpack.c.l.b16 %v2059
        %v2192 = vunpack.c.l.b16 %v2060
        %v2193 = vunpack.c.l.b16 %v2061
        %v2194 = vunpack.c.l.b16 %v2062
        %v2195 = vunpack.c.l.b16 %v2063
        %v2196 = vunpack.c.l.b16 %v2064
        %v2197 = vunpack.c.l.b16 %v2065
        %v2198 = vunpack.c.l.b16 %v2066
        %v2199 = vunpack.c.l.b16 %v2067
        %v2200 = vunpack.c.l.b16 %v2068
        %v2201 = vunpack.c.l.b16 %v2069
        %v2202 = vunpack.c.l.b16 %v2070
        %v2203 = vunpack.c.l.b16 %v2071
        %v2204 = vunpack.c.l.b16 %v2072
        %v2205 = vunpack.c.l.b16 %v2073
        %v2206 = vunpack.c.l.b16 %v2074
        %v2207 = vunpack.c.l.b16 %v2075
        %v2208 = vunpack.c.l.b16 %v2076
        %v2209 = vpack.c.b16 %v2146, %v2145
        %v2210 = vpack.c.b16 %v2148, %v2147
        %v2211 = vpack.c.b16 %v2150, %v2149
        %v2212 = vpack.c.b16 %v2152, %v2151
        %v2213 = vpack.c.b16 %v2154, %v2153
        %v2214 = vpack.c.b16 %v2156, %v2155
        %v2215 = vpack.c.b16 %v2158, %v2157
        %v2216 = vpack.c.b16 %v2160, %v2159
        %v2217 = vpack.c.b16 %v2162, %v2161
        %v2218 = vpack.c.b16 %v2164, %v2163
        %v2219 = vpack.c.b16 %v2166, %v2165
        %v2220 = vpack.c.b16 %v2168, %v2167
        %v2221 = vpack.c.b16 %v2170, %v2169
        %v2222 = vpack.c.b16 %v2172, %v2171
        %v2223 = vpack.c.b16 %v2174, %v2173
        %v2224 = vpack.c.b16 %v2176, %v2175
        %v2225 = vpack.c.b16 %v2178, %v2177
        %v2226 = vpack.c.b16 %v2180, %v2179
        %v2227 = vpack.c.b16 %v2182, %v2181
        %v2228 = vpack.c.b16 %v2184, %v2183
        %v2229 = vpack.c.b16 %v2186, %v2185
        %v2230 = vpack.c.b16 %v2188, %v2187
        %v2231 = vpack.c.b16 %v2190, %v2189
        %v2232 = vpack.c.b16 %v2192, %v2191
        %v2233 = vpack.c.b16 %v2194, %v2193
        %v2234 = vpack.c.b16 %v2196, %v2195
        %v2235 = vpack.c.b16 %v2198, %v2197
        %v2236 = vpack.c.b16 %v2200, %v2199
        %v2237 = vpack.c.b16 %v2202, %v2201
        %v2238 = vpack.c.b16 %v2204, %v2203
        %v2239 = vpack.c.b16 %v2206, %v2205
        %v2240 = vpack.c.b16 %v2208, %v2207
        %2273 = vmatpush.bf16.msra.mxu0 %v2216
        %2274 = vmatpush.bf16.msra.mxu0 %v2215
        %2275 = vmatpush.bf16.msra.mxu0 %v2214
        %2276 = vmatpush.bf16.msra.mxu0 %v2213
        %2277 = vmatpush.bf16.msra.mxu0 %v2212
        %2278 = vmatpush.bf16.msra.mxu0 %v2211
        %2279 = vmatpush.bf16.msra.mxu0 %v2210
        %2280 = vmatpush.bf16.msra.mxu0 %v2209
        %2281 = vmatmul.bf16.gmra.mxu0 %v2009
        %v2282 = vpop.f32.mrf.mxu0
        %v2283 = vadd.f32 %v2079, %v2282
        %v2284 = vpop.f32.mrf.mxu0
        %2285 = vdwg.mxu0
        %2286 = vmatpush.bf16.msra.mxu0 %v2224
        %2287 = vmatpush.bf16.msra.mxu0 %v2223
        %2288 = vmatpush.bf16.msra.mxu0 %v2222
        %2289 = vmatpush.bf16.msra.mxu0 %v2221
        %2290 = vmatpush.bf16.msra.mxu0 %v2220
        %2291 = vmatpush.bf16.msra.mxu0 %v2219
        %2292 = vmatpush.bf16.msra.mxu0 %v2218
        %2293 = vmatpush.bf16.msra.mxu0 %v2217
        %2294 = vmatmul.bf16.gmra.mxu0 %v2010
        %v2295 = vpop.f32.mrf.mxu0
        %v2296 = vadd.f32 %v2283, %v2295
        %v2297 = vpop.f32.mrf.mxu0
        %2298 = vdwg.mxu0
        %2299 = vmatpush.bf16.msra.mxu0 %v2232
        %2300 = vmatpush.bf16.msra.mxu0 %v2231
        %2301 = vmatpush.bf16.msra.mxu0 %v2230
        %2302 = vmatpush.bf16.msra.mxu0 %v2229
        %2303 = vmatpush.bf16.msra.mxu0 %v2228
        %2304 = vmatpush.bf16.msra.mxu0 %v2227
        %2305 = vmatpush.bf16.msra.mxu0 %v2226
        %2306 = vmatpush.bf16.msra.mxu0 %v2225
        %2307 = vmatmul.bf16.gmra.mxu0 %v2011
        %v2308 = vpop.f32.mrf.mxu0
        %v2309 = vadd.f32 %v2296, %v2308
        %v2310 = vpop.f32.mrf.mxu0
        %2311 = vdwg.mxu0
        %2312 = vmatpush.bf16.msra.mxu0 %v2240
        %2313 = vmatpush.bf16.msra.mxu0 %v2239
        %2314 = vmatpush.bf16.msra.mxu0 %v2238
        %2315 = vmatpush.bf16.msra.mxu0 %v2237
        %2316 = vmatpush.bf16.msra.mxu0 %v2236
        %2317 = vmatpush.bf16.msra.mxu0 %v2235
        %2318 = vmatpush.bf16.msra.mxu0 %v2234
        %2319 = vmatpush.bf16.msra.mxu0 %v2233
        %2320 = vmatmul.bf16.gmra.mxu0 %v2012
        %v2321 = vpop.f32.mrf.mxu0
        %v2322 = vadd.f32 %v2309, %v2321
        %v2323 = vpop.f32.mrf.mxu0
        %2324 = vdwg.mxu0
        %2325 = vst [vmem:[%s7] sm:$0xf] %v2322
      $region56: #{siamese_forward.3} parent=47 // pred_fallthru
        _
      // Predicated region
      $region57: #{siamese_forward.3} parent=47 // pred_check
        %p2326 = pneg %p188
      $region58: #{siamese_forward.3} parent=47 // pred_check_branch
        %2328 = sbr.rel (%p2326) target = $region60
      $region59: #{siamese_forward.3} parent=47 // pred_region
        _
      $region60: #{siamese_forward.3} parent=47 // pred_fallthru
        _
      // Predicated region
      $region61: #{siamese_forward.3} parent=47 // pred_check
        %p2329 = pneg %p188
      $region62: #{siamese_forward.3} parent=47 // pred_check_branch
        %2331 = sbr.rel (%p2329) target = $region64
      $region63: #{siamese_forward.3} parent=47 // pred_region
        _
      $region64: #{siamese_forward.3} parent=47 // pred_fallthru
        _
    $region48: #{siamese_forward.3} parent=5 // pred_fallthru
      _
    %p2332 = scmp.le.s32.totalorder 2, %s13
    // Predicated region
    $region65: #{siamese_forward.3} parent=5 // pred_check
      %p2333 = pneg %p2332
    $region66: #{siamese_forward.3} parent=5 // pred_check_branch
      %2335 = sbr.rel (%p2333) target = $region68
    $region67: #{siamese_forward.3} parent=5 // pred_region
      %s2336 = ssub.s32 %s13, 2
    $region68: #{siamese_forward.3} parent=5 // pred_fallthru
      _
  $region6: #{siamese_forward.3} parent=0 // loop_footer
    %s17 = sadd.s32 1, %s13
  $region7: #{siamese_forward.3} parent=0 // loop_footer_branch
    %12 = sbr.rel target = $region3
  $region8: #{siamese_forward.3} parent=0 // loop_exit
    _

// kernel: siamese_forward.2
$region0: #{siamese_forward.2}
  #allocation0 [shape = 'u32[]', space=smem, size = 0x4, offset = 0x4, fixed_abs, tag = 'smem constant byte address 0x4 - core index']
  #allocation1 [shape = 'u32[72,128]{1,0:T(1,128)}', space=vmem, size = 0x9000, scoped, tag = 'internal scratch']
  %s0 = inlined_call_operand.vmem [shape: f32[1,1296], index: 0, kind: input, shape index: {}]
  %s1 = inlined_call_operand.vmem [shape: s32[1,1296], index: 1, kind: input, shape index: {}]
  %s2 = inlined_call_operand.vmem [shape: s32[1,1296], index: 2, kind: input, shape index: {}]
  %s3 = inlined_call_operand.vmem [shape: f32[1,1296], index: 3, kind: input, shape index: {}]
  %s4 = inlined_call_operand.vmem [shape: f32[1,1296], index: 4, kind: input, shape index: {}]
  %s5 = inlined_call_operand.hbm [shape: bf16[4,9], index: 5, kind: input, shape index: {}]
  %s6 = inlined_call_operand.vmem [shape: f32[4,1], index: 6, kind: input, shape index: {}]
  %s7 = inlined_call_operand.vmem [shape: f32[4,1], index: 7, kind: input, shape index: {}]
  %s8 = inlined_call_operand.vmem [shape: f32[4,1], index: 8, kind: input, shape index: {}]
  %s9 = inlined_call_operand.hbm [shape: bf16[8,36], index: 9, kind: input, shape index: {}]
  %s10 = inlined_call_operand.vmem [shape: f32[8,1], index: 10, kind: input, shape index: {}]
  %s11 = inlined_call_operand.vmem [shape: f32[8,1], index: 11, kind: input, shape index: {}]
  %s12 = inlined_call_operand.vmem [shape: f32[8,1], index: 12, kind: input, shape index: {}]
  %s13 = inlined_call_operand.hbm [shape: bf16[8,72], index: 13, kind: input, shape index: {}]
  %s14 = inlined_call_operand.vmem [shape: f32[8,1], index: 14, kind: input, shape index: {}]
  %s15 = inlined_call_operand.vmem [shape: f32[8,1], index: 15, kind: input, shape index: {}]
  %s16 = inlined_call_operand.vmem [shape: f32[8,1], index: 16, kind: input, shape index: {}]
  %s17 = inlined_call_operand.vmem [shape: bf16[8,1296], index: 17, kind: output, shape index: {}]
  %s18 = sld [smem:[#allocation0]]
  $region90: #{siamese_forward.2} parent=0
    _
  %s20 = ssub.s32 1, %s18
  %s21 = scalar_select 0, %s20, %s18
  $region1: #{siamese_forward.2} parent=0
    #allocation2 [shape = 'u8[1024]{0}', space=vmem, size = 0x400, scoped, tag = 'input window, operand 5, single buffered']
    #allocation3 [shape = 's32[1]{0}', space=sflag, size = 0x4, scoped, tag = 'scoped memory for siamese_forward.2']
    #allocation4 [shape = 'u8[2048]{0}', space=vmem, size = 0x800, scoped, tag = 'input window, operand 9, single buffered']
    #allocation5 [shape = 's32[1]{0}', space=sflag, size = 0x4, scoped, tag = 'scoped memory for siamese_forward.2']
    #allocation6 [shape = 'u8[2048]{0}', space=vmem, size = 0x800, scoped, tag = 'input window, operand 13, single buffered']
    %22 = vsyncpa [#allocation3], 0
    %23 = vsyncpa [#allocation5], 0
    // Predicated region
    $region2: #{siamese_forward.2} parent=1 // pred_check
      _
    $region3: #{siamese_forward.2} parent=1 // pred_check_branch
      %25 = sbr.rel (0) target = $region5
    $region4: #{siamese_forward.2} parent=1 // pred_region
      _
    $region5: #{siamese_forward.2} parent=1 // pred_fallthru
      _
    // Predicated region
    $region6: #{siamese_forward.2} parent=1 // pred_check
      _
    $region7: #{siamese_forward.2} parent=1 // pred_check_branch
      %27 = sbr.rel (0) target = $region9
    $region8: #{siamese_forward.2} parent=1 // pred_region
      _
    $region9: #{siamese_forward.2} parent=1 // pred_fallthru
      _
    // Predicated region
    $region10: #{siamese_forward.2} parent=1 // pred_check
      _
    $region11: #{siamese_forward.2} parent=1 // pred_check_branch
      %29 = sbr.rel (0) target = $region13
    $region12: #{siamese_forward.2} parent=1 // pred_region
      _
    $region13: #{siamese_forward.2} parent=1 // pred_fallthru
      _
    // Predicated region
    $region14: #{siamese_forward.2} parent=1 // pred_check
      _
    $region15: #{siamese_forward.2} parent=1 // pred_check_branch
      %31 = sbr.rel (0) target = $region17
    $region16: #{siamese_forward.2} parent=1 // pred_region
      _
    $region17: #{siamese_forward.2} parent=1 // pred_fallthru
      _
    // Predicated region
    $region18: #{siamese_forward.2} parent=1 // pred_check
      _
    $region19: #{siamese_forward.2} parent=1 // pred_check_branch
      %33 = sbr.rel (0) target = $region21
    $region20: #{siamese_forward.2} parent=1 // pred_region
      _
    $region21: #{siamese_forward.2} parent=1 // pred_fallthru
      _
    // Predicated region
    $region22: #{siamese_forward.2} parent=1 // pred_check
      _
    $region23: #{siamese_forward.2} parent=1 // pred_check_branch
      %35 = sbr.rel (0) target = $region25
    $region24: #{siamese_forward.2} parent=1 // pred_region
      %37 = vsyncadd [#allocation3], 0
      %s39 = sshll.u32 %s5, 4
      %s40 = int_to_ptr.hbm [resolvable:$true] %s39
      %s41 = sshll.u32 [#allocation2], 4
      %s42 = int_to_ptr.vmem [resolvable:$true] %s41
      %44 = dma.hbm_to_vmem [thread:$0]  %s40, 32, %s42, [#allocation3]
    $region25: #{siamese_forward.2} parent=1 // pred_fallthru
      _
    // Predicated region
    $region26: #{siamese_forward.2} parent=1 // pred_check
      _
    $region27: #{siamese_forward.2} parent=1 // pred_check_branch
      %46 = sbr.rel (0) target = $region29
    $region28: #{siamese_forward.2} parent=1 // pred_region
      _
    $region29: #{siamese_forward.2} parent=1 // pred_fallthru
      _
    // Predicated region
    $region30: #{siamese_forward.2} parent=1 // pred_check
      _
    $region31: #{siamese_forward.2} parent=1 // pred_check_branch
      %48 = sbr.rel (0) target = $region33
    $region32: #{siamese_forward.2} parent=1 // pred_region
      _
    $region33: #{siamese_forward.2} parent=1 // pred_fallthru
      _
    // Predicated region
    $region34: #{siamese_forward.2} parent=1 // pred_check
      _
    $region35: #{siamese_forward.2} parent=1 // pred_check_branch
      %50 = sbr.rel (0) target = $region37
    $region36: #{siamese_forward.2} parent=1 // pred_region
      _
    $region37: #{siamese_forward.2} parent=1 // pred_fallthru
      _
    // Predicated region
    $region38: #{siamese_forward.2} parent=1 // pred_check
      _
    $region39: #{siamese_forward.2} parent=1 // pred_check_branch
      %52 = sbr.rel (0) target = $region41
    $region40: #{siamese_forward.2} parent=1 // pred_region
      %54 = vsyncadd [#allocation5], 0
      %s56 = sshll.u32 %s9, 4
      %s57 = int_to_ptr.hbm [resolvable:$true] %s56
      %s58 = sshll.u32 [#allocation4], 4
      %s59 = int_to_ptr.vmem [resolvable:$true] %s58
      %61 = dma.hbm_to_vmem [thread:$0]  %s57, 64, %s59, [#allocation5]
    $region41: #{siamese_forward.2} parent=1 // pred_fallthru
      _
    // Predicated region
    $region42: #{siamese_forward.2} parent=1 // pred_check
      _
    $region43: #{siamese_forward.2} parent=1 // pred_check_branch
      %63 = sbr.rel (0) target = $region45
    $region44: #{siamese_forward.2} parent=1 // pred_region
      _
    $region45: #{siamese_forward.2} parent=1 // pred_fallthru
      _
    // Predicated region
    $region46: #{siamese_forward.2} parent=1 // pred_check
      _
    $region47: #{siamese_forward.2} parent=1 // pred_check_branch
      %65 = sbr.rel (0) target = $region49
    $region48: #{siamese_forward.2} parent=1 // pred_region
      _
    $region49: #{siamese_forward.2} parent=1 // pred_fallthru
      _
    // Predicated region
    $region50: #{siamese_forward.2} parent=1 // pred_check
      _
    $region51: #{siamese_forward.2} parent=1 // pred_check_branch
      %67 = sbr.rel (0) target = $region53
    $region52: #{siamese_forward.2} parent=1 // pred_region
      _
    $region53: #{siamese_forward.2} parent=1 // pred_fallthru
      _
    // Predicated region
    $region54: #{siamese_forward.2} parent=1 // pred_check
      _
    $region55: #{siamese_forward.2} parent=1 // pred_check_branch
      %69 = sbr.rel (0) target = $region57
    $region56: #{siamese_forward.2} parent=1 // pred_region
      %71 = vsyncadd [#allocation5], 0
      %s73 = sshll.u32 %s13, 4
      %s74 = int_to_ptr.hbm [resolvable:$true] %s73
      %s75 = sshll.u32 [#allocation6], 4
      %s76 = int_to_ptr.vmem [resolvable:$true] %s75
      %78 = dma.hbm_to_vmem [thread:$0]  %s74, 64, %s76, [#allocation5]
    $region57: #{siamese_forward.2} parent=1 // pred_fallthru
      _
    // Predicated region
    $region58: #{siamese_forward.2} parent=1 // pred_check
      _
    $region59: #{siamese_forward.2} parent=1 // pred_check_branch
      %80 = sbr.rel (0) target = $region61
    $region60: #{siamese_forward.2} parent=1 // pred_region
      _
    $region61: #{siamese_forward.2} parent=1 // pred_fallthru
      _
    // Predicated region
    $region62: #{siamese_forward.2} parent=1 // pred_check
      _
    $region63: #{siamese_forward.2} parent=1 // pred_check_branch
      %82 = sbr.rel (0) target = $region65
    $region64: #{siamese_forward.2} parent=1 // pred_region
      _
    $region65: #{siamese_forward.2} parent=1 // pred_fallthru
      _
    // Predicated region
    $region66: #{siamese_forward.2} parent=1 // pred_check
      _
    $region67: #{siamese_forward.2} parent=1 // pred_check_branch
      %84 = sbr.rel (0) target = $region69
    $region68: #{siamese_forward.2} parent=1 // pred_region
      _
    $region69: #{siamese_forward.2} parent=1 // pred_fallthru
      _
    // Predicated region
    $region70: #{siamese_forward.2} parent=1 // pred_check
      _
    $region71: #{siamese_forward.2} parent=1 // pred_check_branch
      %86 = sbr.rel (0) target = $region73
    $region72: #{siamese_forward.2} parent=1 // pred_region
      %88 = dma.done [#allocation3], 32
    $region73: #{siamese_forward.2} parent=1 // pred_fallthru
      _
    // Predicated region
    $region74: #{siamese_forward.2} parent=1 // pred_check
      _
    $region75: #{siamese_forward.2} parent=1 // pred_check_branch
      %90 = sbr.rel (0) target = $region77
    $region76: #{siamese_forward.2} parent=1 // pred_region
      %92 = dma.done [#allocation5], 64
    $region77: #{siamese_forward.2} parent=1 // pred_fallthru
      _
    // Predicated region
    $region78: #{siamese_forward.2} parent=1 // pred_check
      _
    $region79: #{siamese_forward.2} parent=1 // pred_check_branch
      %94 = sbr.rel (0) target = $region81
    $region80: #{siamese_forward.2} parent=1 // pred_region
      %96 = dma.done [#allocation5], 64
    $region81: #{siamese_forward.2} parent=1 // pred_fallthru
      _
    %v98 = vld [vmem:[%s1] sm:$0xff]
    %v99 = vld [vmem:[%s1 + $0x8] sm:$0x7]
    %v100 = vld [vmem:[%s2] sm:$0xff]
    %v101 = vld [vmem:[%s2 + $0x8] sm:$0x7]
    %v102 = vld [vmem:[%s3] sm:$0xff]
    %v103 = vld [vmem:[%s3 + $0x8] sm:$0x7]
    %v104 = vld [vmem:[%s4] sm:$0xff]
    %v105 = vld [vmem:[%s4 + $0x8] sm:$0x7]
    %v106 = vld [vmem:[%s0] sm:$0xff]
    %v107 = vld [vmem:[%s0 + $0x8] sm:$0x7]
    %v108 = vld [vmem:[#allocation2] sm:$0x3]
    %v109 = vld [vmem:[%s6] sm:$0xf]
    %v110 = vld [vmem:[%s7] sm:$0xf]
    %v111 = vld [vmem:[%s8] sm:$0xf]
    %v114 = vperm.slane %v106, 0
    %v115 = vperm.slane %v106, 1
    %v116 = vperm.slane %v106, 2
    %v117 = vperm.slane %v106, 3
    %v118 = vperm.slane %v106, 4
    %v119 = vperm.slane %v106, 5
    %v120 = vperm.slane %v106, 6
    %v121 = vperm.slane %v106, 7
    %v122 = vperm.slane %v107, 0
    %v123 = vperm.slane %v107, 1
    %v124 = vperm.slane %v107, 2
    %125 = vrot.lane.b32.xlu0 %v114, 36
    %v126 = vpop.permute.xlu0 %125
    %127 = vrot.lane.b32.xlu0 %v115, 36
    %v128 = vpop.permute.xlu0 %127
    %129 = vrot.lane.b32.xlu0 %v116, 36
    %v130 = vpop.permute.xlu0 %129
    %131 = vrot.lane.b32.xlu0 %v117, 36
    %v132 = vpop.permute.xlu0 %131
    %133 = vrot.lane.b32.xlu0 %v118, 36
    %v134 = vpop.permute.xlu0 %133
    %135 = vrot.lane.b32.xlu0 %v119, 36
    %v136 = vpop.permute.xlu0 %135
    %137 = vrot.lane.b32.xlu0 %v120, 36
    %v138 = vpop.permute.xlu0 %137
    %139 = vrot.lane.b32.xlu0 %v121, 36
    %v140 = vpop.permute.xlu0 %139
    %141 = vrot.lane.b32.xlu0 %v122, 36
    %v142 = vpop.permute.xlu0 %141
    %143 = vrot.lane.b32.xlu0 %v123, 36
    %v144 = vpop.permute.xlu0 %143
    %145 = vrot.lane.b32.xlu0 %v124, 36
    %v146 = vpop.permute.xlu0 %145
    %vm147 = vcmask 293888
    %v148 = vsel %vm147, %v126, %v128
    %v149 = vsel %vm147, %v128, %v130
    %v150 = vsel %vm147, %v130, %v132
    %v151 = vsel %vm147, %v132, %v134
    %v152 = vsel %vm147, %v134, %v136
    %v153 = vsel %vm147, %v136, %v138
    %v154 = vsel %vm147, %v138, %v140
    %v155 = vsel %vm147, %v140, %v142
    %v156 = vsel %vm147, %v142, %v144
    %v157 = vsel %vm147, %v144, %v146
    %v169 = vsel %vm147, 0.0, %v126
    %vm170 = vcmask 424960
    %v171 = vsel %vm170, %v157, 0.0
    %v174 = vrot.slane %v169, 7
    %v175 = vrot.slane %v148, 7
    %v176 = vrot.slane %v149, 7
    %v177 = vrot.slane %v150, 7
    %v178 = vrot.slane %v151, 7
    %v179 = vrot.slane %v152, 7
    %v180 = vrot.slane %v153, 7
    %v181 = vrot.slane %v154, 7
    %v182 = vrot.slane %v155, 7
    %v183 = vrot.slane %v156, 7
    %v184 = vrot.slane %v171, 7
    %185 = vrot.lane.b32.xlu0 %v174, 127
    %v186 = vpop.permute.xlu0 %185
    %187 = vrot.lane.b32.xlu0 %v175, 127
    %v188 = vpop.permute.xlu0 %187
    %189 = vrot.lane.b32.xlu0 %v176, 127
    %v190 = vpop.permute.xlu0 %189
    %191 = vrot.lane.b32.xlu0 %v177, 127
    %v192 = vpop.permute.xlu0 %191
    %193 = vrot.lane.b32.xlu0 %v178, 127
    %v194 = vpop.permute.xlu0 %193
    %195 = vrot.lane.b32.xlu0 %v179, 127
    %v196 = vpop.permute.xlu0 %195
    %197 = vrot.lane.b32.xlu0 %v180, 127
    %v198 = vpop.permute.xlu0 %197
    %199 = vrot.lane.b32.xlu0 %v181, 127
    %v200 = vpop.permute.xlu0 %199
    %201 = vrot.lane.b32.xlu0 %v182, 127
    %v202 = vpop.permute.xlu0 %201
    %203 = vrot.lane.b32.xlu0 %v183, 127
    %v204 = vpop.permute.xlu0 %203
    %205 = vrot.lane.b32.xlu0 %v184, 127
    %v206 = vpop.permute.xlu0 %205
    %vm207 = vcmask 1039360
    %v208 = vsel %vm207, %v186, %v188
    %v209 = vsel %vm207, %v188, %v190
    %v210 = vsel %vm207, %v190, %v192
    %v211 = vsel %vm207, %v192, %v194
    %v212 = vsel %vm207, %v194, %v196
    %v213 = vsel %vm207, %v196, %v198
    %v214 = vsel %vm207, %v198, %v200
    %v215 = vsel %vm207, %v200, %v202
    %v216 = vsel %vm207, %v202, %v204
    %v217 = vsel %vm207, %v204, %v206
    %v229 = vrot.slane %v169, 6
    %v230 = vrot.slane %v148, 6
    %v231 = vrot.slane %v149, 6
    %v232 = vrot.slane %v150, 6
    %v233 = vrot.slane %v151, 6
    %v234 = vrot.slane %v152, 6
    %v235 = vrot.slane %v153, 6
    %v236 = vrot.slane %v154, 6
    %v237 = vrot.slane %v155, 6
    %v238 = vrot.slane %v156, 6
    %v239 = vrot.slane %v171, 6
    %240 = vrot.lane.b32.xlu0 %v229, 126
    %v241 = vpop.permute.xlu0 %240
    %242 = vrot.lane.b32.xlu0 %v230, 126
    %v243 = vpop.permute.xlu0 %242
    %244 = vrot.lane.b32.xlu0 %v231, 126
    %v245 = vpop.permute.xlu0 %244
    %246 = vrot.lane.b32.xlu0 %v232, 126
    %v247 = vpop.permute.xlu0 %246
    %248 = vrot.lane.b32.xlu0 %v233, 126
    %v249 = vpop.permute.xlu0 %248
    %250 = vrot.lane.b32.xlu0 %v234, 126
    %v251 = vpop.permute.xlu0 %250
    %252 = vrot.lane.b32.xlu0 %v235, 126
    %v253 = vpop.permute.xlu0 %252
    %254 = vrot.lane.b32.xlu0 %v236, 126
    %v255 = vpop.permute.xlu0 %254
    %256 = vrot.lane.b32.xlu0 %v237, 126
    %v257 = vpop.permute.xlu0 %256
    %258 = vrot.lane.b32.xlu0 %v238, 126
    %v259 = vpop.permute.xlu0 %258
    %260 = vrot.lane.b32.xlu0 %v239, 126
    %v261 = vpop.permute.xlu0 %260
    %vm262 = vcmask 1031168
    %v263 = vsel %vm262, %v241, %v243
    %v264 = vsel %vm262, %v243, %v245
    %v265 = vsel %vm262, %v245, %v247
    %v266 = vsel %vm262, %v247, %v249
    %v267 = vsel %vm262, %v249, %v251
    %v268 = vsel %vm262, %v251, %v253
    %v269 = vsel %vm262, %v253, %v255
    %v270 = vsel %vm262, %v255, %v257
    %v271 = vsel %vm262, %v257, %v259
    %v272 = vsel %vm262, %v259, %v261
    %v284 = vrot.slane %v169, 5
    %v285 = vrot.slane %v148, 5
    %v286 = vrot.slane %v149, 5
    %v287 = vrot.slane %v150, 5
    %v288 = vrot.slane %v151, 5
    %v289 = vrot.slane %v152, 5
    %v290 = vrot.slane %v153, 5
    %v291 = vrot.slane %v154, 5
    %v292 = vrot.slane %v155, 5
    %v293 = vrot.slane %v156, 5
    %v294 = vrot.slane %v171, 5
    %295 = vrot.lane.b32.xlu0 %v284, 110
    %v296 = vpop.permute.xlu0 %295
    %297 = vrot.lane.b32.xlu0 %v285, 110
    %v298 = vpop.permute.xlu0 %297
    %299 = vrot.lane.b32.xlu0 %v286, 110
    %v300 = vpop.permute.xlu0 %299
    %301 = vrot.lane.b32.xlu0 %v287, 110
    %v302 = vpop.permute.xlu0 %301
    %303 = vrot.lane.b32.xlu0 %v288, 110
    %v304 = vpop.permute.xlu0 %303
    %305 = vrot.lane.b32.xlu0 %v289, 110
    %v306 = vpop.permute.xlu0 %305
    %307 = vrot.lane.b32.xlu0 %v290, 110
    %v308 = vpop.permute.xlu0 %307
    %309 = vrot.lane.b32.xlu0 %v291, 110
    %v310 = vpop.permute.xlu0 %309
    %311 = vrot.lane.b32.xlu0 %v292, 110
    %v312 = vpop.permute.xlu0 %311
    %313 = vrot.lane.b32.xlu0 %v293, 110
    %v314 = vpop.permute.xlu0 %313
    %315 = vrot.lane.b32.xlu0 %v294, 110
    %v316 = vpop.permute.xlu0 %315
    %vm317 = vcmask 900096
    %v318 = vsel %vm317, %v296, %v298
    %v319 = vsel %vm317, %v298, %v300
    %v320 = vsel %vm317, %v300, %v302
    %v321 = vsel %vm317, %v302, %v304
    %v322 = vsel %vm317, %v304, %v306
    %v323 = vsel %vm317, %v306, %v308
    %v324 = vsel %vm317, %v308, %v310
    %v325 = vsel %vm317, %v310, %v312
    %v326 = vsel %vm317, %v312, %v314
    %v327 = vsel %vm317, %v314, %v316
    %v339 = vrot.slane %v169, 4
    %v340 = vrot.slane %v148, 4
    %v341 = vrot.slane %v149, 4
    %v342 = vrot.slane %v150, 4
    %v343 = vrot.slane %v151, 4
    %v344 = vrot.slane %v152, 4
    %v345 = vrot.slane %v153, 4
    %v346 = vrot.slane %v154, 4
    %v347 = vrot.slane %v155, 4
    %v348 = vrot.slane %v156, 4
    %v349 = vrot.slane %v171, 4
    %350 = vrot.lane.b32.xlu0 %v339, 109
    %v351 = vpop.permute.xlu0 %350
    %352 = vrot.lane.b32.xlu0 %v340, 109
    %v353 = vpop.permute.xlu0 %352
    %354 = vrot.lane.b32.xlu0 %v341, 109
    %v355 = vpop.permute.xlu0 %354
    %356 = vrot.lane.b32.xlu0 %v342, 109
    %v357 = vpop.permute.xlu0 %356
    %358 = vrot.lane.b32.xlu0 %v343, 109
    %v359 = vpop.permute.xlu0 %358
    %360 = vrot.lane.b32.xlu0 %v344, 109
    %v361 = vpop.permute.xlu0 %360
    %362 = vrot.lane.b32.xlu0 %v345, 109
    %v363 = vpop.permute.xlu0 %362
    %364 = vrot.lane.b32.xlu0 %v346, 109
    %v365 = vpop.permute.xlu0 %364
    %366 = vrot.lane.b32.xlu0 %v347, 109
    %v367 = vpop.permute.xlu0 %366
    %368 = vrot.lane.b32.xlu0 %v348, 109
    %v369 = vpop.permute.xlu0 %368
    %370 = vrot.lane.b32.xlu0 %v349, 109
    %v371 = vpop.permute.xlu0 %370
    %vm372 = vcmask 891904
    %v373 = vsel %vm372, %v351, %v353
    %v374 = vsel %vm372, %v353, %v355
    %v375 = vsel %vm372, %v355, %v357
    %v376 = vsel %vm372, %v357, %v359
    %v377 = vsel %vm372, %v359, %v361
    %v378 = vsel %vm372, %v361, %v363
    %v379 = vsel %vm372, %v363, %v365
    %v380 = vsel %vm372, %v365, %v367
    %v381 = vsel %vm372, %v367, %v369
    %v382 = vsel %vm372, %v369, %v371
    %v394 = vrot.slane %v169, 3
    %v395 = vrot.slane %v148, 3
    %v396 = vrot.slane %v149, 3
    %v397 = vrot.slane %v150, 3
    %v398 = vrot.slane %v151, 3
    %v399 = vrot.slane %v152, 3
    %v400 = vrot.slane %v153, 3
    %v401 = vrot.slane %v154, 3
    %v402 = vrot.slane %v155, 3
    %v403 = vrot.slane %v156, 3
    %v404 = vrot.slane %v171, 3
    %405 = vrot.lane.b32.xlu0 %v394, 108
    %v406 = vpop.permute.xlu0 %405
    %407 = vrot.lane.b32.xlu0 %v395, 108
    %v408 = vpop.permute.xlu0 %407
    %409 = vrot.lane.b32.xlu0 %v396, 108
    %v410 = vpop.permute.xlu0 %409
    %411 = vrot.lane.b32.xlu0 %v397, 108
    %v412 = vpop.permute.xlu0 %411
    %413 = vrot.lane.b32.xlu0 %v398, 108
    %v414 = vpop.permute.xlu0 %413
    %415 = vrot.lane.b32.xlu0 %v399, 108
    %v416 = vpop.permute.xlu0 %415
    %417 = vrot.lane.b32.xlu0 %v400, 108
    %v418 = vpop.permute.xlu0 %417
    %419 = vrot.lane.b32.xlu0 %v401, 108
    %v420 = vpop.permute.xlu0 %419
    %421 = vrot.lane.b32.xlu0 %v402, 108
    %v422 = vpop.permute.xlu0 %421
    %423 = vrot.lane.b32.xlu0 %v403, 108
    %v424 = vpop.permute.xlu0 %423
    %425 = vrot.lane.b32.xlu0 %v404, 108
    %v426 = vpop.permute.xlu0 %425
    %vm427 = vcmask 883712
    %v428 = vsel %vm427, %v406, %v408
    %v429 = vsel %vm427, %v408, %v410
    %v430 = vsel %vm427, %v410, %v412
    %v431 = vsel %vm427, %v412, %v414
    %v432 = vsel %vm427, %v414, %v416
    %v433 = vsel %vm427, %v416, %v418
    %v434 = vsel %vm427, %v418, %v420
    %v435 = vsel %vm427, %v420, %v422
    %v436 = vsel %vm427, %v422, %v424
    %v437 = vsel %vm427, %v424, %v426
    %v449 = vrot.slane %v169, 2
    %v450 = vrot.slane %v148, 2
    %v451 = vrot.slane %v149, 2
    %v452 = vrot.slane %v150, 2
    %v453 = vrot.slane %v151, 2
    %v454 = vrot.slane %v152, 2
    %v455 = vrot.slane %v153, 2
    %v456 = vrot.slane %v154, 2
    %v457 = vrot.slane %v155, 2
    %v458 = vrot.slane %v156, 2
    %v459 = vrot.slane %v171, 2
    %460 = vrot.lane.b32.xlu0 %v449, 92
    %v461 = vpop.permute.xlu0 %460
    %462 = vrot.lane.b32.xlu0 %v450, 92
    %v463 = vpop.permute.xlu0 %462
    %464 = vrot.lane.b32.xlu0 %v451, 92
    %v465 = vpop.permute.xlu0 %464
    %466 = vrot.lane.b32.xlu0 %v452, 92
    %v467 = vpop.permute.xlu0 %466
    %468 = vrot.lane.b32.xlu0 %v453, 92
    %v469 = vpop.permute.xlu0 %468
    %470 = vrot.lane.b32.xlu0 %v454, 92
    %v471 = vpop.permute.xlu0 %470
    %472 = vrot.lane.b32.xlu0 %v455, 92
    %v473 = vpop.permute.xlu0 %472
    %474 = vrot.lane.b32.xlu0 %v456, 92
    %v475 = vpop.permute.xlu0 %474
    %476 = vrot.lane.b32.xlu0 %v457, 92
    %v477 = vpop.permute.xlu0 %476
    %478 = vrot.lane.b32.xlu0 %v458, 92
    %v479 = vpop.permute.xlu0 %478
    %480 = vrot.lane.b32.xlu0 %v459, 92
    %v481 = vpop.permute.xlu0 %480
    %vm482 = vcmask 752640
    %v483 = vsel %vm482, %v461, %v463
    %v484 = vsel %vm482, %v463, %v465
    %v485 = vsel %vm482, %v465, %v467
    %v486 = vsel %vm482, %v467, %v469
    %v487 = vsel %vm482, %v469, %v471
    %v488 = vsel %vm482, %v471, %v473
    %v489 = vsel %vm482, %v473, %v475
    %v490 = vsel %vm482, %v475, %v477
    %v491 = vsel %vm482, %v477, %v479
    %v492 = vsel %vm482, %v479, %v481
    %v504 = vrot.slane %v169, 1
    %v505 = vrot.slane %v148, 1
    %v506 = vrot.slane %v149, 1
    %v507 = vrot.slane %v150, 1
    %v508 = vrot.slane %v151, 1
    %v509 = vrot.slane %v152, 1
    %v510 = vrot.slane %v153, 1
    %v511 = vrot.slane %v154, 1
    %v512 = vrot.slane %v155, 1
    %v513 = vrot.slane %v156, 1
    %v514 = vrot.slane %v171, 1
    %515 = vrot.lane.b32.xlu0 %v504, 91
    %v516 = vpop.permute.xlu0 %515
    %517 = vrot.lane.b32.xlu0 %v505, 91
    %v518 = vpop.permute.xlu0 %517
    %519 = vrot.lane.b32.xlu0 %v506, 91
    %v520 = vpop.permute.xlu0 %519
    %521 = vrot.lane.b32.xlu0 %v507, 91
    %v522 = vpop.permute.xlu0 %521
    %523 = vrot.lane.b32.xlu0 %v508, 91
    %v524 = vpop.permute.xlu0 %523
    %525 = vrot.lane.b32.xlu0 %v509, 91
    %v526 = vpop.permute.xlu0 %525
    %527 = vrot.lane.b32.xlu0 %v510, 91
    %v528 = vpop.permute.xlu0 %527
    %529 = vrot.lane.b32.xlu0 %v511, 91
    %v530 = vpop.permute.xlu0 %529
    %531 = vrot.lane.b32.xlu0 %v512, 91
    %v532 = vpop.permute.xlu0 %531
    %533 = vrot.lane.b32.xlu0 %v513, 91
    %v534 = vpop.permute.xlu0 %533
    %535 = vrot.lane.b32.xlu0 %v514, 91
    %v536 = vpop.permute.xlu0 %535
    %vm537 = vcmask 744448
    %v538 = vsel %vm537, %v516, %v518
    %v539 = vsel %vm537, %v518, %v520
    %v540 = vsel %vm537, %v520, %v522
    %v541 = vsel %vm537, %v522, %v524
    %v542 = vsel %vm537, %v524, %v526
    %v543 = vsel %vm537, %v526, %v528
    %v544 = vsel %vm537, %v528, %v530
    %v545 = vsel %vm537, %v530, %v532
    %v546 = vsel %vm537, %v532, %v534
    %v547 = vsel %vm537, %v534, %v536
    %559 = vrot.lane.b32.xlu0 %v169, 90
    %v560 = vpop.permute.xlu0 %559
    %561 = vrot.lane.b32.xlu0 %v148, 90
    %v562 = vpop.permute.xlu0 %561
    %563 = vrot.lane.b32.xlu0 %v149, 90
    %v564 = vpop.permute.xlu0 %563
    %565 = vrot.lane.b32.xlu0 %v150, 90
    %v566 = vpop.permute.xlu0 %565
    %567 = vrot.lane.b32.xlu0 %v151, 90
    %v568 = vpop.permute.xlu0 %567
    %569 = vrot.lane.b32.xlu0 %v152, 90
    %v570 = vpop.permute.xlu0 %569
    %571 = vrot.lane.b32.xlu0 %v153, 90
    %v572 = vpop.permute.xlu0 %571
    %573 = vrot.lane.b32.xlu0 %v154, 90
    %v574 = vpop.permute.xlu0 %573
    %575 = vrot.lane.b32.xlu0 %v155, 90
    %v576 = vpop.permute.xlu0 %575
    %577 = vrot.lane.b32.xlu0 %v156, 90
    %v578 = vpop.permute.xlu0 %577
    %579 = vrot.lane.b32.xlu0 %v171, 90
    %v580 = vpop.permute.xlu0 %579
    %vm581 = vcmask 736256
    %v582 = vsel %vm581, %v560, %v562
    %v583 = vsel %vm581, %v562, %v564
    %v584 = vsel %vm581, %v564, %v566
    %v585 = vsel %vm581, %v566, %v568
    %v586 = vsel %vm581, %v568, %v570
    %v587 = vsel %vm581, %v570, %v572
    %v588 = vsel %vm581, %v572, %v574
    %v589 = vsel %vm581, %v574, %v576
    %v590 = vsel %vm581, %v576, %v578
    %v591 = vsel %vm581, %v578, %v580
    %vm603 = vcmask 1040384
    %v604 = vsel %vm603, %v169, %v208
    %v605 = vsel %vm603, %v148, %v209
    %v606 = vsel %vm603, %v149, %v210
    %v607 = vsel %vm603, %v150, %v211
    %v608 = vsel %vm603, %v151, %v212
    %v609 = vsel %vm603, %v152, %v213
    %v610 = vsel %vm603, %v153, %v214
    %v611 = vsel %vm603, %v154, %v215
    %v612 = vsel %vm603, %v155, %v216
    %v613 = vsel %vm603, %v156, %v217
    %v614 = vsel %vm603, %v171, %v206
    %vm615 = vcmask 1041408
    %v616 = vsel %vm615, %v604, %v263
    %v617 = vsel %vm615, %v605, %v264
    %v618 = vsel %vm615, %v606, %v265
    %v619 = vsel %vm615, %v607, %v266
    %v620 = vsel %vm615, %v608, %v267
    %v621 = vsel %vm615, %v609, %v268
    %v622 = vsel %vm615, %v610, %v269
    %v623 = vsel %vm615, %v611, %v270
    %v624 = vsel %vm615, %v612, %v271
    %v625 = vsel %vm615, %v613, %v272
    %v626 = vsel %vm615, %v614, %v261
    %vm627 = vcmask 1042432
    %v628 = vsel %vm627, %v616, %v318
    %v629 = vsel %vm627, %v617, %v319
    %v630 = vsel %vm627, %v618, %v320
    %v631 = vsel %vm627, %v619, %v321
    %v632 = vsel %vm627, %v620, %v322
    %v633 = vsel %vm627, %v621, %v323
    %v634 = vsel %vm627, %v622, %v324
    %v635 = vsel %vm627, %v623, %v325
    %v636 = vsel %vm627, %v624, %v326
    %v637 = vsel %vm627, %v625, %v327
    %v638 = vsel %vm627, %v626, %v316
    %vm639 = vcmask 1043456
    %v640 = vsel %vm639, %v628, %v373
    %v641 = vsel %vm639, %v629, %v374
    %v642 = vsel %vm639, %v630, %v375
    %v643 = vsel %vm639, %v631, %v376
    %v644 = vsel %vm639, %v632, %v377
    %v645 = vsel %vm639, %v633, %v378
    %v646 = vsel %vm639, %v634, %v379
    %v647 = vsel %vm639, %v635, %v380
    %v648 = vsel %vm639, %v636, %v381
    %v649 = vsel %vm639, %v637, %v382
    %v650 = vsel %vm639, %v638, %v371
    %vm651 = vcmask 1044480
    %v652 = vsel %vm651, %v640, %v428
    %v653 = vsel %vm651, %v641, %v429
    %v654 = vsel %vm651, %v642, %v430
    %v655 = vsel %vm651, %v643, %v431
    %v656 = vsel %vm651, %v644, %v432
    %v657 = vsel %vm651, %v645, %v433
    %v658 = vsel %vm651, %v646, %v434
    %v659 = vsel %vm651, %v647, %v435
    %v660 = vsel %vm651, %v648, %v436
    %v661 = vsel %vm651, %v649, %v437
    %v662 = vsel %vm651, %v650, %v426
    %vm663 = vcmask 1045504
    %v664 = vsel %vm663, %v652, %v483
    %v665 = vsel %vm663, %v653, %v484
    %v666 = vsel %vm663, %v654, %v485
    %v667 = vsel %vm663, %v655, %v486
    %v668 = vsel %vm663, %v656, %v487
    %v669 = vsel %vm663, %v657, %v488
    %v670 = vsel %vm663, %v658, %v489
    %v671 = vsel %vm663, %v659, %v490
    %v672 = vsel %vm663, %v660, %v491
    %v673 = vsel %vm663, %v661, %v492
    %v674 = vsel %vm663, %v662, %v481
    %vm675 = vcmask 1046528
    %v676 = vsel %vm675, %v664, %v538
    %v677 = vsel %vm675, %v665, %v539
    %v678 = vsel %vm675, %v666, %v540
    %v679 = vsel %vm675, %v667, %v541
    %v680 = vsel %vm675, %v668, %v542
    %v681 = vsel %vm675, %v669, %v543
    %v682 = vsel %vm675, %v670, %v544
    %v683 = vsel %vm675, %v671, %v545
    %v684 = vsel %vm675, %v672, %v546
    %v685 = vsel %vm675, %v673, %v547
    %v686 = vsel %vm675, %v674, %v536
    %v687 = vpack.c.bf16 %v582, %v676
    %v688 = vpack.c.bf16 %v583, %v677
    %v689 = vpack.c.bf16 %v584, %v678
    %v690 = vpack.c.bf16 %v585, %v679
    %v691 = vpack.c.bf16 %v586, %v680
    %v692 = vpack.c.bf16 %v587, %v681
    %v693 = vpack.c.bf16 %v588, %v682
    %v694 = vpack.c.bf16 %v589, %v683
    %v695 = vpack.c.bf16 %v590, %v684
    %v696 = vpack.c.bf16 %v591, %v685
    %v697 = vpack.c.bf16 %v580, %v686
    %699 = vset.pattern.permute.xlu0 0
    %700 = vperm.xlu0 %699, %v109
    %v701 = vpop.permute.xlu0 %700
    %714 = vrot.lane.b32.xlu0 %v687, 111
    %v715 = vpop.permute.xlu0 %714
    %716 = vrot.lane.b32.xlu0 %v688, 111
    %v717 = vpop.permute.xlu0 %716
    %718 = vrot.lane.b32.xlu0 %v689, 111
    %v719 = vpop.permute.xlu0 %718
    %720 = vrot.lane.b32.xlu0 %v690, 111
    %v721 = vpop.permute.xlu0 %720
    %722 = vrot.lane.b32.xlu0 %v691, 111
    %v723 = vpop.permute.xlu0 %722
    %724 = vrot.lane.b32.xlu0 %v692, 111
    %v725 = vpop.permute.xlu0 %724
    %726 = vrot.lane.b32.xlu0 %v693, 111
    %v727 = vpop.permute.xlu0 %726
    %728 = vrot.lane.b32.xlu0 %v694, 111
    %v729 = vpop.permute.xlu0 %728
    %730 = vrot.lane.b32.xlu0 %v695, 111
    %v731 = vpop.permute.xlu0 %730
    %732 = vrot.lane.b32.xlu0 %v696, 111
    %v733 = vpop.permute.xlu0 %732
    %734 = vrot.lane.b32.xlu0 %v697, 111
    %v735 = vpop.permute.xlu0 %734
    %vm736 = vcmask 908288
    %v737 = vsel %vm736, %v715, %v717
    %v738 = vsel %vm736, %v717, %v719
    %v739 = vsel %vm736, %v719, %v721
    %v740 = vsel %vm736, %v721, %v723
    %v741 = vsel %vm736, %v723, %v725
    %v742 = vsel %vm736, %v725, %v727
    %v743 = vsel %vm736, %v727, %v729
    %v744 = vsel %vm736, %v729, %v731
    %v745 = vsel %vm736, %v731, %v733
    %v746 = vsel %vm736, %v733, %v735
    %vm747 = vcmask 72704
    %v749 = vsel %vm747, %v108, 0
    %v751 = vsel %vm639, 4294967295, 65535
    %v752 = vsel %vm651, %v751, 0
    %v754 = vand.u32 %v737, %v752
    %v757 = vand.u32 %v738, %v752
    %v760 = vand.u32 %v739, %v752
    %v763 = vand.u32 %v740, %v752
    %v766 = vand.u32 %v741, %v752
    %v769 = vand.u32 %v742, %v752
    %v772 = vand.u32 %v743, %v752
    %v775 = vand.u32 %v744, %v752
    %v778 = vand.u32 %v745, %v752
    %v781 = vand.u32 %v746, %v752
    %v784 = vand.u32 %v735, %v752
    %786 = vmatpush.bf16.msra.mxu0 0
    %787 = vmatpush.bf16.msra.mxu0 0
    %788 = vmatpush.bf16.msra.mxu0 0
    %789 = vmatpush.bf16.msra.mxu0 0
    %790 = vmatpush.bf16.msra.mxu0 0
    %791 = vmatpush.bf16.msra.mxu0 0
    %792 = vmatpush.bf16.msra.mxu0 0
    %793 = vmatpush.bf16.msra.mxu0 %v754
    %794 = vmatmul.bf16.gmra.mxu0 %v749
    %v795 = vpop.f32.mrf.mxu0
    %v796 = vadd.f32 %v701, %v795
    %v797 = vpop.f32.mrf.mxu0
    %798 = vdwg.mxu0
    %799 = vmatpush.bf16.msra.mxu0 0
    %800 = vmatpush.bf16.msra.mxu0 0
    %801 = vmatpush.bf16.msra.mxu0 0
    %802 = vmatpush.bf16.msra.mxu0 0
    %803 = vmatpush.bf16.msra.mxu0 0
    %804 = vmatpush.bf16.msra.mxu0 0
    %805 = vmatpush.bf16.msra.mxu0 0
    %806 = vmatpush.bf16.msra.mxu0 %v757
    %807 = vmatmul.bf16.gmra.mxu0 %v749
    %v808 = vpop.f32.mrf.mxu0
    %v809 = vadd.f32 %v701, %v808
    %v810 = vpop.f32.mrf.mxu0
    %811 = vdwg.mxu0
    %812 = vmatpush.bf16.msra.mxu0 0
    %813 = vmatpush.bf16.msra.mxu0 0
    %814 = vmatpush.bf16.msra.mxu0 0
    %815 = vmatpush.bf16.msra.mxu0 0
    %816 = vmatpush.bf16.msra.mxu0 0
    %817 = vmatpush.bf16.msra.mxu0 0
    %818 = vmatpush.bf16.msra.mxu0 0
    %819 = vmatpush.bf16.msra.mxu0 %v760
    %820 = vmatmul.bf16.gmra.mxu0 %v749
    %v821 = vpop.f32.mrf.mxu0
    %v822 = vadd.f32 %v701, %v821
    %v823 = vpop.f32.mrf.mxu0
    %824 = vdwg.mxu0
    %825 = vmatpush.bf16.msra.mxu0 0
    %826 = vmatpush.bf16.msra.mxu0 0
    %827 = vmatpush.bf16.msra.mxu0 0
    %828 = vmatpush.bf16.msra.mxu0 0
    %829 = vmatpush.bf16.msra.mxu0 0
    %830 = vmatpush.bf16.msra.mxu0 0
    %831 = vmatpush.bf16.msra.mxu0 0
    %832 = vmatpush.bf16.msra.mxu0 %v763
    %833 = vmatmul.bf16.gmra.mxu0 %v749
    %v834 = vpop.f32.mrf.mxu0
    %v835 = vadd.f32 %v701, %v834
    %v836 = vpop.f32.mrf.mxu0
    %837 = vdwg.mxu0
    %838 = vmatpush.bf16.msra.mxu0 0
    %839 = vmatpush.bf16.msra.mxu0 0
    %840 = vmatpush.bf16.msra.mxu0 0
    %841 = vmatpush.bf16.msra.mxu0 0
    %842 = vmatpush.bf16.msra.mxu0 0
    %843 = vmatpush.bf16.msra.mxu0 0
    %844 = vmatpush.bf16.msra.mxu0 0
    %845 = vmatpush.bf16.msra.mxu0 %v766
    %846 = vmatmul.bf16.gmra.mxu0 %v749
    %v847 = vpop.f32.mrf.mxu0
    %v848 = vadd.f32 %v701, %v847
    %v849 = vpop.f32.mrf.mxu0
    %850 = vdwg.mxu0
    %851 = vmatpush.bf16.msra.mxu0 0
    %852 = vmatpush.bf16.msra.mxu0 0
    %853 = vmatpush.bf16.msra.mxu0 0
    %854 = vmatpush.bf16.msra.mxu0 0
    %855 = vmatpush.bf16.msra.mxu0 0
    %856 = vmatpush.bf16.msra.mxu0 0
    %857 = vmatpush.bf16.msra.mxu0 0
    %858 = vmatpush.bf16.msra.mxu0 %v769
    %859 = vmatmul.bf16.gmra.mxu0 %v749
    %v860 = vpop.f32.mrf.mxu0
    %v861 = vadd.f32 %v701, %v860
    %v862 = vpop.f32.mrf.mxu0
    %863 = vdwg.mxu0
    %864 = vmatpush.bf16.msra.mxu0 0
    %865 = vmatpush.bf16.msra.mxu0 0
    %866 = vmatpush.bf16.msra.mxu0 0
    %867 = vmatpush.bf16.msra.mxu0 0
    %868 = vmatpush.bf16.msra.mxu0 0
    %869 = vmatpush.bf16.msra.mxu0 0
    %870 = vmatpush.bf16.msra.mxu0 0
    %871 = vmatpush.bf16.msra.mxu0 %v772
    %872 = vmatmul.bf16.gmra.mxu0 %v749
    %v873 = vpop.f32.mrf.mxu0
    %v874 = vadd.f32 %v701, %v873
    %v875 = vpop.f32.mrf.mxu0
    %876 = vdwg.mxu0
    %877 = vmatpush.bf16.msra.mxu0 0
    %878 = vmatpush.bf16.msra.mxu0 0
    %879 = vmatpush.bf16.msra.mxu0 0
    %880 = vmatpush.bf16.msra.mxu0 0
    %881 = vmatpush.bf16.msra.mxu0 0
    %882 = vmatpush.bf16.msra.mxu0 0
    %883 = vmatpush.bf16.msra.mxu0 0
    %884 = vmatpush.bf16.msra.mxu0 %v775
    %885 = vmatmul.bf16.gmra.mxu0 %v749
    %v886 = vpop.f32.mrf.mxu0
    %v887 = vadd.f32 %v701, %v886
    %v888 = vpop.f32.mrf.mxu0
    %889 = vdwg.mxu0
    %890 = vmatpush.bf16.msra.mxu0 0
    %891 = vmatpush.bf16.msra.mxu0 0
    %892 = vmatpush.bf16.msra.mxu0 0
    %893 = vmatpush.bf16.msra.mxu0 0
    %894 = vmatpush.bf16.msra.mxu0 0
    %895 = vmatpush.bf16.msra.mxu0 0
    %896 = vmatpush.bf16.msra.mxu0 0
    %897 = vmatpush.bf16.msra.mxu0 %v778
    %898 = vmatmul.bf16.gmra.mxu0 %v749
    %v899 = vpop.f32.mrf.mxu0
    %v900 = vadd.f32 %v701, %v899
    %v901 = vpop.f32.mrf.mxu0
    %902 = vdwg.mxu0
    %903 = vmatpush.bf16.msra.mxu0 0
    %904 = vmatpush.bf16.msra.mxu0 0
    %905 = vmatpush.bf16.msra.mxu0 0
    %906 = vmatpush.bf16.msra.mxu0 0
    %907 = vmatpush.bf16.msra.mxu0 0
    %908 = vmatpush.bf16.msra.mxu0 0
    %909 = vmatpush.bf16.msra.mxu0 0
    %910 = vmatpush.bf16.msra.mxu0 %v781
    %911 = vmatmul.bf16.gmra.mxu0 %v749
    %v912 = vpop.f32.mrf.mxu0
    %v913 = vadd.f32 %v701, %v912
    %v914 = vpop.f32.mrf.mxu0
    %915 = vdwg.mxu0
    %916 = vmatpush.bf16.msra.mxu0 0
    %917 = vmatpush.bf16.msra.mxu0 0
    %918 = vmatpush.bf16.msra.mxu0 0
    %919 = vmatpush.bf16.msra.mxu0 0
    %920 = vmatpush.bf16.msra.mxu0 0
    %921 = vmatpush.bf16.msra.mxu0 0
    %922 = vmatpush.bf16.msra.mxu0 0
    %923 = vmatpush.bf16.msra.mxu0 %v784
    %924 = vmatmul.bf16.gmra.mxu0 %v749
    %v925 = vpop.f32.mrf.mxu0
    %v926 = vadd.f32 %v701, %v925
    %v927 = vpop.f32.mrf.mxu0
    %928 = vdwg.mxu0
    %v929 = vmax.f32 %v796, 0.0
    %v930 = vmax.f32 %v809, 0.0
    %v931 = vmax.f32 %v822, 0.0
    %v932 = vmax.f32 %v835, 0.0
    %v933 = vmax.f32 %v848, 0.0
    %v934 = vmax.f32 %v861, 0.0
    %v935 = vmax.f32 %v874, 0.0
    %v936 = vmax.f32 %v887, 0.0
    %v937 = vmax.f32 %v900, 0.0
    %v938 = vmax.f32 %v913, 0.0
    %v939 = vmax.f32 %v926, 0.0
    %v942 = vperm.slane %v102, 0
    %v943 = vperm.slane %v102, 1
    %v944 = vperm.slane %v102, 2
    %v945 = vperm.slane %v102, 3
    %v946 = vperm.slane %v102, 4
    %v947 = vperm.slane %v102, 5
    %v948 = vperm.slane %v102, 6
    %v949 = vperm.slane %v102, 7
    %v950 = vperm.slane %v103, 0
    %v951 = vperm.slane %v103, 1
    %v952 = vperm.slane %v103, 2
    %v964 = vmul.f32 %v929, %v942
    %v965 = vmul.f32 %v930, %v943
    %v966 = vmul.f32 %v931, %v944
    %v967 = vmul.f32 %v932, %v945
    %v968 = vmul.f32 %v933, %v946
    %v969 = vmul.f32 %v934, %v947
    %v970 = vmul.f32 %v935, %v948
    %v971 = vmul.f32 %v936, %v949
    %v972 = vmul.f32 %v937, %v950
    %v973 = vmul.f32 %v938, %v951
    %v974 = vmul.f32 %v939, %v952
    %v975 = vsel %vm639, %v964, 0.0
    %v976 = vsel %vm639, %v965, 0.0
    %v977 = vadd.f32 %v975, %v976
    %v978 = vsel %vm639, %v966, 0.0
    %v979 = vadd.f32 %v977, %v978
    %v980 = vsel %vm639, %v967, 0.0
    %v981 = vadd.f32 %v979, %v980
    %v982 = vsel %vm639, %v968, 0.0
    %v983 = vadd.f32 %v981, %v982
    %v984 = vsel %vm639, %v969, 0.0
    %v985 = vadd.f32 %v983, %v984
    %v986 = vsel %vm639, %v970, 0.0
    %v987 = vadd.f32 %v985, %v986
    %v988 = vsel %vm639, %v971, 0.0
    %v989 = vadd.f32 %v987, %v988
    %v990 = vsel %vm639, %v972, 0.0
    %v991 = vadd.f32 %v989, %v990
    %v992 = vsel %vm639, %v973, 0.0
    %v993 = vadd.f32 %v991, %v992
    %vm994 = vcmask 125952
    %v995 = vsel %vm994, %v974, 0.0
    %v996 = vadd.f32 %v993, %v995
    %997 = vadd.xlane.f32.xlu0 %v996
    %v998 = vpop.xlane.xlu0 %997
    %v999 = vrcp.pop 512.0
    %v1000 = vmul.f32 512.0, %v999
    %v1001 = vsub.f32 1.0, %v1000
    %v1002 = vmul.f32 %v999, %v1001
    %v1003 = vadd.f32 %v999, %v1002
    %vm1004 = vweird.f32 %v999
    %v1005 = vsel %vm1004, %v999, %v1003
    %v1006 = vmul.f32 %v998, %v1005
    %v1007 = vsub.f32 %v929, %v1006
    %v1008 = vsub.f32 %v930, %v1006
    %v1009 = vsub.f32 %v931, %v1006
    %v1010 = vsub.f32 %v932, %v1006
    %v1011 = vsub.f32 %v933, %v1006
    %v1012 = vsub.f32 %v934, %v1006
    %v1013 = vsub.f32 %v935, %v1006
    %v1014 = vsub.f32 %v936, %v1006
    %v1015 = vsub.f32 %v937, %v1006
    %v1016 = vsub.f32 %v938, %v1006
    %v1017 = vsub.f32 %v939, %v1006
    %v1018 = vmul.f32 %v1007, %v1007
    %v1019 = vmul.f32 %v1008, %v1008
    %v1020 = vmul.f32 %v1009, %v1009
    %v1021 = vmul.f32 %v1010, %v1010
    %v1022 = vmul.f32 %v1011, %v1011
    %v1023 = vmul.f32 %v1012, %v1012
    %v1024 = vmul.f32 %v1013, %v1013
    %v1025 = vmul.f32 %v1014, %v1014
    %v1026 = vmul.f32 %v1015, %v1015
    %v1027 = vmul.f32 %v1016, %v1016
    %v1028 = vmul.f32 %v1017, %v1017
    %v1029 = vmul.f32 %v942, %v1018
    %v1030 = vmul.f32 %v943, %v1019
    %v1031 = vmul.f32 %v944, %v1020
    %v1032 = vmul.f32 %v945, %v1021
    %v1033 = vmul.f32 %v946, %v1022
    %v1034 = vmul.f32 %v947, %v1023
    %v1035 = vmul.f32 %v948, %v1024
    %v1036 = vmul.f32 %v949, %v1025
    %v1037 = vmul.f32 %v950, %v1026
    %v1038 = vmul.f32 %v951, %v1027
    %v1039 = vmul.f32 %v952, %v1028
    %v1040 = vsel %vm639, %v1029, 0.0
    %v1041 = vsel %vm639, %v1030, 0.0
    %v1042 = vadd.f32 %v1040, %v1041
    %v1043 = vsel %vm639, %v1031, 0.0
    %v1044 = vadd.f32 %v1042, %v1043
    %v1045 = vsel %vm639, %v1032, 0.0
    %v1046 = vadd.f32 %v1044, %v1045
    %v1047 = vsel %vm639, %v1033, 0.0
    %v1048 = vadd.f32 %v1046, %v1047
    %v1049 = vsel %vm639, %v1034, 0.0
    %v1050 = vadd.f32 %v1048, %v1049
    %v1051 = vsel %vm639, %v1035, 0.0
    %v1052 = vadd.f32 %v1050, %v1051
    %v1053 = vsel %vm639, %v1036, 0.0
    %v1054 = vadd.f32 %v1052, %v1053
    %v1055 = vsel %vm639, %v1037, 0.0
    %v1056 = vadd.f32 %v1054, %v1055
    %v1057 = vsel %vm639, %v1038, 0.0
    %v1058 = vadd.f32 %v1056, %v1057
    %v1059 = vsel %vm994, %v1039, 0.0
    %v1060 = vadd.f32 %v1058, %v1059
    %1061 = vadd.xlane.f32.xlu0 %v1060
    %v1062 = vpop.xlane.xlu0 %1061
    %v1063 = vmul.f32 %v1062, %v1005
    %v1064 = vadd.f32 %v1063, 1e-05
    %v1065 = vrsqrt.pop %v1064
    %v1066 = vmul.f32 %v1065, %v1064
    %v1067 = vmul.f32 %v1066, %v1065
    %v1068 = vmul.f32 0.5, %v1067
    %v1069 = vsub.f32 1.5, %v1068
    %v1070 = vmul.f32 %v1065, %v1069
    %vm1071 = vweird.f32 %v1064
    %vm1072 = vweird.f32 %v1065
    %vm1073 = vmor %vm1071, %vm1072
    %v1074 = vsel %vm1073, %v1065, %v1070
    %v1075 = vmul.f32 %v110, %v1074
    %v1076 = vmul.f32 %v1006, %v1075
    %v1077 = vsub.f32 %v111, %v1076
    %v1080 = vperm.slane %v104, 0
    %v1081 = vperm.slane %v104, 1
    %v1082 = vperm.slane %v104, 2
    %v1083 = vperm.slane %v104, 3
    %v1084 = vperm.slane %v104, 4
    %v1085 = vperm.slane %v104, 5
    %v1086 = vperm.slane %v104, 6
    %v1087 = vperm.slane %v104, 7
    %v1088 = vperm.slane %v105, 0
    %v1089 = vperm.slane %v105, 1
    %v1090 = vperm.slane %v105, 2
    %v1102 = vmul.f32 %v929, %v1080
    %v1103 = vmul.f32 %v930, %v1081
    %v1104 = vmul.f32 %v931, %v1082
    %v1105 = vmul.f32 %v932, %v1083
    %v1106 = vmul.f32 %v933, %v1084
    %v1107 = vmul.f32 %v934, %v1085
    %v1108 = vmul.f32 %v935, %v1086
    %v1109 = vmul.f32 %v936, %v1087
    %v1110 = vmul.f32 %v937, %v1088
    %v1111 = vmul.f32 %v938, %v1089
    %v1112 = vmul.f32 %v939, %v1090
    %v1113 = vsel %vm639, %v1102, 0.0
    %v1114 = vsel %vm639, %v1103, 0.0
    %v1115 = vadd.f32 %v1113, %v1114
    %v1116 = vsel %vm639, %v1104, 0.0
    %v1117 = vadd.f32 %v1115, %v1116
    %v1118 = vsel %vm639, %v1105, 0.0
    %v1119 = vadd.f32 %v1117, %v1118
    %v1120 = vsel %vm639, %v1106, 0.0
    %v1121 = vadd.f32 %v1119, %v1120
    %v1122 = vsel %vm639, %v1107, 0.0
    %v1123 = vadd.f32 %v1121, %v1122
    %v1124 = vsel %vm639, %v1108, 0.0
    %v1125 = vadd.f32 %v1123, %v1124
    %v1126 = vsel %vm639, %v1109, 0.0
    %v1127 = vadd.f32 %v1125, %v1126
    %v1128 = vsel %vm639, %v1110, 0.0
    %v1129 = vadd.f32 %v1127, %v1128
    %v1130 = vsel %vm639, %v1111, 0.0
    %v1131 = vadd.f32 %v1129, %v1130
    %v1132 = vsel %vm994, %v1112, 0.0
    %v1133 = vadd.f32 %v1131, %v1132
    %1134 = vadd.xlane.f32.xlu0 %v1133
    %v1135 = vpop.xlane.xlu0 %1134
    %v1136 = vmul.f32 %v1135, %v1005
    %v1137 = vsub.f32 %v929, %v1136
    %v1138 = vsub.f32 %v930, %v1136
    %v1139 = vsub.f32 %v931, %v1136
    %v1140 = vsub.f32 %v932, %v1136
    %v1141 = vsub.f32 %v933, %v1136
    %v1142 = vsub.f32 %v934, %v1136
    %v1143 = vsub.f32 %v935, %v1136
    %v1144 = vsub.f32 %v936, %v1136
    %v1145 = vsub.f32 %v937, %v1136
    %v1146 = vsub.f32 %v938, %v1136
    %v1147 = vsub.f32 %v939, %v1136
    %v1148 = vmul.f32 %v1137, %v1137
    %v1149 = vmul.f32 %v1138, %v1138
    %v1150 = vmul.f32 %v1139, %v1139
    %v1151 = vmul.f32 %v1140, %v1140
    %v1152 = vmul.f32 %v1141, %v1141
    %v1153 = vmul.f32 %v1142, %v1142
    %v1154 = vmul.f32 %v1143, %v1143
    %v1155 = vmul.f32 %v1144, %v1144
    %v1156 = vmul.f32 %v1145, %v1145
    %v1157 = vmul.f32 %v1146, %v1146
    %v1158 = vmul.f32 %v1147, %v1147
    %v1159 = vmul.f32 %v1080, %v1148
    %v1160 = vmul.f32 %v1081, %v1149
    %v1161 = vmul.f32 %v1082, %v1150
    %v1162 = vmul.f32 %v1083, %v1151
    %v1163 = vmul.f32 %v1084, %v1152
    %v1164 = vmul.f32 %v1085, %v1153
    %v1165 = vmul.f32 %v1086, %v1154
    %v1166 = vmul.f32 %v1087, %v1155
    %v1167 = vmul.f32 %v1088, %v1156
    %v1168 = vmul.f32 %v1089, %v1157
    %v1169 = vmul.f32 %v1090, %v1158
    %v1170 = vsel %vm639, %v1159, 0.0
    %v1171 = vsel %vm639, %v1160, 0.0
    %v1172 = vadd.f32 %v1170, %v1171
    %v1173 = vsel %vm639, %v1161, 0.0
    %v1174 = vadd.f32 %v1172, %v1173
    %v1175 = vsel %vm639, %v1162, 0.0
    %v1176 = vadd.f32 %v1174, %v1175
    %v1177 = vsel %vm639, %v1163, 0.0
    %v1178 = vadd.f32 %v1176, %v1177
    %v1179 = vsel %vm639, %v1164, 0.0
    %v1180 = vadd.f32 %v1178, %v1179
    %v1181 = vsel %vm639, %v1165, 0.0
    %v1182 = vadd.f32 %v1180, %v1181
    %v1183 = vsel %vm639, %v1166, 0.0
    %v1184 = vadd.f32 %v1182, %v1183
    %v1185 = vsel %vm639, %v1167, 0.0
    %v1186 = vadd.f32 %v1184, %v1185
    %v1187 = vsel %vm639, %v1168, 0.0
    %v1188 = vadd.f32 %v1186, %v1187
    %v1189 = vsel %vm994, %v1169, 0.0
    %v1190 = vadd.f32 %v1188, %v1189
    %1191 = vadd.xlane.f32.xlu0 %v1190
    %v1192 = vpop.xlane.xlu0 %1191
    %v1193 = vmul.f32 %v1192, %v1005
    %v1194 = vadd.f32 %v1193, 1e-05
    %v1195 = vrsqrt.pop %v1194
    %v1196 = vmul.f32 %v1195, %v1194
    %v1197 = vmul.f32 %v1196, %v1195
    %v1198 = vmul.f32 0.5, %v1197
    %v1199 = vsub.f32 1.5, %v1198
    %v1200 = vmul.f32 %v1195, %v1199
    %vm1201 = vweird.f32 %v1194
    %vm1202 = vweird.f32 %v1195
    %vm1203 = vmor %vm1201, %vm1202
    %v1204 = vsel %vm1203, %v1195, %v1200
    %v1205 = vmul.f32 %v110, %v1204
    %v1206 = vmul.f32 %v1136, %v1205
    %v1207 = vsub.f32 %v111, %v1206
    %1209 = vset.pattern.permute.xlu0 0
    %1210 = vperm.xlu0 %1209, %v1075
    %v1211 = vpop.permute.xlu0 %1210
    %v1213 = vmul.f32 %v1211, %v942
    %v1214 = vmul.f32 %v1211, %v943
    %v1215 = vmul.f32 %v1211, %v944
    %v1216 = vmul.f32 %v1211, %v945
    %v1217 = vmul.f32 %v1211, %v946
    %v1218 = vmul.f32 %v1211, %v947
    %v1219 = vmul.f32 %v1211, %v948
    %v1220 = vmul.f32 %v1211, %v949
    %v1221 = vmul.f32 %v1211, %v950
    %v1222 = vmul.f32 %v1211, %v951
    %v1223 = vmul.f32 %v1211, %v952
    %1225 = vset.pattern.permute.xlu0 0
    %1226 = vperm.xlu0 %1225, %v1205
    %v1227 = vpop.permute.xlu0 %1226
    %v1229 = vmul.f32 %v1227, %v1080
    %v1230 = vmul.f32 %v1227, %v1081
    %v1231 = vmul.f32 %v1227, %v1082
    %v1232 = vmul.f32 %v1227, %v1083
    %v1233 = vmul.f32 %v1227, %v1084
    %v1234 = vmul.f32 %v1227, %v1085
    %v1235 = vmul.f32 %v1227, %v1086
    %v1236 = vmul.f32 %v1227, %v1087
    %v1237 = vmul.f32 %v1227, %v1088
    %v1238 = vmul.f32 %v1227, %v1089
    %v1239 = vmul.f32 %v1227, %v1090
    %v1240 = vadd.f32 %v1213, %v1229
    %v1241 = vadd.f32 %v1214, %v1230
    %v1242 = vadd.f32 %v1215, %v1231
    %v1243 = vadd.f32 %v1216, %v1232
    %v1244 = vadd.f32 %v1217, %v1233
    %v1245 = vadd.f32 %v1218, %v1234
    %v1246 = vadd.f32 %v1219, %v1235
    %v1247 = vadd.f32 %v1220, %v1236
    %v1248 = vadd.f32 %v1221, %v1237
    %v1249 = vadd.f32 %v1222, %v1238
    %v1250 = vadd.f32 %v1223, %v1239
    %v1251 = vmul.f32 %v929, %v1240
    %v1252 = vmul.f32 %v930, %v1241
    %v1253 = vmul.f32 %v931, %v1242
    %v1254 = vmul.f32 %v932, %v1243
    %v1255 = vmul.f32 %v933, %v1244
    %v1256 = vmul.f32 %v934, %v1245
    %v1257 = vmul.f32 %v935, %v1246
    %v1258 = vmul.f32 %v936, %v1247
    %v1259 = vmul.f32 %v937, %v1248
    %v1260 = vmul.f32 %v938, %v1249
    %v1261 = vmul.f32 %v939, %v1250
    %1263 = vset.pattern.permute.xlu0 0
    %1264 = vperm.xlu0 %1263, %v1077
    %v1265 = vpop.permute.xlu0 %1264
    %v1267 = vmul.f32 %v1265, %v942
    %v1268 = vmul.f32 %v1265, %v943
    %v1269 = vmul.f32 %v1265, %v944
    %v1270 = vmul.f32 %v1265, %v945
    %v1271 = vmul.f32 %v1265, %v946
    %v1272 = vmul.f32 %v1265, %v947
    %v1273 = vmul.f32 %v1265, %v948
    %v1274 = vmul.f32 %v1265, %v949
    %v1275 = vmul.f32 %v1265, %v950
    %v1276 = vmul.f32 %v1265, %v951
    %v1277 = vmul.f32 %v1265, %v952
    %1279 = vset.pattern.permute.xlu0 0
    %1280 = vperm.xlu0 %1279, %v1207
    %v1281 = vpop.permute.xlu0 %1280
    %v1283 = vmul.f32 %v1281, %v1080
    %v1284 = vmul.f32 %v1281, %v1081
    %v1285 = vmul.f32 %v1281, %v1082
    %v1286 = vmul.f32 %v1281, %v1083
    %v1287 = vmul.f32 %v1281, %v1084
    %v1288 = vmul.f32 %v1281, %v1085
    %v1289 = vmul.f32 %v1281, %v1086
    %v1290 = vmul.f32 %v1281, %v1087
    %v1291 = vmul.f32 %v1281, %v1088
    %v1292 = vmul.f32 %v1281, %v1089
    %v1293 = vmul.f32 %v1281, %v1090
    %v1294 = vadd.f32 %v1267, %v1283
    %v1295 = vadd.f32 %v1268, %v1284
    %v1296 = vadd.f32 %v1269, %v1285
    %v1297 = vadd.f32 %v1270, %v1286
    %v1298 = vadd.f32 %v1271, %v1287
    %v1299 = vadd.f32 %v1272, %v1288
    %v1300 = vadd.f32 %v1273, %v1289
    %v1301 = vadd.f32 %v1274, %v1290
    %v1302 = vadd.f32 %v1275, %v1291
    %v1303 = vadd.f32 %v1276, %v1292
    %v1304 = vadd.f32 %v1277, %v1293
    %v1305 = vadd.f32 %v1251, %v1294
    %v1306 = vadd.f32 %v1252, %v1295
    %v1307 = vadd.f32 %v1253, %v1296
    %v1308 = vadd.f32 %v1254, %v1297
    %v1309 = vadd.f32 %v1255, %v1298
    %v1310 = vadd.f32 %v1256, %v1299
    %v1311 = vadd.f32 %v1257, %v1300
    %v1312 = vadd.f32 %v1258, %v1301
    %v1313 = vadd.f32 %v1259, %v1302
    %v1314 = vadd.f32 %v1260, %v1303
    %v1315 = vadd.f32 %v1261, %v1304
    %1327 = vrot.lane.b32.xlu0 %v1305, 36
    %v1328 = vpop.permute.xlu0 %1327
    %1329 = vrot.lane.b32.xlu0 %v1306, 36
    %v1330 = vpop.permute.xlu0 %1329
    %1331 = vrot.lane.b32.xlu0 %v1307, 36
    %v1332 = vpop.permute.xlu0 %1331
    %1333 = vrot.lane.b32.xlu0 %v1308, 36
    %v1334 = vpop.permute.xlu0 %1333
    %1335 = vrot.lane.b32.xlu0 %v1309, 36
    %v1336 = vpop.permute.xlu0 %1335
    %1337 = vrot.lane.b32.xlu0 %v1310, 36
    %v1338 = vpop.permute.xlu0 %1337
    %1339 = vrot.lane.b32.xlu0 %v1311, 36
    %v1340 = vpop.permute.xlu0 %1339
    %1341 = vrot.lane.b32.xlu0 %v1312, 36
    %v1342 = vpop.permute.xlu0 %1341
    %1343 = vrot.lane.b32.xlu0 %v1313, 36
    %v1344 = vpop.permute.xlu0 %1343
    %1345 = vrot.lane.b32.xlu0 %v1314, 36
    %v1346 = vpop.permute.xlu0 %1345
    %1347 = vrot.lane.b32.xlu0 %v1315, 36
    %v1348 = vpop.permute.xlu0 %1347
    %v1349 = vsel %vm147, %v1328, %v1330
    %v1350 = vsel %vm147, %v1330, %v1332
    %v1351 = vsel %vm147, %v1332, %v1334
    %v1352 = vsel %vm147, %v1334, %v1336
    %v1353 = vsel %vm147, %v1336, %v1338
    %v1354 = vsel %vm147, %v1338, %v1340
    %v1355 = vsel %vm147, %v1340, %v1342
    %v1356 = vsel %vm147, %v1342, %v1344
    %v1357 = vsel %vm147, %v1344, %v1346
    %v1358 = vsel %vm147, %v1346, %v1348
    %v1370 = vsel %vm147, 0.0, %v1328
    %v1371 = vsel %vm170, %v1358, 0.0
    %vm1372 = vcmp.eq.s32.totalorder %v98, 0
    %vm1373 = vcmp.eq.s32.totalorder %v99, 0
    %v1374 = vsel %vm1372, 1, 0
    %v1375 = vsel %vm1373, 1, 0
    %v1376 = vperm.slane %v1374, 0
    %v1377 = vperm.slane %v1374, 1
    %v1378 = vperm.slane %v1374, 2
    %v1379 = vperm.slane %v1374, 3
    %v1380 = vperm.slane %v1374, 4
    %v1381 = vperm.slane %v1374, 5
    %v1382 = vperm.slane %v1374, 6
    %v1383 = vperm.slane %v1374, 7
    %v1384 = vperm.slane %v1375, 0
    %v1385 = vperm.slane %v1375, 1
    %v1386 = vperm.slane %v1375, 2
    %vm1387 = vcmp.eq.s32.totalorder %v1376, 1
    %vm1388 = vcmp.eq.s32.totalorder %v1377, 1
    %vm1389 = vcmp.eq.s32.totalorder %v1378, 1
    %vm1390 = vcmp.eq.s32.totalorder %v1379, 1
    %vm1391 = vcmp.eq.s32.totalorder %v1380, 1
    %vm1392 = vcmp.eq.s32.totalorder %v1381, 1
    %vm1393 = vcmp.eq.s32.totalorder %v1382, 1
    %vm1394 = vcmp.eq.s32.totalorder %v1383, 1
    %vm1395 = vcmp.eq.s32.totalorder %v1384, 1
    %vm1396 = vcmp.eq.s32.totalorder %v1385, 1
    %vm1397 = vcmp.eq.s32.totalorder %v1386, 1
    %1400 = vrot.lane.b32.xlu0 %v1370, 56
    %v1401 = vpop.permute.xlu0 %1400
    %1402 = vrot.lane.b32.xlu0 %v1349, 56
    %v1403 = vpop.permute.xlu0 %1402
    %1404 = vrot.lane.b32.xlu0 %v1350, 56
    %v1405 = vpop.permute.xlu0 %1404
    %1406 = vrot.lane.b32.xlu0 %v1351, 56
    %v1407 = vpop.permute.xlu0 %1406
    %1408 = vrot.lane.b32.xlu0 %v1352, 56
    %v1409 = vpop.permute.xlu0 %1408
    %1410 = vrot.lane.b32.xlu0 %v1353, 56
    %v1411 = vpop.permute.xlu0 %1410
    %1412 = vrot.lane.b32.xlu0 %v1354, 56
    %v1413 = vpop.permute.xlu0 %1412
    %1414 = vrot.lane.b32.xlu0 %v1355, 56
    %v1415 = vpop.permute.xlu0 %1414
    %1416 = vrot.lane.b32.xlu0 %v1356, 56
    %v1417 = vpop.permute.xlu0 %1416
    %1418 = vrot.lane.b32.xlu0 %v1357, 56
    %v1419 = vpop.permute.xlu0 %1418
    %1420 = vrot.lane.b32.xlu0 %v1371, 56
    %v1421 = vpop.permute.xlu0 %1420
    %vm1422 = vcmask 457728
    %v1423 = vsel %vm1422, %v1401, %v1403
    %v1424 = vsel %vm1422, %v1403, %v1405
    %v1425 = vsel %vm1422, %v1405, %v1407
    %v1426 = vsel %vm1422, %v1407, %v1409
    %v1427 = vsel %vm1422, %v1409, %v1411
    %v1428 = vsel %vm1422, %v1411, %v1413
    %v1429 = vsel %vm1422, %v1413, %v1415
    %v1430 = vsel %vm1422, %v1415, %v1417
    %v1431 = vsel %vm1422, %v1417, %v1419
    %v1432 = vsel %vm1422, %v1419, %v1421
    %v1444 = vsel %vm1387, %v1423, %v1305
    %v1445 = vsel %vm1388, %v1424, %v1306
    %v1446 = vsel %vm1389, %v1425, %v1307
    %v1447 = vsel %vm1390, %v1426, %v1308
    %v1448 = vsel %vm1391, %v1427, %v1309
    %v1449 = vsel %vm1392, %v1428, %v1310
    %v1450 = vsel %vm1393, %v1429, %v1311
    %v1451 = vsel %vm1394, %v1430, %v1312
    %v1452 = vsel %vm1395, %v1431, %v1313
    %v1453 = vsel %vm1396, %v1432, %v1314
    %v1454 = vsel %vm1397, %v1421, %v1315
    %vm1455 = vcmp.eq.s32.totalorder %v98, 17
    %vm1456 = vcmp.eq.s32.totalorder %v99, 17
    %v1457 = vsel %vm1455, 1, 0
    %v1458 = vsel %vm1456, 1, 0
    %v1459 = vperm.slane %v1457, 0
    %v1460 = vperm.slane %v1457, 1
    %v1461 = vperm.slane %v1457, 2
    %v1462 = vperm.slane %v1457, 3
    %v1463 = vperm.slane %v1457, 4
    %v1464 = vperm.slane %v1457, 5
    %v1465 = vperm.slane %v1457, 6
    %v1466 = vperm.slane %v1457, 7
    %v1467 = vperm.slane %v1458, 0
    %v1468 = vperm.slane %v1458, 1
    %v1469 = vperm.slane %v1458, 2
    %vm1470 = vcmp.eq.s32.totalorder %v1459, 1
    %vm1471 = vcmp.eq.s32.totalorder %v1460, 1
    %vm1472 = vcmp.eq.s32.totalorder %v1461, 1
    %vm1473 = vcmp.eq.s32.totalorder %v1462, 1
    %vm1474 = vcmp.eq.s32.totalorder %v1463, 1
    %vm1475 = vcmp.eq.s32.totalorder %v1464, 1
    %vm1476 = vcmp.eq.s32.totalorder %v1465, 1
    %vm1477 = vcmp.eq.s32.totalorder %v1466, 1
    %vm1478 = vcmp.eq.s32.totalorder %v1467, 1
    %vm1479 = vcmp.eq.s32.totalorder %v1468, 1
    %vm1480 = vcmp.eq.s32.totalorder %v1469, 1
    %v1481 = vsel %vm1470, %v1370, %v1444
    %v1482 = vsel %vm1471, %v1349, %v1445
    %v1483 = vsel %vm1472, %v1350, %v1446
    %v1484 = vsel %vm1473, %v1351, %v1447
    %v1485 = vsel %vm1474, %v1352, %v1448
    %v1486 = vsel %vm1475, %v1353, %v1449
    %v1487 = vsel %vm1476, %v1354, %v1450
    %v1488 = vsel %vm1477, %v1355, %v1451
    %v1489 = vsel %vm1478, %v1356, %v1452
    %v1490 = vsel %vm1479, %v1357, %v1453
    %v1491 = vsel %vm1480, %v1371, %v1454
    %1503 = vrot.lane.b32.xlu0 %v1481, 36
    %v1504 = vpop.permute.xlu0 %1503
    %1505 = vrot.lane.b32.xlu0 %v1482, 36
    %v1506 = vpop.permute.xlu0 %1505
    %1507 = vrot.lane.b32.xlu0 %v1483, 36
    %v1508 = vpop.permute.xlu0 %1507
    %1509 = vrot.lane.b32.xlu0 %v1484, 36
    %v1510 = vpop.permute.xlu0 %1509
    %1511 = vrot.lane.b32.xlu0 %v1485, 36
    %v1512 = vpop.permute.xlu0 %1511
    %1513 = vrot.lane.b32.xlu0 %v1486, 36
    %v1514 = vpop.permute.xlu0 %1513
    %1515 = vrot.lane.b32.xlu0 %v1487, 36
    %v1516 = vpop.permute.xlu0 %1515
    %1517 = vrot.lane.b32.xlu0 %v1488, 36
    %v1518 = vpop.permute.xlu0 %1517
    %1519 = vrot.lane.b32.xlu0 %v1489, 36
    %v1520 = vpop.permute.xlu0 %1519
    %1521 = vrot.lane.b32.xlu0 %v1490, 36
    %v1522 = vpop.permute.xlu0 %1521
    %1523 = vrot.lane.b32.xlu0 %v1491, 36
    %v1524 = vpop.permute.xlu0 %1523
    %v1525 = vsel %vm147, %v1504, %v1506
    %v1526 = vsel %vm147, %v1506, %v1508
    %v1527 = vsel %vm147, %v1508, %v1510
    %v1528 = vsel %vm147, %v1510, %v1512
    %v1529 = vsel %vm147, %v1512, %v1514
    %v1530 = vsel %vm147, %v1514, %v1516
    %v1531 = vsel %vm147, %v1516, %v1518
    %v1532 = vsel %vm147, %v1518, %v1520
    %v1533 = vsel %vm147, %v1520, %v1522
    %v1534 = vsel %vm147, %v1522, %v1524
    %v1537 = vsel %vm147, 0.0, %v1504
    %v1538 = vsel %vm170, %v1534, 0.0
    %vm1539 = vcmp.eq.s32.totalorder %v100, 0
    %vm1540 = vcmp.eq.s32.totalorder %v101, 0
    %v1541 = vsel %vm1539, 1, 0
    %v1542 = vsel %vm1540, 1, 0
    %v1543 = vperm.slane %v1541, 0
    %v1544 = vperm.slane %v1541, 1
    %v1545 = vperm.slane %v1541, 2
    %v1546 = vperm.slane %v1541, 3
    %v1547 = vperm.slane %v1541, 4
    %v1548 = vperm.slane %v1541, 5
    %v1549 = vperm.slane %v1541, 6
    %v1550 = vperm.slane %v1541, 7
    %v1551 = vperm.slane %v1542, 0
    %v1552 = vperm.slane %v1542, 1
    %v1553 = vperm.slane %v1542, 2
    %vm1554 = vcmp.eq.s32.totalorder %v1543, 1
    %vm1555 = vcmp.eq.s32.totalorder %v1544, 1
    %vm1556 = vcmp.eq.s32.totalorder %v1545, 1
    %vm1557 = vcmp.eq.s32.totalorder %v1546, 1
    %vm1558 = vcmp.eq.s32.totalorder %v1547, 1
    %vm1559 = vcmp.eq.s32.totalorder %v1548, 1
    %vm1560 = vcmp.eq.s32.totalorder %v1549, 1
    %vm1561 = vcmp.eq.s32.totalorder %v1550, 1
    %vm1562 = vcmp.eq.s32.totalorder %v1551, 1
    %vm1563 = vcmp.eq.s32.totalorder %v1552, 1
    %vm1564 = vcmp.eq.s32.totalorder %v1553, 1
    %1567 = vrot.lane.b32.xlu0 %v1537, 90
    %v1568 = vpop.permute.xlu0 %1567
    %1569 = vrot.lane.b32.xlu0 %v1525, 90
    %v1570 = vpop.permute.xlu0 %1569
    %1571 = vrot.lane.b32.xlu0 %v1526, 90
    %v1572 = vpop.permute.xlu0 %1571
    %1573 = vrot.lane.b32.xlu0 %v1527, 90
    %v1574 = vpop.permute.xlu0 %1573
    %1575 = vrot.lane.b32.xlu0 %v1528, 90
    %v1576 = vpop.permute.xlu0 %1575
    %1577 = vrot.lane.b32.xlu0 %v1529, 90
    %v1578 = vpop.permute.xlu0 %1577
    %1579 = vrot.lane.b32.xlu0 %v1530, 90
    %v1580 = vpop.permute.xlu0 %1579
    %1581 = vrot.lane.b32.xlu0 %v1531, 90
    %v1582 = vpop.permute.xlu0 %1581
    %1583 = vrot.lane.b32.xlu0 %v1532, 90
    %v1584 = vpop.permute.xlu0 %1583
    %1585 = vrot.lane.b32.xlu0 %v1533, 90
    %v1586 = vpop.permute.xlu0 %1585
    %1587 = vrot.lane.b32.xlu0 %v1538, 90
    %v1588 = vpop.permute.xlu0 %1587
    %v1589 = vsel %vm581, %v1568, %v1570
    %v1590 = vsel %vm581, %v1570, %v1572
    %v1591 = vsel %vm581, %v1572, %v1574
    %v1592 = vsel %vm581, %v1574, %v1576
    %v1593 = vsel %vm581, %v1576, %v1578
    %v1594 = vsel %vm581, %v1578, %v1580
    %v1595 = vsel %vm581, %v1580, %v1582
    %v1596 = vsel %vm581, %v1582, %v1584
    %v1597 = vsel %vm581, %v1584, %v1586
    %v1598 = vsel %vm581, %v1586, %v1588
    %v1610 = vsel %vm1554, %v1589, %v1481
    %v1611 = vsel %vm1555, %v1590, %v1482
    %v1612 = vsel %vm1556, %v1591, %v1483
    %v1613 = vsel %vm1557, %v1592, %v1484
    %v1614 = vsel %vm1558, %v1593, %v1485
    %v1615 = vsel %vm1559, %v1594, %v1486
    %v1616 = vsel %vm1560, %v1595, %v1487
    %v1617 = vsel %vm1561, %v1596, %v1488
    %v1618 = vsel %vm1562, %v1597, %v1489
    %v1619 = vsel %vm1563, %v1598, %v1490
    %v1620 = vsel %vm1564, %v1588, %v1491
    %vm1621 = vcmp.eq.s32.totalorder %v100, 17
    %vm1622 = vcmp.eq.s32.totalorder %v101, 17
    %v1623 = vsel %vm1621, 1, 0
    %v1624 = vsel %vm1622, 1, 0
    %v1625 = vperm.slane %v1623, 0
    %v1626 = vperm.slane %v1623, 1
    %v1627 = vperm.slane %v1623, 2
    %v1628 = vperm.slane %v1623, 3
    %v1629 = vperm.slane %v1623, 4
    %v1630 = vperm.slane %v1623, 5
    %v1631 = vperm.slane %v1623, 6
    %v1632 = vperm.slane %v1623, 7
    %v1633 = vperm.slane %v1624, 0
    %v1634 = vperm.slane %v1624, 1
    %v1635 = vperm.slane %v1624, 2
    %vm1636 = vcmp.eq.s32.totalorder %v1625, 1
    %vm1637 = vcmp.eq.s32.totalorder %v1626, 1
    %vm1638 = vcmp.eq.s32.totalorder %v1627, 1
    %vm1639 = vcmp.eq.s32.totalorder %v1628, 1
    %vm1640 = vcmp.eq.s32.totalorder %v1629, 1
    %vm1641 = vcmp.eq.s32.totalorder %v1630, 1
    %vm1642 = vcmp.eq.s32.totalorder %v1631, 1
    %vm1643 = vcmp.eq.s32.totalorder %v1632, 1
    %vm1644 = vcmp.eq.s32.totalorder %v1633, 1
    %vm1645 = vcmp.eq.s32.totalorder %v1634, 1
    %vm1646 = vcmp.eq.s32.totalorder %v1635, 1
    %1647 = vrot.lane.b32.xlu0 %v1537, 94
    %v1648 = vpop.permute.xlu0 %1647
    %1649 = vrot.lane.b32.xlu0 %v1525, 94
    %v1650 = vpop.permute.xlu0 %1649
    %1651 = vrot.lane.b32.xlu0 %v1526, 94
    %v1652 = vpop.permute.xlu0 %1651
    %1653 = vrot.lane.b32.xlu0 %v1527, 94
    %v1654 = vpop.permute.xlu0 %1653
    %1655 = vrot.lane.b32.xlu0 %v1528, 94
    %v1656 = vpop.permute.xlu0 %1655
    %1657 = vrot.lane.b32.xlu0 %v1529, 94
    %v1658 = vpop.permute.xlu0 %1657
    %1659 = vrot.lane.b32.xlu0 %v1530, 94
    %v1660 = vpop.permute.xlu0 %1659
    %1661 = vrot.lane.b32.xlu0 %v1531, 94
    %v1662 = vpop.permute.xlu0 %1661
    %1663 = vrot.lane.b32.xlu0 %v1532, 94
    %v1664 = vpop.permute.xlu0 %1663
    %1665 = vrot.lane.b32.xlu0 %v1533, 94
    %v1666 = vpop.permute.xlu0 %1665
    %1667 = vrot.lane.b32.xlu0 %v1538, 94
    %v1668 = vpop.permute.xlu0 %1667
    %vm1669 = vcmask 769024
    %v1670 = vsel %vm1669, %v1648, %v1650
    %v1671 = vsel %vm1669, %v1650, %v1652
    %v1672 = vsel %vm1669, %v1652, %v1654
    %v1673 = vsel %vm1669, %v1654, %v1656
    %v1674 = vsel %vm1669, %v1656, %v1658
    %v1675 = vsel %vm1669, %v1658, %v1660
    %v1676 = vsel %vm1669, %v1660, %v1662
    %v1677 = vsel %vm1669, %v1662, %v1664
    %v1678 = vsel %vm1669, %v1664, %v1666
    %v1679 = vsel %vm1669, %v1666, %v1668
    %v1691 = vsel %vm1636, %v1670, %v1610
    %v1692 = vsel %vm1637, %v1671, %v1611
    %v1693 = vsel %vm1638, %v1672, %v1612
    %v1694 = vsel %vm1639, %v1673, %v1613
    %v1695 = vsel %vm1640, %v1674, %v1614
    %v1696 = vsel %vm1641, %v1675, %v1615
    %v1697 = vsel %vm1642, %v1676, %v1616
    %v1698 = vsel %vm1643, %v1677, %v1617
    %v1699 = vsel %vm1644, %v1678, %v1618
    %v1700 = vsel %vm1645, %v1679, %v1619
    %v1701 = vsel %vm1646, %v1668, %v1620
    %v1702 = vld [vmem:[#allocation4] sm:$0xf]
    %v1703 = vld [vmem:[%s10] sm:$0xff]
    %v1704 = vld [vmem:[%s11] sm:$0xff]
    %v1705 = vld [vmem:[%s12] sm:$0xff]
    %1717 = vrot.lane.b32.xlu0 %v1691, 36
    %v1718 = vpop.permute.xlu0 %1717
    %1719 = vrot.lane.b32.xlu0 %v1692, 36
    %v1720 = vpop.permute.xlu0 %1719
    %1721 = vrot.lane.b32.xlu0 %v1693, 36
    %v1722 = vpop.permute.xlu0 %1721
    %1723 = vrot.lane.b32.xlu0 %v1694, 36
    %v1724 = vpop.permute.xlu0 %1723
    %1725 = vrot.lane.b32.xlu0 %v1695, 36
    %v1726 = vpop.permute.xlu0 %1725
    %1727 = vrot.lane.b32.xlu0 %v1696, 36
    %v1728 = vpop.permute.xlu0 %1727
    %1729 = vrot.lane.b32.xlu0 %v1697, 36
    %v1730 = vpop.permute.xlu0 %1729
    %1731 = vrot.lane.b32.xlu0 %v1698, 36
    %v1732 = vpop.permute.xlu0 %1731
    %1733 = vrot.lane.b32.xlu0 %v1699, 36
    %v1734 = vpop.permute.xlu0 %1733
    %1735 = vrot.lane.b32.xlu0 %v1700, 36
    %v1736 = vpop.permute.xlu0 %1735
    %1737 = vrot.lane.b32.xlu0 %v1701, 36
    %v1738 = vpop.permute.xlu0 %1737
    %v1739 = vsel %vm147, %v1718, %v1720
    %v1740 = vsel %vm147, %v1720, %v1722
    %v1741 = vsel %vm147, %v1722, %v1724
    %v1742 = vsel %vm147, %v1724, %v1726
    %v1743 = vsel %vm147, %v1726, %v1728
    %v1744 = vsel %vm147, %v1728, %v1730
    %v1745 = vsel %vm147, %v1730, %v1732
    %v1746 = vsel %vm147, %v1732, %v1734
    %v1747 = vsel %vm147, %v1734, %v1736
    %v1748 = vsel %vm147, %v1736, %v1738
    %v1760 = vsel %vm147, 0.0, %v1718
    %v1761 = vsel %vm170, %v1748, 0.0
    %v1764 = vrot.slane %v1760, 4
    %v1765 = vrot.slane %v1739, 4
    %v1766 = vrot.slane %v1740, 4
    %v1767 = vrot.slane %v1741, 4
    %v1768 = vrot.slane %v1742, 4
    %v1769 = vrot.slane %v1743, 4
    %v1770 = vrot.slane %v1744, 4
    %v1771 = vrot.slane %v1745, 4
    %v1772 = vrot.slane %v1746, 4
    %v1773 = vrot.slane %v1747, 4
    %v1774 = vrot.slane %v1761, 4
    %1775 = vrot.lane.b32.xlu0 %v1764, 127
    %v1776 = vpop.permute.xlu0 %1775
    %1777 = vrot.lane.b32.xlu0 %v1765, 127
    %v1778 = vpop.permute.xlu0 %1777
    %1779 = vrot.lane.b32.xlu0 %v1766, 127
    %v1780 = vpop.permute.xlu0 %1779
    %1781 = vrot.lane.b32.xlu0 %v1767, 127
    %v1782 = vpop.permute.xlu0 %1781
    %1783 = vrot.lane.b32.xlu0 %v1768, 127
    %v1784 = vpop.permute.xlu0 %1783
    %1785 = vrot.lane.b32.xlu0 %v1769, 127
    %v1786 = vpop.permute.xlu0 %1785
    %1787 = vrot.lane.b32.xlu0 %v1770, 127
    %v1788 = vpop.permute.xlu0 %1787
    %1789 = vrot.lane.b32.xlu0 %v1771, 127
    %v1790 = vpop.permute.xlu0 %1789
    %1791 = vrot.lane.b32.xlu0 %v1772, 127
    %v1792 = vpop.permute.xlu0 %1791
    %1793 = vrot.lane.b32.xlu0 %v1773, 127
    %v1794 = vpop.permute.xlu0 %1793
    %1795 = vrot.lane.b32.xlu0 %v1774, 127
    %v1796 = vpop.permute.xlu0 %1795
    %v1797 = vsel %vm207, %v1776, %v1778
    %v1798 = vsel %vm207, %v1778, %v1780
    %v1799 = vsel %vm207, %v1780, %v1782
    %v1800 = vsel %vm207, %v1782, %v1784
    %v1801 = vsel %vm207, %v1784, %v1786
    %v1802 = vsel %vm207, %v1786, %v1788
    %v1803 = vsel %vm207, %v1788, %v1790
    %v1804 = vsel %vm207, %v1790, %v1792
    %v1805 = vsel %vm207, %v1792, %v1794
    %v1806 = vsel %vm207, %v1794, %v1796
    %1818 = vrot.lane.b32.xlu0 %v1760, 126
    %v1819 = vpop.permute.xlu0 %1818
    %1820 = vrot.lane.b32.xlu0 %v1739, 126
    %v1821 = vpop.permute.xlu0 %1820
    %1822 = vrot.lane.b32.xlu0 %v1740, 126
    %v1823 = vpop.permute.xlu0 %1822
    %1824 = vrot.lane.b32.xlu0 %v1741, 126
    %v1825 = vpop.permute.xlu0 %1824
    %1826 = vrot.lane.b32.xlu0 %v1742, 126
    %v1827 = vpop.permute.xlu0 %1826
    %1828 = vrot.lane.b32.xlu0 %v1743, 126
    %v1829 = vpop.permute.xlu0 %1828
    %1830 = vrot.lane.b32.xlu0 %v1744, 126
    %v1831 = vpop.permute.xlu0 %1830
    %1832 = vrot.lane.b32.xlu0 %v1745, 126
    %v1833 = vpop.permute.xlu0 %1832
    %1834 = vrot.lane.b32.xlu0 %v1746, 126
    %v1835 = vpop.permute.xlu0 %1834
    %1836 = vrot.lane.b32.xlu0 %v1747, 126
    %v1837 = vpop.permute.xlu0 %1836
    %1838 = vrot.lane.b32.xlu0 %v1761, 126
    %v1839 = vpop.permute.xlu0 %1838
    %v1840 = vsel %vm262, %v1819, %v1821
    %v1841 = vsel %vm262, %v1821, %v1823
    %v1842 = vsel %vm262, %v1823, %v1825
    %v1843 = vsel %vm262, %v1825, %v1827
    %v1844 = vsel %vm262, %v1827, %v1829
    %v1845 = vsel %vm262, %v1829, %v1831
    %v1846 = vsel %vm262, %v1831, %v1833
    %v1847 = vsel %vm262, %v1833, %v1835
    %v1848 = vsel %vm262, %v1835, %v1837
    %v1849 = vsel %vm262, %v1837, %v1839
    %1861 = vrot.lane.b32.xlu0 %v1764, 110
    %v1862 = vpop.permute.xlu0 %1861
    %1863 = vrot.lane.b32.xlu0 %v1765, 110
    %v1864 = vpop.permute.xlu0 %1863
    %1865 = vrot.lane.b32.xlu0 %v1766, 110
    %v1866 = vpop.permute.xlu0 %1865
    %1867 = vrot.lane.b32.xlu0 %v1767, 110
    %v1868 = vpop.permute.xlu0 %1867
    %1869 = vrot.lane.b32.xlu0 %v1768, 110
    %v1870 = vpop.permute.xlu0 %1869
    %1871 = vrot.lane.b32.xlu0 %v1769, 110
    %v1872 = vpop.permute.xlu0 %1871
    %1873 = vrot.lane.b32.xlu0 %v1770, 110
    %v1874 = vpop.permute.xlu0 %1873
    %1875 = vrot.lane.b32.xlu0 %v1771, 110
    %v1876 = vpop.permute.xlu0 %1875
    %1877 = vrot.lane.b32.xlu0 %v1772, 110
    %v1878 = vpop.permute.xlu0 %1877
    %1879 = vrot.lane.b32.xlu0 %v1773, 110
    %v1880 = vpop.permute.xlu0 %1879
    %1881 = vrot.lane.b32.xlu0 %v1774, 110
    %v1882 = vpop.permute.xlu0 %1881
    %v1883 = vsel %vm317, %v1862, %v1864
    %v1884 = vsel %vm317, %v1864, %v1866
    %v1885 = vsel %vm317, %v1866, %v1868
    %v1886 = vsel %vm317, %v1868, %v1870
    %v1887 = vsel %vm317, %v1870, %v1872
    %v1888 = vsel %vm317, %v1872, %v1874
    %v1889 = vsel %vm317, %v1874, %v1876
    %v1890 = vsel %vm317, %v1876, %v1878
    %v1891 = vsel %vm317, %v1878, %v1880
    %v1892 = vsel %vm317, %v1880, %v1882
    %1904 = vrot.lane.b32.xlu0 %v1760, 109
    %v1905 = vpop.permute.xlu0 %1904
    %1906 = vrot.lane.b32.xlu0 %v1739, 109
    %v1907 = vpop.permute.xlu0 %1906
    %1908 = vrot.lane.b32.xlu0 %v1740, 109
    %v1909 = vpop.permute.xlu0 %1908
    %1910 = vrot.lane.b32.xlu0 %v1741, 109
    %v1911 = vpop.permute.xlu0 %1910
    %1912 = vrot.lane.b32.xlu0 %v1742, 109
    %v1913 = vpop.permute.xlu0 %1912
    %1914 = vrot.lane.b32.xlu0 %v1743, 109
    %v1915 = vpop.permute.xlu0 %1914
    %1916 = vrot.lane.b32.xlu0 %v1744, 109
    %v1917 = vpop.permute.xlu0 %1916
    %1918 = vrot.lane.b32.xlu0 %v1745, 109
    %v1919 = vpop.permute.xlu0 %1918
    %1920 = vrot.lane.b32.xlu0 %v1746, 109
    %v1921 = vpop.permute.xlu0 %1920
    %1922 = vrot.lane.b32.xlu0 %v1747, 109
    %v1923 = vpop.permute.xlu0 %1922
    %1924 = vrot.lane.b32.xlu0 %v1761, 109
    %v1925 = vpop.permute.xlu0 %1924
    %v1926 = vsel %vm372, %v1905, %v1907
    %v1927 = vsel %vm372, %v1907, %v1909
    %v1928 = vsel %vm372, %v1909, %v1911
    %v1929 = vsel %vm372, %v1911, %v1913
    %v1930 = vsel %vm372, %v1913, %v1915
    %v1931 = vsel %vm372, %v1915, %v1917
    %v1932 = vsel %vm372, %v1917, %v1919
    %v1933 = vsel %vm372, %v1919, %v1921
    %v1934 = vsel %vm372, %v1921, %v1923
    %v1935 = vsel %vm372, %v1923, %v1925
    %1947 = vrot.lane.b32.xlu0 %v1764, 108
    %v1948 = vpop.permute.xlu0 %1947
    %1949 = vrot.lane.b32.xlu0 %v1765, 108
    %v1950 = vpop.permute.xlu0 %1949
    %1951 = vrot.lane.b32.xlu0 %v1766, 108
    %v1952 = vpop.permute.xlu0 %1951
    %1953 = vrot.lane.b32.xlu0 %v1767, 108
    %v1954 = vpop.permute.xlu0 %1953
    %1955 = vrot.lane.b32.xlu0 %v1768, 108
    %v1956 = vpop.permute.xlu0 %1955
    %1957 = vrot.lane.b32.xlu0 %v1769, 108
    %v1958 = vpop.permute.xlu0 %1957
    %1959 = vrot.lane.b32.xlu0 %v1770, 108
    %v1960 = vpop.permute.xlu0 %1959
    %1961 = vrot.lane.b32.xlu0 %v1771, 108
    %v1962 = vpop.permute.xlu0 %1961
    %1963 = vrot.lane.b32.xlu0 %v1772, 108
    %v1964 = vpop.permute.xlu0 %1963
    %1965 = vrot.lane.b32.xlu0 %v1773, 108
    %v1966 = vpop.permute.xlu0 %1965
    %1967 = vrot.lane.b32.xlu0 %v1774, 108
    %v1968 = vpop.permute.xlu0 %1967
    %v1969 = vsel %vm427, %v1948, %v1950
    %v1970 = vsel %vm427, %v1950, %v1952
    %v1971 = vsel %vm427, %v1952, %v1954
    %v1972 = vsel %vm427, %v1954, %v1956
    %v1973 = vsel %vm427, %v1956, %v1958
    %v1974 = vsel %vm427, %v1958, %v1960
    %v1975 = vsel %vm427, %v1960, %v1962
    %v1976 = vsel %vm427, %v1962, %v1964
    %v1977 = vsel %vm427, %v1964, %v1966
    %v1978 = vsel %vm427, %v1966, %v1968
    %1990 = vrot.lane.b32.xlu0 %v1760, 92
    %v1991 = vpop.permute.xlu0 %1990
    %1992 = vrot.lane.b32.xlu0 %v1739, 92
    %v1993 = vpop.permute.xlu0 %1992
    %1994 = vrot.lane.b32.xlu0 %v1740, 92
    %v1995 = vpop.permute.xlu0 %1994
    %1996 = vrot.lane.b32.xlu0 %v1741, 92
    %v1997 = vpop.permute.xlu0 %1996
    %1998 = vrot.lane.b32.xlu0 %v1742, 92
    %v1999 = vpop.permute.xlu0 %1998
    %2000 = vrot.lane.b32.xlu0 %v1743, 92
    %v2001 = vpop.permute.xlu0 %2000
    %2002 = vrot.lane.b32.xlu0 %v1744, 92
    %v2003 = vpop.permute.xlu0 %2002
    %2004 = vrot.lane.b32.xlu0 %v1745, 92
    %v2005 = vpop.permute.xlu0 %2004
    %2006 = vrot.lane.b32.xlu0 %v1746, 92
    %v2007 = vpop.permute.xlu0 %2006
    %2008 = vrot.lane.b32.xlu0 %v1747, 92
    %v2009 = vpop.permute.xlu0 %2008
    %2010 = vrot.lane.b32.xlu0 %v1761, 92
    %v2011 = vpop.permute.xlu0 %2010
    %v2012 = vsel %vm482, %v1991, %v1993
    %v2013 = vsel %vm482, %v1993, %v1995
    %v2014 = vsel %vm482, %v1995, %v1997
    %v2015 = vsel %vm482, %v1997, %v1999
    %v2016 = vsel %vm482, %v1999, %v2001
    %v2017 = vsel %vm482, %v2001, %v2003
    %v2018 = vsel %vm482, %v2003, %v2005
    %v2019 = vsel %vm482, %v2005, %v2007
    %v2020 = vsel %vm482, %v2007, %v2009
    %v2021 = vsel %vm482, %v2009, %v2011
    %2033 = vrot.lane.b32.xlu0 %v1764, 91
    %v2034 = vpop.permute.xlu0 %2033
    %2035 = vrot.lane.b32.xlu0 %v1765, 91
    %v2036 = vpop.permute.xlu0 %2035
    %2037 = vrot.lane.b32.xlu0 %v1766, 91
    %v2038 = vpop.permute.xlu0 %2037
    %2039 = vrot.lane.b32.xlu0 %v1767, 91
    %v2040 = vpop.permute.xlu0 %2039
    %2041 = vrot.lane.b32.xlu0 %v1768, 91
    %v2042 = vpop.permute.xlu0 %2041
    %2043 = vrot.lane.b32.xlu0 %v1769, 91
    %v2044 = vpop.permute.xlu0 %2043
    %2045 = vrot.lane.b32.xlu0 %v1770, 91
    %v2046 = vpop.permute.xlu0 %2045
    %2047 = vrot.lane.b32.xlu0 %v1771, 91
    %v2048 = vpop.permute.xlu0 %2047
    %2049 = vrot.lane.b32.xlu0 %v1772, 91
    %v2050 = vpop.permute.xlu0 %2049
    %2051 = vrot.lane.b32.xlu0 %v1773, 91
    %v2052 = vpop.permute.xlu0 %2051
    %2053 = vrot.lane.b32.xlu0 %v1774, 91
    %v2054 = vpop.permute.xlu0 %2053
    %v2055 = vsel %vm537, %v2034, %v2036
    %v2056 = vsel %vm537, %v2036, %v2038
    %v2057 = vsel %vm537, %v2038, %v2040
    %v2058 = vsel %vm537, %v2040, %v2042
    %v2059 = vsel %vm537, %v2042, %v2044
    %v2060 = vsel %vm537, %v2044, %v2046
    %v2061 = vsel %vm537, %v2046, %v2048
    %v2062 = vsel %vm537, %v2048, %v2050
    %v2063 = vsel %vm537, %v2050, %v2052
    %v2064 = vsel %vm537, %v2052, %v2054
    %2076 = vrot.lane.b32.xlu0 %v1760, 90
    %v2077 = vpop.permute.xlu0 %2076
    %2078 = vrot.lane.b32.xlu0 %v1739, 90
    %v2079 = vpop.permute.xlu0 %2078
    %2080 = vrot.lane.b32.xlu0 %v1740, 90
    %v2081 = vpop.permute.xlu0 %2080
    %2082 = vrot.lane.b32.xlu0 %v1741, 90
    %v2083 = vpop.permute.xlu0 %2082
    %2084 = vrot.lane.b32.xlu0 %v1742, 90
    %v2085 = vpop.permute.xlu0 %2084
    %2086 = vrot.lane.b32.xlu0 %v1743, 90
    %v2087 = vpop.permute.xlu0 %2086
    %2088 = vrot.lane.b32.xlu0 %v1744, 90
    %v2089 = vpop.permute.xlu0 %2088
    %2090 = vrot.lane.b32.xlu0 %v1745, 90
    %v2091 = vpop.permute.xlu0 %2090
    %2092 = vrot.lane.b32.xlu0 %v1746, 90
    %v2093 = vpop.permute.xlu0 %2092
    %2094 = vrot.lane.b32.xlu0 %v1747, 90
    %v2095 = vpop.permute.xlu0 %2094
    %2096 = vrot.lane.b32.xlu0 %v1761, 90
    %v2097 = vpop.permute.xlu0 %2096
    %v2098 = vsel %vm581, %v2077, %v2079
    %v2099 = vsel %vm581, %v2079, %v2081
    %v2100 = vsel %vm581, %v2081, %v2083
    %v2101 = vsel %vm581, %v2083, %v2085
    %v2102 = vsel %vm581, %v2085, %v2087
    %v2103 = vsel %vm581, %v2087, %v2089
    %v2104 = vsel %vm581, %v2089, %v2091
    %v2105 = vsel %vm581, %v2091, %v2093
    %v2106 = vsel %vm581, %v2093, %v2095
    %v2107 = vsel %vm581, %v2095, %v2097
    %v2119 = vsel %vm639, %v1760, %v1797
    %v2120 = vsel %vm639, %v1739, %v1798
    %v2121 = vsel %vm639, %v1740, %v1799
    %v2122 = vsel %vm639, %v1741, %v1800
    %v2123 = vsel %vm639, %v1742, %v1801
    %v2124 = vsel %vm639, %v1743, %v1802
    %v2125 = vsel %vm639, %v1744, %v1803
    %v2126 = vsel %vm639, %v1745, %v1804
    %v2127 = vsel %vm639, %v1746, %v1805
    %v2128 = vsel %vm639, %v1747, %v1806
    %v2129 = vsel %vm639, %v1761, %v1796
    %v2130 = vsel %vm639, %v1840, %v1883
    %v2131 = vsel %vm639, %v1841, %v1884
    %v2132 = vsel %vm639, %v1842, %v1885
    %v2133 = vsel %vm639, %v1843, %v1886
    %v2134 = vsel %vm639, %v1844, %v1887
    %v2135 = vsel %vm639, %v1845, %v1888
    %v2136 = vsel %vm639, %v1846, %v1889
    %v2137 = vsel %vm639, %v1847, %v1890
    %v2138 = vsel %vm639, %v1848, %v1891
    %v2139 = vsel %vm639, %v1849, %v1892
    %v2140 = vsel %vm639, %v1839, %v1882
    %v2141 = vsel %vm639, %v1926, %v1969
    %v2142 = vsel %vm639, %v1927, %v1970
    %v2143 = vsel %vm639, %v1928, %v1971
    %v2144 = vsel %vm639, %v1929, %v1972
    %v2145 = vsel %vm639, %v1930, %v1973
    %v2146 = vsel %vm639, %v1931, %v1974
    %v2147 = vsel %vm639, %v1932, %v1975
    %v2148 = vsel %vm639, %v1933, %v1976
    %v2149 = vsel %vm639, %v1934, %v1977
    %v2150 = vsel %vm639, %v1935, %v1978
    %v2151 = vsel %vm639, %v1925, %v1968
    %v2152 = vsel %vm639, %v2012, %v2055
    %v2153 = vsel %vm639, %v2013, %v2056
    %v2154 = vsel %vm639, %v2014, %v2057
    %v2155 = vsel %vm639, %v2015, %v2058
    %v2156 = vsel %vm639, %v2016, %v2059
    %v2157 = vsel %vm639, %v2017, %v2060
    %v2158 = vsel %vm639, %v2018, %v2061
    %v2159 = vsel %vm639, %v2019, %v2062
    %v2160 = vsel %vm639, %v2020, %v2063
    %v2161 = vsel %vm639, %v2021, %v2064
    %v2162 = vsel %vm639, %v2011, %v2054
    %v2163 = vpack.c.bf16 %v2130, %v2119
    %v2164 = vpack.c.bf16 %v2131, %v2120
    %v2165 = vpack.c.bf16 %v2132, %v2121
    %v2166 = vpack.c.bf16 %v2133, %v2122
    %v2167 = vpack.c.bf16 %v2134, %v2123
    %v2168 = vpack.c.bf16 %v2135, %v2124
    %v2169 = vpack.c.bf16 %v2136, %v2125
    %v2170 = vpack.c.bf16 %v2137, %v2126
    %v2171 = vpack.c.bf16 %v2138, %v2127
    %v2172 = vpack.c.bf16 %v2139, %v2128
    %v2173 = vpack.c.bf16 %v2140, %v2129
    %v2174 = vpack.c.bf16 %v2152, %v2141
    %v2175 = vpack.c.bf16 %v2153, %v2142
    %v2176 = vpack.c.bf16 %v2154, %v2143
    %v2177 = vpack.c.bf16 %v2155, %v2144
    %v2178 = vpack.c.bf16 %v2156, %v2145
    %v2179 = vpack.c.bf16 %v2157, %v2146
    %v2180 = vpack.c.bf16 %v2158, %v2147
    %v2181 = vpack.c.bf16 %v2159, %v2148
    %v2182 = vpack.c.bf16 %v2160, %v2149
    %v2183 = vpack.c.bf16 %v2161, %v2150
    %v2184 = vpack.c.bf16 %v2162, %v2151
    %v2185 = vpack.c.bf16 %v2098, %v2098
    %v2186 = vpack.c.bf16 %v2099, %v2099
    %v2187 = vpack.c.bf16 %v2100, %v2100
    %v2188 = vpack.c.bf16 %v2101, %v2101
    %v2189 = vpack.c.bf16 %v2102, %v2102
    %v2190 = vpack.c.bf16 %v2103, %v2103
    %v2191 = vpack.c.bf16 %v2104, %v2104
    %v2192 = vpack.c.bf16 %v2105, %v2105
    %v2193 = vpack.c.bf16 %v2106, %v2106
    %v2194 = vpack.c.bf16 %v2107, %v2107
    %v2195 = vpack.c.bf16 %v2097, %v2097
    %2197 = vset.pattern.permute.xlu0 0
    %2198 = vperm.xlu0 %2197, %v1703
    %v2199 = vpop.permute.xlu0 %2198
    %2234 = vrot.lane.b32.xlu0 %v2163, 111
    %v2235 = vpop.permute.xlu0 %2234
    %2236 = vrot.lane.b32.xlu0 %v2164, 111
    %v2237 = vpop.permute.xlu0 %2236
    %2238 = vrot.lane.b32.xlu0 %v2165, 111
    %v2239 = vpop.permute.xlu0 %2238
    %2240 = vrot.lane.b32.xlu0 %v2166, 111
    %v2241 = vpop.permute.xlu0 %2240
    %2242 = vrot.lane.b32.xlu0 %v2167, 111
    %v2243 = vpop.permute.xlu0 %2242
    %2244 = vrot.lane.b32.xlu0 %v2168, 111
    %v2245 = vpop.permute.xlu0 %2244
    %2246 = vrot.lane.b32.xlu0 %v2169, 111
    %v2247 = vpop.permute.xlu0 %2246
    %2248 = vrot.lane.b32.xlu0 %v2170, 111
    %v2249 = vpop.permute.xlu0 %2248
    %2250 = vrot.lane.b32.xlu0 %v2171, 111
    %v2251 = vpop.permute.xlu0 %2250
    %2252 = vrot.lane.b32.xlu0 %v2172, 111
    %v2253 = vpop.permute.xlu0 %2252
    %2254 = vrot.lane.b32.xlu0 %v2173, 111
    %v2255 = vpop.permute.xlu0 %2254
    %2256 = vrot.lane.b32.xlu0 %v2174, 111
    %v2257 = vpop.permute.xlu0 %2256
    %2258 = vrot.lane.b32.xlu0 %v2175, 111
    %v2259 = vpop.permute.xlu0 %2258
    %2260 = vrot.lane.b32.xlu0 %v2176, 111
    %v2261 = vpop.permute.xlu0 %2260
    %2262 = vrot.lane.b32.xlu0 %v2177, 111
    %v2263 = vpop.permute.xlu0 %2262
    %2264 = vrot.lane.b32.xlu0 %v2178, 111
    %v2265 = vpop.permute.xlu0 %2264
    %2266 = vrot.lane.b32.xlu0 %v2179, 111
    %v2267 = vpop.permute.xlu0 %2266
    %2268 = vrot.lane.b32.xlu0 %v2180, 111
    %v2269 = vpop.permute.xlu0 %2268
    %2270 = vrot.lane.b32.xlu0 %v2181, 111
    %v2271 = vpop.permute.xlu0 %2270
    %2272 = vrot.lane.b32.xlu0 %v2182, 111
    %v2273 = vpop.permute.xlu0 %2272
    %2274 = vrot.lane.b32.xlu0 %v2183, 111
    %v2275 = vpop.permute.xlu0 %2274
    %2276 = vrot.lane.b32.xlu0 %v2184, 111
    %v2277 = vpop.permute.xlu0 %2276
    %2278 = vrot.lane.b32.xlu0 %v2185, 111
    %v2279 = vpop.permute.xlu0 %2278
    %2280 = vrot.lane.b32.xlu0 %v2186, 111
    %v2281 = vpop.permute.xlu0 %2280
    %2282 = vrot.lane.b32.xlu0 %v2187, 111
    %v2283 = vpop.permute.xlu0 %2282
    %2284 = vrot.lane.b32.xlu0 %v2188, 111
    %v2285 = vpop.permute.xlu0 %2284
    %2286 = vrot.lane.b32.xlu0 %v2189, 111
    %v2287 = vpop.permute.xlu0 %2286
    %2288 = vrot.lane.b32.xlu0 %v2190, 111
    %v2289 = vpop.permute.xlu0 %2288
    %2290 = vrot.lane.b32.xlu0 %v2191, 111
    %v2291 = vpop.permute.xlu0 %2290
    %2292 = vrot.lane.b32.xlu0 %v2192, 111
    %v2293 = vpop.permute.xlu0 %2292
    %2294 = vrot.lane.b32.xlu0 %v2193, 111
    %v2295 = vpop.permute.xlu0 %2294
    %2296 = vrot.lane.b32.xlu0 %v2194, 111
    %v2297 = vpop.permute.xlu0 %2296
    %2298 = vrot.lane.b32.xlu0 %v2195, 111
    %v2299 = vpop.permute.xlu0 %2298
    %v2300 = vsel %vm736, %v2235, %v2237
    %v2301 = vsel %vm736, %v2237, %v2239
    %v2302 = vsel %vm736, %v2239, %v2241
    %v2303 = vsel %vm736, %v2241, %v2243
    %v2304 = vsel %vm736, %v2243, %v2245
    %v2305 = vsel %vm736, %v2245, %v2247
    %v2306 = vsel %vm736, %v2247, %v2249
    %v2307 = vsel %vm736, %v2249, %v2251
    %v2308 = vsel %vm736, %v2251, %v2253
    %v2309 = vsel %vm736, %v2253, %v2255
    %v2310 = vsel %vm736, %v2257, %v2259
    %v2311 = vsel %vm736, %v2259, %v2261
    %v2312 = vsel %vm736, %v2261, %v2263
    %v2313 = vsel %vm736, %v2263, %v2265
    %v2314 = vsel %vm736, %v2265, %v2267
    %v2315 = vsel %vm736, %v2267, %v2269
    %v2316 = vsel %vm736, %v2269, %v2271
    %v2317 = vsel %vm736, %v2271, %v2273
    %v2318 = vsel %vm736, %v2273, %v2275
    %v2319 = vsel %vm736, %v2275, %v2277
    %v2320 = vsel %vm736, %v2279, %v2281
    %v2321 = vsel %vm736, %v2281, %v2283
    %v2322 = vsel %vm736, %v2283, %v2285
    %v2323 = vsel %vm736, %v2285, %v2287
    %v2324 = vsel %vm736, %v2287, %v2289
    %v2325 = vsel %vm736, %v2289, %v2291
    %v2326 = vsel %vm736, %v2291, %v2293
    %v2327 = vsel %vm736, %v2293, %v2295
    %v2328 = vsel %vm736, %v2295, %v2297
    %v2329 = vsel %vm736, %v2297, %v2299
    %v2353 = vsel %vm147, %v1702, 0
    %v2356 = vsel %vm615, %v2320, 0
    %v2359 = vsel %vm615, %v2321, 0
    %v2362 = vsel %vm615, %v2322, 0
    %v2365 = vsel %vm615, %v2323, 0
    %v2368 = vsel %vm615, %v2324, 0
    %v2371 = vsel %vm615, %v2325, 0
    %v2374 = vsel %vm615, %v2326, 0
    %v2377 = vsel %vm615, %v2327, 0
    %v2380 = vsel %vm615, %v2328, 0
    %v2383 = vsel %vm615, %v2329, 0
    %v2386 = vsel %vm615, %v2299, 0
    %2388 = vmatpush.bf16.msra.mxu0 0
    %2389 = vmatpush.bf16.msra.mxu0 0
    %2390 = vmatpush.bf16.msra.mxu0 0
    %2391 = vmatpush.bf16.msra.mxu0 0
    %2392 = vmatpush.bf16.msra.mxu0 0
    %2393 = vmatpush.bf16.msra.mxu0 %v2356
    %2394 = vmatpush.bf16.msra.mxu0 %v2310
    %2395 = vmatpush.bf16.msra.mxu0 %v2300
    %2396 = vmatmul.bf16.gmra.mxu0 %v2353
    %v2397 = vpop.f32.mrf.mxu0
    %v2398 = vadd.f32 %v2199, %v2397
    %v2399 = vpop.f32.mrf.mxu0
    %2400 = vdwg.mxu0
    %2401 = vmatpush.bf16.msra.mxu0 0
    %2402 = vmatpush.bf16.msra.mxu0 0
    %2403 = vmatpush.bf16.msra.mxu0 0
    %2404 = vmatpush.bf16.msra.mxu0 0
    %2405 = vmatpush.bf16.msra.mxu0 0
    %2406 = vmatpush.bf16.msra.mxu0 %v2359
    %2407 = vmatpush.bf16.msra.mxu0 %v2311
    %2408 = vmatpush.bf16.msra.mxu0 %v2301
    %2409 = vmatmul.bf16.gmra.mxu0 %v2353
    %v2410 = vpop.f32.mrf.mxu0
    %v2411 = vadd.f32 %v2199, %v2410
    %v2412 = vpop.f32.mrf.mxu0
    %2413 = vdwg.mxu0
    %2414 = vmatpush.bf16.msra.mxu0 0
    %2415 = vmatpush.bf16.msra.mxu0 0
    %2416 = vmatpush.bf16.msra.mxu0 0
    %2417 = vmatpush.bf16.msra.mxu0 0
    %2418 = vmatpush.bf16.msra.mxu0 0
    %2419 = vmatpush.bf16.msra.mxu0 %v2362
    %2420 = vmatpush.bf16.msra.mxu0 %v2312
    %2421 = vmatpush.bf16.msra.mxu0 %v2302
    %2422 = vmatmul.bf16.gmra.mxu0 %v2353
    %v2423 = vpop.f32.mrf.mxu0
    %v2424 = vadd.f32 %v2199, %v2423
    %v2425 = vpop.f32.mrf.mxu0
    %2426 = vdwg.mxu0
    %2427 = vmatpush.bf16.msra.mxu0 0
    %2428 = vmatpush.bf16.msra.mxu0 0
    %2429 = vmatpush.bf16.msra.mxu0 0
    %2430 = vmatpush.bf16.msra.mxu0 0
    %2431 = vmatpush.bf16.msra.mxu0 0
    %2432 = vmatpush.bf16.msra.mxu0 %v2365
    %2433 = vmatpush.bf16.msra.mxu0 %v2313
    %2434 = vmatpush.bf16.msra.mxu0 %v2303
    %2435 = vmatmul.bf16.gmra.mxu0 %v2353
    %v2436 = vpop.f32.mrf.mxu0
    %v2437 = vadd.f32 %v2199, %v2436
    %v2438 = vpop.f32.mrf.mxu0
    %2439 = vdwg.mxu0
    %2440 = vmatpush.bf16.msra.mxu0 0
    %2441 = vmatpush.bf16.msra.mxu0 0
    %2442 = vmatpush.bf16.msra.mxu0 0
    %2443 = vmatpush.bf16.msra.mxu0 0
    %2444 = vmatpush.bf16.msra.mxu0 0
    %2445 = vmatpush.bf16.msra.mxu0 %v2368
    %2446 = vmatpush.bf16.msra.mxu0 %v2314
    %2447 = vmatpush.bf16.msra.mxu0 %v2304
    %2448 = vmatmul.bf16.gmra.mxu0 %v2353
    %v2449 = vpop.f32.mrf.mxu0
    %v2450 = vadd.f32 %v2199, %v2449
    %v2451 = vpop.f32.mrf.mxu0
    %2452 = vdwg.mxu0
    %2453 = vmatpush.bf16.msra.mxu0 0
    %2454 = vmatpush.bf16.msra.mxu0 0
    %2455 = vmatpush.bf16.msra.mxu0 0
    %2456 = vmatpush.bf16.msra.mxu0 0
    %2457 = vmatpush.bf16.msra.mxu0 0
    %2458 = vmatpush.bf16.msra.mxu0 %v2371
    %2459 = vmatpush.bf16.msra.mxu0 %v2315
    %2460 = vmatpush.bf16.msra.mxu0 %v2305
    %2461 = vmatmul.bf16.gmra.mxu0 %v2353
    %v2462 = vpop.f32.mrf.mxu0
    %v2463 = vadd.f32 %v2199, %v2462
    %v2464 = vpop.f32.mrf.mxu0
    %2465 = vdwg.mxu0
    %2466 = vmatpush.bf16.msra.mxu0 0
    %2467 = vmatpush.bf16.msra.mxu0 0
    %2468 = vmatpush.bf16.msra.mxu0 0
    %2469 = vmatpush.bf16.msra.mxu0 0
    %2470 = vmatpush.bf16.msra.mxu0 0
    %2471 = vmatpush.bf16.msra.mxu0 %v2374
    %2472 = vmatpush.bf16.msra.mxu0 %v2316
    %2473 = vmatpush.bf16.msra.mxu0 %v2306
    %2474 = vmatmul.bf16.gmra.mxu0 %v2353
    %v2475 = vpop.f32.mrf.mxu0
    %v2476 = vadd.f32 %v2199, %v2475
    %v2477 = vpop.f32.mrf.mxu0
    %2478 = vdwg.mxu0
    %2479 = vmatpush.bf16.msra.mxu0 0
    %2480 = vmatpush.bf16.msra.mxu0 0
    %2481 = vmatpush.bf16.msra.mxu0 0
    %2482 = vmatpush.bf16.msra.mxu0 0
    %2483 = vmatpush.bf16.msra.mxu0 0
    %2484 = vmatpush.bf16.msra.mxu0 %v2377
    %2485 = vmatpush.bf16.msra.mxu0 %v2317
    %2486 = vmatpush.bf16.msra.mxu0 %v2307
    %2487 = vmatmul.bf16.gmra.mxu0 %v2353
    %v2488 = vpop.f32.mrf.mxu0
    %v2489 = vadd.f32 %v2199, %v2488
    %v2490 = vpop.f32.mrf.mxu0
    %2491 = vdwg.mxu0
    %2492 = vmatpush.bf16.msra.mxu0 0
    %2493 = vmatpush.bf16.msra.mxu0 0
    %2494 = vmatpush.bf16.msra.mxu0 0
    %2495 = vmatpush.bf16.msra.mxu0 0
    %2496 = vmatpush.bf16.msra.mxu0 0
    %2497 = vmatpush.bf16.msra.mxu0 %v2380
    %2498 = vmatpush.bf16.msra.mxu0 %v2318
    %2499 = vmatpush.bf16.msra.mxu0 %v2308
    %2500 = vmatmul.bf16.gmra.mxu0 %v2353
    %v2501 = vpop.f32.mrf.mxu0
    %v2502 = vadd.f32 %v2199, %v2501
    %v2503 = vpop.f32.mrf.mxu0
    %2504 = vdwg.mxu0
    %2505 = vmatpush.bf16.msra.mxu0 0
    %2506 = vmatpush.bf16.msra.mxu0 0
    %2507 = vmatpush.bf16.msra.mxu0 0
    %2508 = vmatpush.bf16.msra.mxu0 0
    %2509 = vmatpush.bf16.msra.mxu0 0
    %2510 = vmatpush.bf16.msra.mxu0 %v2383
    %2511 = vmatpush.bf16.msra.mxu0 %v2319
    %2512 = vmatpush.bf16.msra.mxu0 %v2309
    %2513 = vmatmul.bf16.gmra.mxu0 %v2353
    %v2514 = vpop.f32.mrf.mxu0
    %v2515 = vadd.f32 %v2199, %v2514
    %v2516 = vpop.f32.mrf.mxu0
    %2517 = vdwg.mxu0
    %2518 = vmatpush.bf16.msra.mxu0 0
    %2519 = vmatpush.bf16.msra.mxu0 0
    %2520 = vmatpush.bf16.msra.mxu0 0
    %2521 = vmatpush.bf16.msra.mxu0 0
    %2522 = vmatpush.bf16.msra.mxu0 0
    %2523 = vmatpush.bf16.msra.mxu0 %v2386
    %2524 = vmatpush.bf16.msra.mxu0 %v2277
    %2525 = vmatpush.bf16.msra.mxu0 %v2255
    %2526 = vmatmul.bf16.gmra.mxu0 %v2353
    %v2527 = vpop.f32.mrf.mxu0
    %v2528 = vadd.f32 %v2199, %v2527
    %v2529 = vpop.f32.mrf.mxu0
    %2530 = vdwg.mxu0
    %v2531 = vmax.f32 %v2398, 0.0
    %v2532 = vmax.f32 %v2411, 0.0
    %v2533 = vmax.f32 %v2424, 0.0
    %v2534 = vmax.f32 %v2437, 0.0
    %v2535 = vmax.f32 %v2450, 0.0
    %v2536 = vmax.f32 %v2463, 0.0
    %v2537 = vmax.f32 %v2476, 0.0
    %v2538 = vmax.f32 %v2489, 0.0
    %v2539 = vmax.f32 %v2502, 0.0
    %v2540 = vmax.f32 %v2515, 0.0
    %v2541 = vmax.f32 %v2528, 0.0
    %v2542 = vmul.f32 %v2531, %v942
    %v2543 = vmul.f32 %v2532, %v943
    %v2544 = vmul.f32 %v2533, %v944
    %v2545 = vmul.f32 %v2534, %v945
    %v2546 = vmul.f32 %v2535, %v946
    %v2547 = vmul.f32 %v2536, %v947
    %v2548 = vmul.f32 %v2537, %v948
    %v2549 = vmul.f32 %v2538, %v949
    %v2550 = vmul.f32 %v2539, %v950
    %v2551 = vmul.f32 %v2540, %v951
    %v2552 = vmul.f32 %v2541, %v952
    %v2553 = vadd.f32 %v2542, %v2543
    %v2554 = vadd.f32 %v2553, %v2544
    %v2555 = vadd.f32 %v2554, %v2545
    %v2556 = vadd.f32 %v2555, %v2546
    %v2557 = vadd.f32 %v2556, %v2547
    %v2558 = vadd.f32 %v2557, %v2548
    %v2559 = vadd.f32 %v2558, %v2549
    %v2560 = vadd.f32 %v2559, %v2550
    %v2561 = vadd.f32 %v2560, %v2551
    %vm2562 = vcmask 130048
    %v2563 = vsel %vm2562, %v2552, 0.0
    %v2564 = vadd.f32 %v2561, %v2563
    %2565 = vadd.xlane.f32.xlu0 %v2564
    %v2566 = vpop.xlane.xlu0 %2565
    %v2567 = vmul.f32 %v2566, %v1005
    %v2568 = vsub.f32 %v2531, %v2567
    %v2569 = vsub.f32 %v2532, %v2567
    %v2570 = vsub.f32 %v2533, %v2567
    %v2571 = vsub.f32 %v2534, %v2567
    %v2572 = vsub.f32 %v2535, %v2567
    %v2573 = vsub.f32 %v2536, %v2567
    %v2574 = vsub.f32 %v2537, %v2567
    %v2575 = vsub.f32 %v2538, %v2567
    %v2576 = vsub.f32 %v2539, %v2567
    %v2577 = vsub.f32 %v2540, %v2567
    %v2578 = vsub.f32 %v2541, %v2567
    %v2579 = vmul.f32 %v2568, %v2568
    %v2580 = vmul.f32 %v2569, %v2569
    %v2581 = vmul.f32 %v2570, %v2570
    %v2582 = vmul.f32 %v2571, %v2571
    %v2583 = vmul.f32 %v2572, %v2572
    %v2584 = vmul.f32 %v2573, %v2573
    %v2585 = vmul.f32 %v2574, %v2574
    %v2586 = vmul.f32 %v2575, %v2575
    %v2587 = vmul.f32 %v2576, %v2576
    %v2588 = vmul.f32 %v2577, %v2577
    %v2589 = vmul.f32 %v2578, %v2578
    %v2590 = vmul.f32 %v942, %v2579
    %v2591 = vmul.f32 %v943, %v2580
    %v2592 = vmul.f32 %v944, %v2581
    %v2593 = vmul.f32 %v945, %v2582
    %v2594 = vmul.f32 %v946, %v2583
    %v2595 = vmul.f32 %v947, %v2584
    %v2596 = vmul.f32 %v948, %v2585
    %v2597 = vmul.f32 %v949, %v2586
    %v2598 = vmul.f32 %v950, %v2587
    %v2599 = vmul.f32 %v951, %v2588
    %v2600 = vmul.f32 %v952, %v2589
    %v2601 = vadd.f32 %v2590, %v2591
    %v2602 = vadd.f32 %v2601, %v2592
    %v2603 = vadd.f32 %v2602, %v2593
    %v2604 = vadd.f32 %v2603, %v2594
    %v2605 = vadd.f32 %v2604, %v2595
    %v2606 = vadd.f32 %v2605, %v2596
    %v2607 = vadd.f32 %v2606, %v2597
    %v2608 = vadd.f32 %v2607, %v2598
    %v2609 = vadd.f32 %v2608, %v2599
    %v2610 = vsel %vm2562, %v2600, 0.0
    %v2611 = vadd.f32 %v2609, %v2610
    %2612 = vadd.xlane.f32.xlu0 %v2611
    %v2613 = vpop.xlane.xlu0 %2612
    %v2614 = vmul.f32 %v2613, %v1005
    %v2615 = vadd.f32 %v2614, 1e-05
    %v2616 = vrsqrt.pop %v2615
    %v2617 = vmul.f32 %v2616, %v2615
    %v2618 = vmul.f32 %v2617, %v2616
    %v2619 = vmul.f32 0.5, %v2618
    %v2620 = vsub.f32 1.5, %v2619
    %v2621 = vmul.f32 %v2616, %v2620
    %vm2622 = vweird.f32 %v2615
    %vm2623 = vweird.f32 %v2616
    %vm2624 = vmor %vm2622, %vm2623
    %v2625 = vsel %vm2624, %v2616, %v2621
    %v2626 = vmul.f32 %v1704, %v2625
    %v2627 = vmul.f32 %v2567, %v2626
    %v2628 = vsub.f32 %v1705, %v2627
    %v2629 = vmul.f32 %v2531, %v1080
    %v2630 = vmul.f32 %v2532, %v1081
    %v2631 = vmul.f32 %v2533, %v1082
    %v2632 = vmul.f32 %v2534, %v1083
    %v2633 = vmul.f32 %v2535, %v1084
    %v2634 = vmul.f32 %v2536, %v1085
    %v2635 = vmul.f32 %v2537, %v1086
    %v2636 = vmul.f32 %v2538, %v1087
    %v2637 = vmul.f32 %v2539, %v1088
    %v2638 = vmul.f32 %v2540, %v1089
    %v2639 = vmul.f32 %v2541, %v1090
    %v2640 = vadd.f32 %v2629, %v2630
    %v2641 = vadd.f32 %v2640, %v2631
    %v2642 = vadd.f32 %v2641, %v2632
    %v2643 = vadd.f32 %v2642, %v2633
    %v2644 = vadd.f32 %v2643, %v2634
    %v2645 = vadd.f32 %v2644, %v2635
    %v2646 = vadd.f32 %v2645, %v2636
    %v2647 = vadd.f32 %v2646, %v2637
    %v2648 = vadd.f32 %v2647, %v2638
    %v2649 = vsel %vm2562, %v2639, 0.0
    %v2650 = vadd.f32 %v2648, %v2649
    %2651 = vadd.xlane.f32.xlu0 %v2650
    %v2652 = vpop.xlane.xlu0 %2651
    %v2653 = vmul.f32 %v2652, %v1005
    %v2654 = vsub.f32 %v2531, %v2653
    %v2655 = vsub.f32 %v2532, %v2653
    %v2656 = vsub.f32 %v2533, %v2653
    %v2657 = vsub.f32 %v2534, %v2653
    %v2658 = vsub.f32 %v2535, %v2653
    %v2659 = vsub.f32 %v2536, %v2653
    %v2660 = vsub.f32 %v2537, %v2653
    %v2661 = vsub.f32 %v2538, %v2653
    %v2662 = vsub.f32 %v2539, %v2653
    %v2663 = vsub.f32 %v2540, %v2653
    %v2664 = vsub.f32 %v2541, %v2653
    %v2665 = vmul.f32 %v2654, %v2654
    %v2666 = vmul.f32 %v2655, %v2655
    %v2667 = vmul.f32 %v2656, %v2656
    %v2668 = vmul.f32 %v2657, %v2657
    %v2669 = vmul.f32 %v2658, %v2658
    %v2670 = vmul.f32 %v2659, %v2659
    %v2671 = vmul.f32 %v2660, %v2660
    %v2672 = vmul.f32 %v2661, %v2661
    %v2673 = vmul.f32 %v2662, %v2662
    %v2674 = vmul.f32 %v2663, %v2663
    %v2675 = vmul.f32 %v2664, %v2664
    %v2676 = vmul.f32 %v1080, %v2665
    %v2677 = vmul.f32 %v1081, %v2666
    %v2678 = vmul.f32 %v1082, %v2667
    %v2679 = vmul.f32 %v1083, %v2668
    %v2680 = vmul.f32 %v1084, %v2669
    %v2681 = vmul.f32 %v1085, %v2670
    %v2682 = vmul.f32 %v1086, %v2671
    %v2683 = vmul.f32 %v1087, %v2672
    %v2684 = vmul.f32 %v1088, %v2673
    %v2685 = vmul.f32 %v1089, %v2674
    %v2686 = vmul.f32 %v1090, %v2675
    %v2687 = vadd.f32 %v2676, %v2677
    %v2688 = vadd.f32 %v2687, %v2678
    %v2689 = vadd.f32 %v2688, %v2679
    %v2690 = vadd.f32 %v2689, %v2680
    %v2691 = vadd.f32 %v2690, %v2681
    %v2692 = vadd.f32 %v2691, %v2682
    %v2693 = vadd.f32 %v2692, %v2683
    %v2694 = vadd.f32 %v2693, %v2684
    %v2695 = vadd.f32 %v2694, %v2685
    %v2696 = vsel %vm2562, %v2686, 0.0
    %v2697 = vadd.f32 %v2695, %v2696
    %2698 = vadd.xlane.f32.xlu0 %v2697
    %v2699 = vpop.xlane.xlu0 %2698
    %v2700 = vmul.f32 %v2699, %v1005
    %v2701 = vadd.f32 %v2700, 1e-05
    %v2702 = vrsqrt.pop %v2701
    %v2703 = vmul.f32 %v2702, %v2701
    %v2704 = vmul.f32 %v2703, %v2702
    %v2705 = vmul.f32 0.5, %v2704
    %v2706 = vsub.f32 1.5, %v2705
    %v2707 = vmul.f32 %v2702, %v2706
    %vm2708 = vweird.f32 %v2701
    %vm2709 = vweird.f32 %v2702
    %vm2710 = vmor %vm2708, %vm2709
    %v2711 = vsel %vm2710, %v2702, %v2707
    %v2712 = vmul.f32 %v1704, %v2711
    %v2713 = vmul.f32 %v2653, %v2712
    %v2714 = vsub.f32 %v1705, %v2713
    %2716 = vset.pattern.permute.xlu0 0
    %2717 = vperm.xlu0 %2716, %v2626
    %v2718 = vpop.permute.xlu0 %2717
    %v2720 = vmul.f32 %v2718, %v942
    %v2721 = vmul.f32 %v2718, %v943
    %v2722 = vmul.f32 %v2718, %v944
    %v2723 = vmul.f32 %v2718, %v945
    %v2724 = vmul.f32 %v2718, %v946
    %v2725 = vmul.f32 %v2718, %v947
    %v2726 = vmul.f32 %v2718, %v948
    %v2727 = vmul.f32 %v2718, %v949
    %v2728 = vmul.f32 %v2718, %v950
    %v2729 = vmul.f32 %v2718, %v951
    %v2730 = vmul.f32 %v2718, %v952
    %2732 = vset.pattern.permute.xlu0 0
    %2733 = vperm.xlu0 %2732, %v2712
    %v2734 = vpop.permute.xlu0 %2733
    %v2736 = vmul.f32 %v2734, %v1080
    %v2737 = vmul.f32 %v2734, %v1081
    %v2738 = vmul.f32 %v2734, %v1082
    %v2739 = vmul.f32 %v2734, %v1083
    %v2740 = vmul.f32 %v2734, %v1084
    %v2741 = vmul.f32 %v2734, %v1085
    %v2742 = vmul.f32 %v2734, %v1086
    %v2743 = vmul.f32 %v2734, %v1087
    %v2744 = vmul.f32 %v2734, %v1088
    %v2745 = vmul.f32 %v2734, %v1089
    %v2746 = vmul.f32 %v2734, %v1090
    %v2747 = vadd.f32 %v2720, %v2736
    %v2748 = vadd.f32 %v2721, %v2737
    %v2749 = vadd.f32 %v2722, %v2738
    %v2750 = vadd.f32 %v2723, %v2739
    %v2751 = vadd.f32 %v2724, %v2740
    %v2752 = vadd.f32 %v2725, %v2741
    %v2753 = vadd.f32 %v2726, %v2742
    %v2754 = vadd.f32 %v2727, %v2743
    %v2755 = vadd.f32 %v2728, %v2744
    %v2756 = vadd.f32 %v2729, %v2745
    %v2757 = vadd.f32 %v2730, %v2746
    %v2758 = vmul.f32 %v2531, %v2747
    %v2759 = vmul.f32 %v2532, %v2748
    %v2760 = vmul.f32 %v2533, %v2749
    %v2761 = vmul.f32 %v2534, %v2750
    %v2762 = vmul.f32 %v2535, %v2751
    %v2763 = vmul.f32 %v2536, %v2752
    %v2764 = vmul.f32 %v2537, %v2753
    %v2765 = vmul.f32 %v2538, %v2754
    %v2766 = vmul.f32 %v2539, %v2755
    %v2767 = vmul.f32 %v2540, %v2756
    %v2768 = vmul.f32 %v2541, %v2757
    %2770 = vset.pattern.permute.xlu0 0
    %2771 = vperm.xlu0 %2770, %v2628
    %v2772 = vpop.permute.xlu0 %2771
    %v2774 = vmul.f32 %v2772, %v942
    %v2775 = vmul.f32 %v2772, %v943
    %v2776 = vmul.f32 %v2772, %v944
    %v2777 = vmul.f32 %v2772, %v945
    %v2778 = vmul.f32 %v2772, %v946
    %v2779 = vmul.f32 %v2772, %v947
    %v2780 = vmul.f32 %v2772, %v948
    %v2781 = vmul.f32 %v2772, %v949
    %v2782 = vmul.f32 %v2772, %v950
    %v2783 = vmul.f32 %v2772, %v951
    %v2784 = vmul.f32 %v2772, %v952
    %2786 = vset.pattern.permute.xlu0 0
    %2787 = vperm.xlu0 %2786, %v2714
    %v2788 = vpop.permute.xlu0 %2787
    %v2790 = vmul.f32 %v2788, %v1080
    %v2791 = vmul.f32 %v2788, %v1081
    %v2792 = vmul.f32 %v2788, %v1082
    %v2793 = vmul.f32 %v2788, %v1083
    %v2794 = vmul.f32 %v2788, %v1084
    %v2795 = vmul.f32 %v2788, %v1085
    %v2796 = vmul.f32 %v2788, %v1086
    %v2797 = vmul.f32 %v2788, %v1087
    %v2798 = vmul.f32 %v2788, %v1088
    %v2799 = vmul.f32 %v2788, %v1089
    %v2800 = vmul.f32 %v2788, %v1090
    %v2801 = vadd.f32 %v2774, %v2790
    %v2802 = vadd.f32 %v2775, %v2791
    %v2803 = vadd.f32 %v2776, %v2792
    %v2804 = vadd.f32 %v2777, %v2793
    %v2805 = vadd.f32 %v2778, %v2794
    %v2806 = vadd.f32 %v2779, %v2795
    %v2807 = vadd.f32 %v2780, %v2796
    %v2808 = vadd.f32 %v2781, %v2797
    %v2809 = vadd.f32 %v2782, %v2798
    %v2810 = vadd.f32 %v2783, %v2799
    %v2811 = vadd.f32 %v2784, %v2800
    %v2812 = vadd.f32 %v2758, %v2801
    %v2813 = vadd.f32 %v2759, %v2802
    %v2814 = vadd.f32 %v2760, %v2803
    %v2815 = vadd.f32 %v2761, %v2804
    %v2816 = vadd.f32 %v2762, %v2805
    %v2817 = vadd.f32 %v2763, %v2806
    %v2818 = vadd.f32 %v2764, %v2807
    %v2819 = vadd.f32 %v2765, %v2808
    %v2820 = vadd.f32 %v2766, %v2809
    %v2821 = vadd.f32 %v2767, %v2810
    %v2822 = vadd.f32 %v2768, %v2811
    %2834 = vrot.lane.b32.xlu0 %v2812, 36
    %v2835 = vpop.permute.xlu0 %2834
    %2836 = vrot.lane.b32.xlu0 %v2813, 36
    %v2837 = vpop.permute.xlu0 %2836
    %2838 = vrot.lane.b32.xlu0 %v2814, 36
    %v2839 = vpop.permute.xlu0 %2838
    %2840 = vrot.lane.b32.xlu0 %v2815, 36
    %v2841 = vpop.permute.xlu0 %2840
    %2842 = vrot.lane.b32.xlu0 %v2816, 36
    %v2843 = vpop.permute.xlu0 %2842
    %2844 = vrot.lane.b32.xlu0 %v2817, 36
    %v2845 = vpop.permute.xlu0 %2844
    %2846 = vrot.lane.b32.xlu0 %v2818, 36
    %v2847 = vpop.permute.xlu0 %2846
    %2848 = vrot.lane.b32.xlu0 %v2819, 36
    %v2849 = vpop.permute.xlu0 %2848
    %2850 = vrot.lane.b32.xlu0 %v2820, 36
    %v2851 = vpop.permute.xlu0 %2850
    %2852 = vrot.lane.b32.xlu0 %v2821, 36
    %v2853 = vpop.permute.xlu0 %2852
    %2854 = vrot.lane.b32.xlu0 %v2822, 36
    %v2855 = vpop.permute.xlu0 %2854
    %v2856 = vsel %vm147, %v2835, %v2837
    %v2857 = vsel %vm147, %v2837, %v2839
    %v2858 = vsel %vm147, %v2839, %v2841
    %v2859 = vsel %vm147, %v2841, %v2843
    %v2860 = vsel %vm147, %v2843, %v2845
    %v2861 = vsel %vm147, %v2845, %v2847
    %v2862 = vsel %vm147, %v2847, %v2849
    %v2863 = vsel %vm147, %v2849, %v2851
    %v2864 = vsel %vm147, %v2851, %v2853
    %v2865 = vsel %vm147, %v2853, %v2855
    %v2877 = vsel %vm147, 0.0, %v2835
    %v2878 = vsel %vm170, %v2865, 0.0
    %2881 = vrot.lane.b32.xlu0 %v2877, 56
    %v2882 = vpop.permute.xlu0 %2881
    %2883 = vrot.lane.b32.xlu0 %v2856, 56
    %v2884 = vpop.permute.xlu0 %2883
    %2885 = vrot.lane.b32.xlu0 %v2857, 56
    %v2886 = vpop.permute.xlu0 %2885
    %2887 = vrot.lane.b32.xlu0 %v2858, 56
    %v2888 = vpop.permute.xlu0 %2887
    %2889 = vrot.lane.b32.xlu0 %v2859, 56
    %v2890 = vpop.permute.xlu0 %2889
    %2891 = vrot.lane.b32.xlu0 %v2860, 56
    %v2892 = vpop.permute.xlu0 %2891
    %2893 = vrot.lane.b32.xlu0 %v2861, 56
    %v2894 = vpop.permute.xlu0 %2893
    %2895 = vrot.lane.b32.xlu0 %v2862, 56
    %v2896 = vpop.permute.xlu0 %2895
    %2897 = vrot.lane.b32.xlu0 %v2863, 56
    %v2898 = vpop.permute.xlu0 %2897
    %2899 = vrot.lane.b32.xlu0 %v2864, 56
    %v2900 = vpop.permute.xlu0 %2899
    %2901 = vrot.lane.b32.xlu0 %v2878, 56
    %v2902 = vpop.permute.xlu0 %2901
    %v2903 = vsel %vm1422, %v2882, %v2884
    %v2904 = vsel %vm1422, %v2884, %v2886
    %v2905 = vsel %vm1422, %v2886, %v2888
    %v2906 = vsel %vm1422, %v2888, %v2890
    %v2907 = vsel %vm1422, %v2890, %v2892
    %v2908 = vsel %vm1422, %v2892, %v2894
    %v2909 = vsel %vm1422, %v2894, %v2896
    %v2910 = vsel %vm1422, %v2896, %v2898
    %v2911 = vsel %vm1422, %v2898, %v2900
    %v2912 = vsel %vm1422, %v2900, %v2902
    %v2924 = vsel %vm1387, %v2903, %v2812
    %v2925 = vsel %vm1388, %v2904, %v2813
    %v2926 = vsel %vm1389, %v2905, %v2814
    %v2927 = vsel %vm1390, %v2906, %v2815
    %v2928 = vsel %vm1391, %v2907, %v2816
    %v2929 = vsel %vm1392, %v2908, %v2817
    %v2930 = vsel %vm1393, %v2909, %v2818
    %v2931 = vsel %vm1394, %v2910, %v2819
    %v2932 = vsel %vm1395, %v2911, %v2820
    %v2933 = vsel %vm1396, %v2912, %v2821
    %v2934 = vsel %vm1397, %v2902, %v2822
    %v2935 = vsel %vm1470, %v2877, %v2924
    %v2936 = vsel %vm1471, %v2856, %v2925
    %v2937 = vsel %vm1472, %v2857, %v2926
    %v2938 = vsel %vm1473, %v2858, %v2927
    %v2939 = vsel %vm1474, %v2859, %v2928
    %v2940 = vsel %vm1475, %v2860, %v2929
    %v2941 = vsel %vm1476, %v2861, %v2930
    %v2942 = vsel %vm1477, %v2862, %v2931
    %v2943 = vsel %vm1478, %v2863, %v2932
    %v2944 = vsel %vm1479, %v2864, %v2933
    %v2945 = vsel %vm1480, %v2878, %v2934
    %2957 = vrot.lane.b32.xlu0 %v2935, 36
    %v2958 = vpop.permute.xlu0 %2957
    %2959 = vrot.lane.b32.xlu0 %v2936, 36
    %v2960 = vpop.permute.xlu0 %2959
    %2961 = vrot.lane.b32.xlu0 %v2937, 36
    %v2962 = vpop.permute.xlu0 %2961
    %2963 = vrot.lane.b32.xlu0 %v2938, 36
    %v2964 = vpop.permute.xlu0 %2963
    %2965 = vrot.lane.b32.xlu0 %v2939, 36
    %v2966 = vpop.permute.xlu0 %2965
    %2967 = vrot.lane.b32.xlu0 %v2940, 36
    %v2968 = vpop.permute.xlu0 %2967
    %2969 = vrot.lane.b32.xlu0 %v2941, 36
    %v2970 = vpop.permute.xlu0 %2969
    %2971 = vrot.lane.b32.xlu0 %v2942, 36
    %v2972 = vpop.permute.xlu0 %2971
    %2973 = vrot.lane.b32.xlu0 %v2943, 36
    %v2974 = vpop.permute.xlu0 %2973
    %2975 = vrot.lane.b32.xlu0 %v2944, 36
    %v2976 = vpop.permute.xlu0 %2975
    %2977 = vrot.lane.b32.xlu0 %v2945, 36
    %v2978 = vpop.permute.xlu0 %2977
    %v2979 = vsel %vm147, %v2958, %v2960
    %v2980 = vsel %vm147, %v2960, %v2962
    %v2981 = vsel %vm147, %v2962, %v2964
    %v2982 = vsel %vm147, %v2964, %v2966
    %v2983 = vsel %vm147, %v2966, %v2968
    %v2984 = vsel %vm147, %v2968, %v2970
    %v2985 = vsel %vm147, %v2970, %v2972
    %v2986 = vsel %vm147, %v2972, %v2974
    %v2987 = vsel %vm147, %v2974, %v2976
    %v2988 = vsel %vm147, %v2976, %v2978
    %v2991 = vsel %vm147, 0.0, %v2958
    %v2992 = vsel %vm170, %v2988, 0.0
    %2995 = vrot.lane.b32.xlu0 %v2991, 90
    %v2996 = vpop.permute.xlu0 %2995
    %2997 = vrot.lane.b32.xlu0 %v2979, 90
    %v2998 = vpop.permute.xlu0 %2997
    %2999 = vrot.lane.b32.xlu0 %v2980, 90
    %v3000 = vpop.permute.xlu0 %2999
    %3001 = vrot.lane.b32.xlu0 %v2981, 90
    %v3002 = vpop.permute.xlu0 %3001
    %3003 = vrot.lane.b32.xlu0 %v2982, 90
    %v3004 = vpop.permute.xlu0 %3003
    %3005 = vrot.lane.b32.xlu0 %v2983, 90
    %v3006 = vpop.permute.xlu0 %3005
    %3007 = vrot.lane.b32.xlu0 %v2984, 90
    %v3008 = vpop.permute.xlu0 %3007
    %3009 = vrot.lane.b32.xlu0 %v2985, 90
    %v3010 = vpop.permute.xlu0 %3009
    %3011 = vrot.lane.b32.xlu0 %v2986, 90
    %v3012 = vpop.permute.xlu0 %3011
    %3013 = vrot.lane.b32.xlu0 %v2987, 90
    %v3014 = vpop.permute.xlu0 %3013
    %3015 = vrot.lane.b32.xlu0 %v2992, 90
    %v3016 = vpop.permute.xlu0 %3015
    %v3017 = vsel %vm581, %v2996, %v2998
    %v3018 = vsel %vm581, %v2998, %v3000
    %v3019 = vsel %vm581, %v3000, %v3002
    %v3020 = vsel %vm581, %v3002, %v3004
    %v3021 = vsel %vm581, %v3004, %v3006
    %v3022 = vsel %vm581, %v3006, %v3008
    %v3023 = vsel %vm581, %v3008, %v3010
    %v3024 = vsel %vm581, %v3010, %v3012
    %v3025 = vsel %vm581, %v3012, %v3014
    %v3026 = vsel %vm581, %v3014, %v3016
    %v3038 = vsel %vm1554, %v3017, %v2935
    %v3039 = vsel %vm1555, %v3018, %v2936
    %v3040 = vsel %vm1556, %v3019, %v2937
    %v3041 = vsel %vm1557, %v3020, %v2938
    %v3042 = vsel %vm1558, %v3021, %v2939
    %v3043 = vsel %vm1559, %v3022, %v2940
    %v3044 = vsel %vm1560, %v3023, %v2941
    %v3045 = vsel %vm1561, %v3024, %v2942
    %v3046 = vsel %vm1562, %v3025, %v2943
    %v3047 = vsel %vm1563, %v3026, %v2944
    %v3048 = vsel %vm1564, %v3016, %v2945
    %3049 = vrot.lane.b32.xlu0 %v2991, 94
    %v3050 = vpop.permute.xlu0 %3049
    %3051 = vrot.lane.b32.xlu0 %v2979, 94
    %v3052 = vpop.permute.xlu0 %3051
    %3053 = vrot.lane.b32.xlu0 %v2980, 94
    %v3054 = vpop.permute.xlu0 %3053
    %3055 = vrot.lane.b32.xlu0 %v2981, 94
    %v3056 = vpop.permute.xlu0 %3055
    %3057 = vrot.lane.b32.xlu0 %v2982, 94
    %v3058 = vpop.permute.xlu0 %3057
    %3059 = vrot.lane.b32.xlu0 %v2983, 94
    %v3060 = vpop.permute.xlu0 %3059
    %3061 = vrot.lane.b32.xlu0 %v2984, 94
    %v3062 = vpop.permute.xlu0 %3061
    %3063 = vrot.lane.b32.xlu0 %v2985, 94
    %v3064 = vpop.permute.xlu0 %3063
    %3065 = vrot.lane.b32.xlu0 %v2986, 94
    %v3066 = vpop.permute.xlu0 %3065
    %3067 = vrot.lane.b32.xlu0 %v2987, 94
    %v3068 = vpop.permute.xlu0 %3067
    %3069 = vrot.lane.b32.xlu0 %v2992, 94
    %v3070 = vpop.permute.xlu0 %3069
    %v3071 = vsel %vm1669, %v3050, %v3052
    %v3072 = vsel %vm1669, %v3052, %v3054
    %v3073 = vsel %vm1669, %v3054, %v3056
    %v3074 = vsel %vm1669, %v3056, %v3058
    %v3075 = vsel %vm1669, %v3058, %v3060
    %v3076 = vsel %vm1669, %v3060, %v3062
    %v3077 = vsel %vm1669, %v3062, %v3064
    %v3078 = vsel %vm1669, %v3064, %v3066
    %v3079 = vsel %vm1669, %v3066, %v3068
    %v3080 = vsel %vm1669, %v3068, %v3070
    %v3092 = vsel %vm1636, %v3071, %v3038
    %v3093 = vsel %vm1637, %v3072, %v3039
    %v3094 = vsel %vm1638, %v3073, %v3040
    %v3095 = vsel %vm1639, %v3074, %v3041
    %v3096 = vsel %vm1640, %v3075, %v3042
    %v3097 = vsel %vm1641, %v3076, %v3043
    %v3098 = vsel %vm1642, %v3077, %v3044
    %v3099 = vsel %vm1643, %v3078, %v3045
    %v3100 = vsel %vm1644, %v3079, %v3046
    %v3101 = vsel %vm1645, %v3080, %v3047
    %v3102 = vsel %vm1646, %v3070, %v3048
    %v3103 = vld [vmem:[#allocation6] sm:$0xf]
    %v3104 = vld [vmem:[%s14] sm:$0xff]
    %v3105 = vld [vmem:[%s15] sm:$0xff]
    %v3106 = vld [vmem:[%s16] sm:$0xff]
    %3118 = vrot.lane.b32.xlu0 %v3092, 36
    %v3119 = vpop.permute.xlu0 %3118
    %3120 = vrot.lane.b32.xlu0 %v3093, 36
    %v3121 = vpop.permute.xlu0 %3120
    %3122 = vrot.lane.b32.xlu0 %v3094, 36
    %v3123 = vpop.permute.xlu0 %3122
    %3124 = vrot.lane.b32.xlu0 %v3095, 36
    %v3125 = vpop.permute.xlu0 %3124
    %3126 = vrot.lane.b32.xlu0 %v3096, 36
    %v3127 = vpop.permute.xlu0 %3126
    %3128 = vrot.lane.b32.xlu0 %v3097, 36
    %v3129 = vpop.permute.xlu0 %3128
    %3130 = vrot.lane.b32.xlu0 %v3098, 36
    %v3131 = vpop.permute.xlu0 %3130
    %3132 = vrot.lane.b32.xlu0 %v3099, 36
    %v3133 = vpop.permute.xlu0 %3132
    %3134 = vrot.lane.b32.xlu0 %v3100, 36
    %v3135 = vpop.permute.xlu0 %3134
    %3136 = vrot.lane.b32.xlu0 %v3101, 36
    %v3137 = vpop.permute.xlu0 %3136
    %3138 = vrot.lane.b32.xlu0 %v3102, 36
    %v3139 = vpop.permute.xlu0 %3138
    %v3140 = vsel %vm147, %v3119, %v3121
    %v3141 = vsel %vm147, %v3121, %v3123
    %v3142 = vsel %vm147, %v3123, %v3125
    %v3143 = vsel %vm147, %v3125, %v3127
    %v3144 = vsel %vm147, %v3127, %v3129
    %v3145 = vsel %vm147, %v3129, %v3131
    %v3146 = vsel %vm147, %v3131, %v3133
    %v3147 = vsel %vm147, %v3133, %v3135
    %v3148 = vsel %vm147, %v3135, %v3137
    %v3149 = vsel %vm147, %v3137, %v3139
    %v3161 = vsel %vm147, 0.0, %v3119
    %v3162 = vsel %vm170, %v3149, 0.0
    %3165 = vrot.lane.b32.xlu0 %v3161, 127
    %v3166 = vpop.permute.xlu0 %3165
    %3167 = vrot.lane.b32.xlu0 %v3140, 127
    %v3168 = vpop.permute.xlu0 %3167
    %3169 = vrot.lane.b32.xlu0 %v3141, 127
    %v3170 = vpop.permute.xlu0 %3169
    %3171 = vrot.lane.b32.xlu0 %v3142, 127
    %v3172 = vpop.permute.xlu0 %3171
    %3173 = vrot.lane.b32.xlu0 %v3143, 127
    %v3174 = vpop.permute.xlu0 %3173
    %3175 = vrot.lane.b32.xlu0 %v3144, 127
    %v3176 = vpop.permute.xlu0 %3175
    %3177 = vrot.lane.b32.xlu0 %v3145, 127
    %v3178 = vpop.permute.xlu0 %3177
    %3179 = vrot.lane.b32.xlu0 %v3146, 127
    %v3180 = vpop.permute.xlu0 %3179
    %3181 = vrot.lane.b32.xlu0 %v3147, 127
    %v3182 = vpop.permute.xlu0 %3181
    %3183 = vrot.lane.b32.xlu0 %v3148, 127
    %v3184 = vpop.permute.xlu0 %3183
    %3185 = vrot.lane.b32.xlu0 %v3162, 127
    %v3186 = vpop.permute.xlu0 %3185
    %v3187 = vsel %vm207, %v3166, %v3168
    %v3188 = vsel %vm207, %v3168, %v3170
    %v3189 = vsel %vm207, %v3170, %v3172
    %v3190 = vsel %vm207, %v3172, %v3174
    %v3191 = vsel %vm207, %v3174, %v3176
    %v3192 = vsel %vm207, %v3176, %v3178
    %v3193 = vsel %vm207, %v3178, %v3180
    %v3194 = vsel %vm207, %v3180, %v3182
    %v3195 = vsel %vm207, %v3182, %v3184
    %v3196 = vsel %vm207, %v3184, %v3186
    %3208 = vrot.lane.b32.xlu0 %v3161, 126
    %v3209 = vpop.permute.xlu0 %3208
    %3210 = vrot.lane.b32.xlu0 %v3140, 126
    %v3211 = vpop.permute.xlu0 %3210
    %3212 = vrot.lane.b32.xlu0 %v3141, 126
    %v3213 = vpop.permute.xlu0 %3212
    %3214 = vrot.lane.b32.xlu0 %v3142, 126
    %v3215 = vpop.permute.xlu0 %3214
    %3216 = vrot.lane.b32.xlu0 %v3143, 126
    %v3217 = vpop.permute.xlu0 %3216
    %3218 = vrot.lane.b32.xlu0 %v3144, 126
    %v3219 = vpop.permute.xlu0 %3218
    %3220 = vrot.lane.b32.xlu0 %v3145, 126
    %v3221 = vpop.permute.xlu0 %3220
    %3222 = vrot.lane.b32.xlu0 %v3146, 126
    %v3223 = vpop.permute.xlu0 %3222
    %3224 = vrot.lane.b32.xlu0 %v3147, 126
    %v3225 = vpop.permute.xlu0 %3224
    %3226 = vrot.lane.b32.xlu0 %v3148, 126
    %v3227 = vpop.permute.xlu0 %3226
    %3228 = vrot.lane.b32.xlu0 %v3162, 126
    %v3229 = vpop.permute.xlu0 %3228
    %v3230 = vsel %vm262, %v3209, %v3211
    %v3231 = vsel %vm262, %v3211, %v3213
    %v3232 = vsel %vm262, %v3213, %v3215
    %v3233 = vsel %vm262, %v3215, %v3217
    %v3234 = vsel %vm262, %v3217, %v3219
    %v3235 = vsel %vm262, %v3219, %v3221
    %v3236 = vsel %vm262, %v3221, %v3223
    %v3237 = vsel %vm262, %v3223, %v3225
    %v3238 = vsel %vm262, %v3225, %v3227
    %v3239 = vsel %vm262, %v3227, %v3229
    %3251 = vrot.lane.b32.xlu0 %v3161, 110
    %v3252 = vpop.permute.xlu0 %3251
    %3253 = vrot.lane.b32.xlu0 %v3140, 110
    %v3254 = vpop.permute.xlu0 %3253
    %3255 = vrot.lane.b32.xlu0 %v3141, 110
    %v3256 = vpop.permute.xlu0 %3255
    %3257 = vrot.lane.b32.xlu0 %v3142, 110
    %v3258 = vpop.permute.xlu0 %3257
    %3259 = vrot.lane.b32.xlu0 %v3143, 110
    %v3260 = vpop.permute.xlu0 %3259
    %3261 = vrot.lane.b32.xlu0 %v3144, 110
    %v3262 = vpop.permute.xlu0 %3261
    %3263 = vrot.lane.b32.xlu0 %v3145, 110
    %v3264 = vpop.permute.xlu0 %3263
    %3265 = vrot.lane.b32.xlu0 %v3146, 110
    %v3266 = vpop.permute.xlu0 %3265
    %3267 = vrot.lane.b32.xlu0 %v3147, 110
    %v3268 = vpop.permute.xlu0 %3267
    %3269 = vrot.lane.b32.xlu0 %v3148, 110
    %v3270 = vpop.permute.xlu0 %3269
    %3271 = vrot.lane.b32.xlu0 %v3162, 110
    %v3272 = vpop.permute.xlu0 %3271
    %v3273 = vsel %vm317, %v3252, %v3254
    %v3274 = vsel %vm317, %v3254, %v3256
    %v3275 = vsel %vm317, %v3256, %v3258
    %v3276 = vsel %vm317, %v3258, %v3260
    %v3277 = vsel %vm317, %v3260, %v3262
    %v3278 = vsel %vm317, %v3262, %v3264
    %v3279 = vsel %vm317, %v3264, %v3266
    %v3280 = vsel %vm317, %v3266, %v3268
    %v3281 = vsel %vm317, %v3268, %v3270
    %v3282 = vsel %vm317, %v3270, %v3272
    %3294 = vrot.lane.b32.xlu0 %v3161, 109
    %v3295 = vpop.permute.xlu0 %3294
    %3296 = vrot.lane.b32.xlu0 %v3140, 109
    %v3297 = vpop.permute.xlu0 %3296
    %3298 = vrot.lane.b32.xlu0 %v3141, 109
    %v3299 = vpop.permute.xlu0 %3298
    %3300 = vrot.lane.b32.xlu0 %v3142, 109
    %v3301 = vpop.permute.xlu0 %3300
    %3302 = vrot.lane.b32.xlu0 %v3143, 109
    %v3303 = vpop.permute.xlu0 %3302
    %3304 = vrot.lane.b32.xlu0 %v3144, 109
    %v3305 = vpop.permute.xlu0 %3304
    %3306 = vrot.lane.b32.xlu0 %v3145, 109
    %v3307 = vpop.permute.xlu0 %3306
    %3308 = vrot.lane.b32.xlu0 %v3146, 109
    %v3309 = vpop.permute.xlu0 %3308
    %3310 = vrot.lane.b32.xlu0 %v3147, 109
    %v3311 = vpop.permute.xlu0 %3310
    %3312 = vrot.lane.b32.xlu0 %v3148, 109
    %v3313 = vpop.permute.xlu0 %3312
    %3314 = vrot.lane.b32.xlu0 %v3162, 109
    %v3315 = vpop.permute.xlu0 %3314
    %v3316 = vsel %vm372, %v3295, %v3297
    %v3317 = vsel %vm372, %v3297, %v3299
    %v3318 = vsel %vm372, %v3299, %v3301
    %v3319 = vsel %vm372, %v3301, %v3303
    %v3320 = vsel %vm372, %v3303, %v3305
    %v3321 = vsel %vm372, %v3305, %v3307
    %v3322 = vsel %vm372, %v3307, %v3309
    %v3323 = vsel %vm372, %v3309, %v3311
    %v3324 = vsel %vm372, %v3311, %v3313
    %v3325 = vsel %vm372, %v3313, %v3315
    %3337 = vrot.lane.b32.xlu0 %v3161, 108
    %v3338 = vpop.permute.xlu0 %3337
    %3339 = vrot.lane.b32.xlu0 %v3140, 108
    %v3340 = vpop.permute.xlu0 %3339
    %3341 = vrot.lane.b32.xlu0 %v3141, 108
    %v3342 = vpop.permute.xlu0 %3341
    %3343 = vrot.lane.b32.xlu0 %v3142, 108
    %v3344 = vpop.permute.xlu0 %3343
    %3345 = vrot.lane.b32.xlu0 %v3143, 108
    %v3346 = vpop.permute.xlu0 %3345
    %3347 = vrot.lane.b32.xlu0 %v3144, 108
    %v3348 = vpop.permute.xlu0 %3347
    %3349 = vrot.lane.b32.xlu0 %v3145, 108
    %v3350 = vpop.permute.xlu0 %3349
    %3351 = vrot.lane.b32.xlu0 %v3146, 108
    %v3352 = vpop.permute.xlu0 %3351
    %3353 = vrot.lane.b32.xlu0 %v3147, 108
    %v3354 = vpop.permute.xlu0 %3353
    %3355 = vrot.lane.b32.xlu0 %v3148, 108
    %v3356 = vpop.permute.xlu0 %3355
    %3357 = vrot.lane.b32.xlu0 %v3162, 108
    %v3358 = vpop.permute.xlu0 %3357
    %v3359 = vsel %vm427, %v3338, %v3340
    %v3360 = vsel %vm427, %v3340, %v3342
    %v3361 = vsel %vm427, %v3342, %v3344
    %v3362 = vsel %vm427, %v3344, %v3346
    %v3363 = vsel %vm427, %v3346, %v3348
    %v3364 = vsel %vm427, %v3348, %v3350
    %v3365 = vsel %vm427, %v3350, %v3352
    %v3366 = vsel %vm427, %v3352, %v3354
    %v3367 = vsel %vm427, %v3354, %v3356
    %v3368 = vsel %vm427, %v3356, %v3358
    %3380 = vrot.lane.b32.xlu0 %v3161, 92
    %v3381 = vpop.permute.xlu0 %3380
    %3382 = vrot.lane.b32.xlu0 %v3140, 92
    %v3383 = vpop.permute.xlu0 %3382
    %3384 = vrot.lane.b32.xlu0 %v3141, 92
    %v3385 = vpop.permute.xlu0 %3384
    %3386 = vrot.lane.b32.xlu0 %v3142, 92
    %v3387 = vpop.permute.xlu0 %3386
    %3388 = vrot.lane.b32.xlu0 %v3143, 92
    %v3389 = vpop.permute.xlu0 %3388
    %3390 = vrot.lane.b32.xlu0 %v3144, 92
    %v3391 = vpop.permute.xlu0 %3390
    %3392 = vrot.lane.b32.xlu0 %v3145, 92
    %v3393 = vpop.permute.xlu0 %3392
    %3394 = vrot.lane.b32.xlu0 %v3146, 92
    %v3395 = vpop.permute.xlu0 %3394
    %3396 = vrot.lane.b32.xlu0 %v3147, 92
    %v3397 = vpop.permute.xlu0 %3396
    %3398 = vrot.lane.b32.xlu0 %v3148, 92
    %v3399 = vpop.permute.xlu0 %3398
    %3400 = vrot.lane.b32.xlu0 %v3162, 92
    %v3401 = vpop.permute.xlu0 %3400
    %v3402 = vsel %vm482, %v3381, %v3383
    %v3403 = vsel %vm482, %v3383, %v3385
    %v3404 = vsel %vm482, %v3385, %v3387
    %v3405 = vsel %vm482, %v3387, %v3389
    %v3406 = vsel %vm482, %v3389, %v3391
    %v3407 = vsel %vm482, %v3391, %v3393
    %v3408 = vsel %vm482, %v3393, %v3395
    %v3409 = vsel %vm482, %v3395, %v3397
    %v3410 = vsel %vm482, %v3397, %v3399
    %v3411 = vsel %vm482, %v3399, %v3401
    %3423 = vrot.lane.b32.xlu0 %v3161, 91
    %v3424 = vpop.permute.xlu0 %3423
    %3425 = vrot.lane.b32.xlu0 %v3140, 91
    %v3426 = vpop.permute.xlu0 %3425
    %3427 = vrot.lane.b32.xlu0 %v3141, 91
    %v3428 = vpop.permute.xlu0 %3427
    %3429 = vrot.lane.b32.xlu0 %v3142, 91
    %v3430 = vpop.permute.xlu0 %3429
    %3431 = vrot.lane.b32.xlu0 %v3143, 91
    %v3432 = vpop.permute.xlu0 %3431
    %3433 = vrot.lane.b32.xlu0 %v3144, 91
    %v3434 = vpop.permute.xlu0 %3433
    %3435 = vrot.lane.b32.xlu0 %v3145, 91
    %v3436 = vpop.permute.xlu0 %3435
    %3437 = vrot.lane.b32.xlu0 %v3146, 91
    %v3438 = vpop.permute.xlu0 %3437
    %3439 = vrot.lane.b32.xlu0 %v3147, 91
    %v3440 = vpop.permute.xlu0 %3439
    %3441 = vrot.lane.b32.xlu0 %v3148, 91
    %v3442 = vpop.permute.xlu0 %3441
    %3443 = vrot.lane.b32.xlu0 %v3162, 91
    %v3444 = vpop.permute.xlu0 %3443
    %v3445 = vsel %vm537, %v3424, %v3426
    %v3446 = vsel %vm537, %v3426, %v3428
    %v3447 = vsel %vm537, %v3428, %v3430
    %v3448 = vsel %vm537, %v3430, %v3432
    %v3449 = vsel %vm537, %v3432, %v3434
    %v3450 = vsel %vm537, %v3434, %v3436
    %v3451 = vsel %vm537, %v3436, %v3438
    %v3452 = vsel %vm537, %v3438, %v3440
    %v3453 = vsel %vm537, %v3440, %v3442
    %v3454 = vsel %vm537, %v3442, %v3444
    %3466 = vrot.lane.b32.xlu0 %v3161, 90
    %v3467 = vpop.permute.xlu0 %3466
    %3468 = vrot.lane.b32.xlu0 %v3140, 90
    %v3469 = vpop.permute.xlu0 %3468
    %3470 = vrot.lane.b32.xlu0 %v3141, 90
    %v3471 = vpop.permute.xlu0 %3470
    %3472 = vrot.lane.b32.xlu0 %v3142, 90
    %v3473 = vpop.permute.xlu0 %3472
    %3474 = vrot.lane.b32.xlu0 %v3143, 90
    %v3475 = vpop.permute.xlu0 %3474
    %3476 = vrot.lane.b32.xlu0 %v3144, 90
    %v3477 = vpop.permute.xlu0 %3476
    %3478 = vrot.lane.b32.xlu0 %v3145, 90
    %v3479 = vpop.permute.xlu0 %3478
    %3480 = vrot.lane.b32.xlu0 %v3146, 90
    %v3481 = vpop.permute.xlu0 %3480
    %3482 = vrot.lane.b32.xlu0 %v3147, 90
    %v3483 = vpop.permute.xlu0 %3482
    %3484 = vrot.lane.b32.xlu0 %v3148, 90
    %v3485 = vpop.permute.xlu0 %3484
    %3486 = vrot.lane.b32.xlu0 %v3162, 90
    %v3487 = vpop.permute.xlu0 %3486
    %v3488 = vsel %vm581, %v3467, %v3469
    %v3489 = vsel %vm581, %v3469, %v3471
    %v3490 = vsel %vm581, %v3471, %v3473
    %v3491 = vsel %vm581, %v3473, %v3475
    %v3492 = vsel %vm581, %v3475, %v3477
    %v3493 = vsel %vm581, %v3477, %v3479
    %v3494 = vsel %vm581, %v3479, %v3481
    %v3495 = vsel %vm581, %v3481, %v3483
    %v3496 = vsel %vm581, %v3483, %v3485
    %v3497 = vsel %vm581, %v3485, %v3487
    %v3509 = vpack.c.bf16 %v3187, %v3161
    %v3510 = vpack.c.bf16 %v3188, %v3140
    %v3511 = vpack.c.bf16 %v3189, %v3141
    %v3512 = vpack.c.bf16 %v3190, %v3142
    %v3513 = vpack.c.bf16 %v3191, %v3143
    %v3514 = vpack.c.bf16 %v3192, %v3144
    %v3515 = vpack.c.bf16 %v3193, %v3145
    %v3516 = vpack.c.bf16 %v3194, %v3146
    %v3517 = vpack.c.bf16 %v3195, %v3147
    %v3518 = vpack.c.bf16 %v3196, %v3148
    %v3519 = vpack.c.bf16 %v3186, %v3162
    %v3520 = vpack.c.bf16 %v3273, %v3230
    %v3521 = vpack.c.bf16 %v3274, %v3231
    %v3522 = vpack.c.bf16 %v3275, %v3232
    %v3523 = vpack.c.bf16 %v3276, %v3233
    %v3524 = vpack.c.bf16 %v3277, %v3234
    %v3525 = vpack.c.bf16 %v3278, %v3235
    %v3526 = vpack.c.bf16 %v3279, %v3236
    %v3527 = vpack.c.bf16 %v3280, %v3237
    %v3528 = vpack.c.bf16 %v3281, %v3238
    %v3529 = vpack.c.bf16 %v3282, %v3239
    %v3530 = vpack.c.bf16 %v3272, %v3229
    %v3531 = vpack.c.bf16 %v3359, %v3316
    %v3532 = vpack.c.bf16 %v3360, %v3317
    %v3533 = vpack.c.bf16 %v3361, %v3318
    %v3534 = vpack.c.bf16 %v3362, %v3319
    %v3535 = vpack.c.bf16 %v3363, %v3320
    %v3536 = vpack.c.bf16 %v3364, %v3321
    %v3537 = vpack.c.bf16 %v3365, %v3322
    %v3538 = vpack.c.bf16 %v3366, %v3323
    %v3539 = vpack.c.bf16 %v3367, %v3324
    %v3540 = vpack.c.bf16 %v3368, %v3325
    %v3541 = vpack.c.bf16 %v3358, %v3315
    %v3542 = vpack.c.bf16 %v3445, %v3402
    %v3543 = vpack.c.bf16 %v3446, %v3403
    %v3544 = vpack.c.bf16 %v3447, %v3404
    %v3545 = vpack.c.bf16 %v3448, %v3405
    %v3546 = vpack.c.bf16 %v3449, %v3406
    %v3547 = vpack.c.bf16 %v3450, %v3407
    %v3548 = vpack.c.bf16 %v3451, %v3408
    %v3549 = vpack.c.bf16 %v3452, %v3409
    %v3550 = vpack.c.bf16 %v3453, %v3410
    %v3551 = vpack.c.bf16 %v3454, %v3411
    %v3552 = vpack.c.bf16 %v3444, %v3401
    %v3553 = vpack.c.bf16 %v3488, %v3488
    %v3554 = vpack.c.bf16 %v3489, %v3489
    %v3555 = vpack.c.bf16 %v3490, %v3490
    %v3556 = vpack.c.bf16 %v3491, %v3491
    %v3557 = vpack.c.bf16 %v3492, %v3492
    %v3558 = vpack.c.bf16 %v3493, %v3493
    %v3559 = vpack.c.bf16 %v3494, %v3494
    %v3560 = vpack.c.bf16 %v3495, %v3495
    %v3561 = vpack.c.bf16 %v3496, %v3496
    %v3562 = vpack.c.bf16 %v3497, %v3497
    %v3563 = vpack.c.bf16 %v3487, %v3487
    %3565 = vset.pattern.permute.xlu0 0
    %3566 = vperm.xlu0 %3565, %v3104
    %v3567 = vpop.permute.xlu0 %3566
    %3624 = vrot.lane.b32.xlu0 %v3509, 111
    %v3625 = vpop.permute.xlu0 %3624
    %3626 = vrot.lane.b32.xlu0 %v3510, 111
    %v3627 = vpop.permute.xlu0 %3626
    %3628 = vrot.lane.b32.xlu0 %v3511, 111
    %v3629 = vpop.permute.xlu0 %3628
    %3630 = vrot.lane.b32.xlu0 %v3512, 111
    %v3631 = vpop.permute.xlu0 %3630
    %3632 = vrot.lane.b32.xlu0 %v3513, 111
    %v3633 = vpop.permute.xlu0 %3632
    %3634 = vrot.lane.b32.xlu0 %v3514, 111
    %v3635 = vpop.permute.xlu0 %3634
    %3636 = vrot.lane.b32.xlu0 %v3515, 111
    %v3637 = vpop.permute.xlu0 %3636
    %3638 = vrot.lane.b32.xlu0 %v3516, 111
    %v3639 = vpop.permute.xlu0 %3638
    %3640 = vrot.lane.b32.xlu0 %v3517, 111
    %v3641 = vpop.permute.xlu0 %3640
    %3642 = vrot.lane.b32.xlu0 %v3518, 111
    %v3643 = vpop.permute.xlu0 %3642
    %3644 = vrot.lane.b32.xlu0 %v3519, 111
    %v3645 = vpop.permute.xlu0 %3644
    %3646 = vrot.lane.b32.xlu0 %v3520, 111
    %v3647 = vpop.permute.xlu0 %3646
    %3648 = vrot.lane.b32.xlu0 %v3521, 111
    %v3649 = vpop.permute.xlu0 %3648
    %3650 = vrot.lane.b32.xlu0 %v3522, 111
    %v3651 = vpop.permute.xlu0 %3650
    %3652 = vrot.lane.b32.xlu0 %v3523, 111
    %v3653 = vpop.permute.xlu0 %3652
    %3654 = vrot.lane.b32.xlu0 %v3524, 111
    %v3655 = vpop.permute.xlu0 %3654
    %3656 = vrot.lane.b32.xlu0 %v3525, 111
    %v3657 = vpop.permute.xlu0 %3656
    %3658 = vrot.lane.b32.xlu0 %v3526, 111
    %v3659 = vpop.permute.xlu0 %3658
    %3660 = vrot.lane.b32.xlu0 %v3527, 111
    %v3661 = vpop.permute.xlu0 %3660
    %3662 = vrot.lane.b32.xlu0 %v3528, 111
    %v3663 = vpop.permute.xlu0 %3662
    %3664 = vrot.lane.b32.xlu0 %v3529, 111
    %v3665 = vpop.permute.xlu0 %3664
    %3666 = vrot.lane.b32.xlu0 %v3530, 111
    %v3667 = vpop.permute.xlu0 %3666
    %3668 = vrot.lane.b32.xlu0 %v3531, 111
    %v3669 = vpop.permute.xlu0 %3668
    %3670 = vrot.lane.b32.xlu0 %v3532, 111
    %v3671 = vpop.permute.xlu0 %3670
    %3672 = vrot.lane.b32.xlu0 %v3533, 111
    %v3673 = vpop.permute.xlu0 %3672
    %3674 = vrot.lane.b32.xlu0 %v3534, 111
    %v3675 = vpop.permute.xlu0 %3674
    %3676 = vrot.lane.b32.xlu0 %v3535, 111
    %v3677 = vpop.permute.xlu0 %3676
    %3678 = vrot.lane.b32.xlu0 %v3536, 111
    %v3679 = vpop.permute.xlu0 %3678
    %3680 = vrot.lane.b32.xlu0 %v3537, 111
    %v3681 = vpop.permute.xlu0 %3680
    %3682 = vrot.lane.b32.xlu0 %v3538, 111
    %v3683 = vpop.permute.xlu0 %3682
    %3684 = vrot.lane.b32.xlu0 %v3539, 111
    %v3685 = vpop.permute.xlu0 %3684
    %3686 = vrot.lane.b32.xlu0 %v3540, 111
    %v3687 = vpop.permute.xlu0 %3686
    %3688 = vrot.lane.b32.xlu0 %v3541, 111
    %v3689 = vpop.permute.xlu0 %3688
    %3690 = vrot.lane.b32.xlu0 %v3542, 111
    %v3691 = vpop.permute.xlu0 %3690
    %3692 = vrot.lane.b32.xlu0 %v3543, 111
    %v3693 = vpop.permute.xlu0 %3692
    %3694 = vrot.lane.b32.xlu0 %v3544, 111
    %v3695 = vpop.permute.xlu0 %3694
    %3696 = vrot.lane.b32.xlu0 %v3545, 111
    %v3697 = vpop.permute.xlu0 %3696
    %3698 = vrot.lane.b32.xlu0 %v3546, 111
    %v3699 = vpop.permute.xlu0 %3698
    %3700 = vrot.lane.b32.xlu0 %v3547, 111
    %v3701 = vpop.permute.xlu0 %3700
    %3702 = vrot.lane.b32.xlu0 %v3548, 111
    %v3703 = vpop.permute.xlu0 %3702
    %3704 = vrot.lane.b32.xlu0 %v3549, 111
    %v3705 = vpop.permute.xlu0 %3704
    %3706 = vrot.lane.b32.xlu0 %v3550, 111
    %v3707 = vpop.permute.xlu0 %3706
    %3708 = vrot.lane.b32.xlu0 %v3551, 111
    %v3709 = vpop.permute.xlu0 %3708
    %3710 = vrot.lane.b32.xlu0 %v3552, 111
    %v3711 = vpop.permute.xlu0 %3710
    %3712 = vrot.lane.b32.xlu0 %v3553, 111
    %v3713 = vpop.permute.xlu0 %3712
    %3714 = vrot.lane.b32.xlu0 %v3554, 111
    %v3715 = vpop.permute.xlu0 %3714
    %3716 = vrot.lane.b32.xlu0 %v3555, 111
    %v3717 = vpop.permute.xlu0 %3716
    %3718 = vrot.lane.b32.xlu0 %v3556, 111
    %v3719 = vpop.permute.xlu0 %3718
    %3720 = vrot.lane.b32.xlu0 %v3557, 111
    %v3721 = vpop.permute.xlu0 %3720
    %3722 = vrot.lane.b32.xlu0 %v3558, 111
    %v3723 = vpop.permute.xlu0 %3722
    %3724 = vrot.lane.b32.xlu0 %v3559, 111
    %v3725 = vpop.permute.xlu0 %3724
    %3726 = vrot.lane.b32.xlu0 %v3560, 111
    %v3727 = vpop.permute.xlu0 %3726
    %3728 = vrot.lane.b32.xlu0 %v3561, 111
    %v3729 = vpop.permute.xlu0 %3728
    %3730 = vrot.lane.b32.xlu0 %v3562, 111
    %v3731 = vpop.permute.xlu0 %3730
    %3732 = vrot.lane.b32.xlu0 %v3563, 111
    %v3733 = vpop.permute.xlu0 %3732
    %v3734 = vsel %vm736, %v3625, %v3627
    %v3735 = vsel %vm736, %v3627, %v3629
    %v3736 = vsel %vm736, %v3629, %v3631
    %v3737 = vsel %vm736, %v3631, %v3633
    %v3738 = vsel %vm736, %v3633, %v3635
    %v3739 = vsel %vm736, %v3635, %v3637
    %v3740 = vsel %vm736, %v3637, %v3639
    %v3741 = vsel %vm736, %v3639, %v3641
    %v3742 = vsel %vm736, %v3641, %v3643
    %v3743 = vsel %vm736, %v3643, %v3645
    %v3744 = vsel %vm736, %v3647, %v3649
    %v3745 = vsel %vm736, %v3649, %v3651
    %v3746 = vsel %vm736, %v3651, %v3653
    %v3747 = vsel %vm736, %v3653, %v3655
    %v3748 = vsel %vm736, %v3655, %v3657
    %v3749 = vsel %vm736, %v3657, %v3659
    %v3750 = vsel %vm736, %v3659, %v3661
    %v3751 = vsel %vm736, %v3661, %v3663
    %v3752 = vsel %vm736, %v3663, %v3665
    %v3753 = vsel %vm736, %v3665, %v3667
    %v3754 = vsel %vm736, %v3669, %v3671
    %v3755 = vsel %vm736, %v3671, %v3673
    %v3756 = vsel %vm736, %v3673, %v3675
    %v3757 = vsel %vm736, %v3675, %v3677
    %v3758 = vsel %vm736, %v3677, %v3679
    %v3759 = vsel %vm736, %v3679, %v3681
    %v3760 = vsel %vm736, %v3681, %v3683
    %v3761 = vsel %vm736, %v3683, %v3685
    %v3762 = vsel %vm736, %v3685, %v3687
    %v3763 = vsel %vm736, %v3687, %v3689
    %v3764 = vsel %vm736, %v3691, %v3693
    %v3765 = vsel %vm736, %v3693, %v3695
    %v3766 = vsel %vm736, %v3695, %v3697
    %v3767 = vsel %vm736, %v3697, %v3699
    %v3768 = vsel %vm736, %v3699, %v3701
    %v3769 = vsel %vm736, %v3701, %v3703
    %v3770 = vsel %vm736, %v3703, %v3705
    %v3771 = vsel %vm736, %v3705, %v3707
    %v3772 = vsel %vm736, %v3707, %v3709
    %v3773 = vsel %vm736, %v3709, %v3711
    %v3774 = vsel %vm736, %v3713, %v3715
    %v3775 = vsel %vm736, %v3715, %v3717
    %v3776 = vsel %vm736, %v3717, %v3719
    %v3777 = vsel %vm736, %v3719, %v3721
    %v3778 = vsel %vm736, %v3721, %v3723
    %v3779 = vsel %vm736, %v3723, %v3725
    %v3780 = vsel %vm736, %v3725, %v3727
    %v3781 = vsel %vm736, %v3727, %v3729
    %v3782 = vsel %vm736, %v3729, %v3731
    %v3783 = vsel %vm736, %v3731, %v3733
    %vm3828 = vcmask 588800
    %v3830 = vsel %vm3828, %v3103, 0
    %v3833 = vsel %vm639, %v3774, 0
    %v3836 = vsel %vm639, %v3775, 0
    %v3839 = vsel %vm639, %v3776, 0
    %v3842 = vsel %vm639, %v3777, 0
    %v3845 = vsel %vm639, %v3778, 0
    %v3848 = vsel %vm639, %v3779, 0
    %v3851 = vsel %vm639, %v3780, 0
    %v3854 = vsel %vm639, %v3781, 0
    %v3857 = vsel %vm639, %v3782, 0
    %v3860 = vsel %vm639, %v3783, 0
    %v3863 = vsel %vm639, %v3733, 0
    %3865 = vmatpush.bf16.msra.mxu0 0
    %3866 = vmatpush.bf16.msra.mxu0 0
    %3867 = vmatpush.bf16.msra.mxu0 0
    %3868 = vmatpush.bf16.msra.mxu0 %v3833
    %3869 = vmatpush.bf16.msra.mxu0 %v3764
    %3870 = vmatpush.bf16.msra.mxu0 %v3754
    %3871 = vmatpush.bf16.msra.mxu0 %v3744
    %3872 = vmatpush.bf16.msra.mxu0 %v3734
    %3873 = vmatmul.bf16.gmra.mxu0 %v3830
    %v3874 = vpop.f32.mrf.mxu0
    %v3875 = vadd.f32 %v3567, %v3874
    %v3876 = vpop.f32.mrf.mxu0
    %3877 = vdwg.mxu0
    %3878 = vmatpush.bf16.msra.mxu0 0
    %3879 = vmatpush.bf16.msra.mxu0 0
    %3880 = vmatpush.bf16.msra.mxu0 0
    %3881 = vmatpush.bf16.msra.mxu0 %v3836
    %3882 = vmatpush.bf16.msra.mxu0 %v3765
    %3883 = vmatpush.bf16.msra.mxu0 %v3755
    %3884 = vmatpush.bf16.msra.mxu0 %v3745
    %3885 = vmatpush.bf16.msra.mxu0 %v3735
    %3886 = vmatmul.bf16.gmra.mxu0 %v3830
    %v3887 = vpop.f32.mrf.mxu0
    %v3888 = vadd.f32 %v3567, %v3887
    %v3889 = vpop.f32.mrf.mxu0
    %3890 = vdwg.mxu0
    %3891 = vmatpush.bf16.msra.mxu0 0
    %3892 = vmatpush.bf16.msra.mxu0 0
    %3893 = vmatpush.bf16.msra.mxu0 0
    %3894 = vmatpush.bf16.msra.mxu0 %v3839
    %3895 = vmatpush.bf16.msra.mxu0 %v3766
    %3896 = vmatpush.bf16.msra.mxu0 %v3756
    %3897 = vmatpush.bf16.msra.mxu0 %v3746
    %3898 = vmatpush.bf16.msra.mxu0 %v3736
    %3899 = vmatmul.bf16.gmra.mxu0 %v3830
    %v3900 = vpop.f32.mrf.mxu0
    %v3901 = vadd.f32 %v3567, %v3900
    %v3902 = vpop.f32.mrf.mxu0
    %3903 = vdwg.mxu0
    %3904 = vmatpush.bf16.msra.mxu0 0
    %3905 = vmatpush.bf16.msra.mxu0 0
    %3906 = vmatpush.bf16.msra.mxu0 0
    %3907 = vmatpush.bf16.msra.mxu0 %v3842
    %3908 = vmatpush.bf16.msra.mxu0 %v3767
    %3909 = vmatpush.bf16.msra.mxu0 %v3757
    %3910 = vmatpush.bf16.msra.mxu0 %v3747
    %3911 = vmatpush.bf16.msra.mxu0 %v3737
    %3912 = vmatmul.bf16.gmra.mxu0 %v3830
    %v3913 = vpop.f32.mrf.mxu0
    %v3914 = vadd.f32 %v3567, %v3913
    %v3915 = vpop.f32.mrf.mxu0
    %3916 = vdwg.mxu0
    %3917 = vmatpush.bf16.msra.mxu0 0
    %3918 = vmatpush.bf16.msra.mxu0 0
    %3919 = vmatpush.bf16.msra.mxu0 0
    %3920 = vmatpush.bf16.msra.mxu0 %v3845
    %3921 = vmatpush.bf16.msra.mxu0 %v3768
    %3922 = vmatpush.bf16.msra.mxu0 %v3758
    %3923 = vmatpush.bf16.msra.mxu0 %v3748
    %3924 = vmatpush.bf16.msra.mxu0 %v3738
    %3925 = vmatmul.bf16.gmra.mxu0 %v3830
    %v3926 = vpop.f32.mrf.mxu0
    %v3927 = vadd.f32 %v3567, %v3926
    %v3928 = vpop.f32.mrf.mxu0
    %3929 = vdwg.mxu0
    %3930 = vmatpush.bf16.msra.mxu0 0
    %3931 = vmatpush.bf16.msra.mxu0 0
    %3932 = vmatpush.bf16.msra.mxu0 0
    %3933 = vmatpush.bf16.msra.mxu0 %v3848
    %3934 = vmatpush.bf16.msra.mxu0 %v3769
    %3935 = vmatpush.bf16.msra.mxu0 %v3759
    %3936 = vmatpush.bf16.msra.mxu0 %v3749
    %3937 = vmatpush.bf16.msra.mxu0 %v3739
    %3938 = vmatmul.bf16.gmra.mxu0 %v3830
    %v3939 = vpop.f32.mrf.mxu0
    %v3940 = vadd.f32 %v3567, %v3939
    %v3941 = vpop.f32.mrf.mxu0
    %3942 = vdwg.mxu0
    %3943 = vmatpush.bf16.msra.mxu0 0
    %3944 = vmatpush.bf16.msra.mxu0 0
    %3945 = vmatpush.bf16.msra.mxu0 0
    %3946 = vmatpush.bf16.msra.mxu0 %v3851
    %3947 = vmatpush.bf16.msra.mxu0 %v3770
    %3948 = vmatpush.bf16.msra.mxu0 %v3760
    %3949 = vmatpush.bf16.msra.mxu0 %v3750
    %3950 = vmatpush.bf16.msra.mxu0 %v3740
    %3951 = vmatmul.bf16.gmra.mxu0 %v3830
    %v3952 = vpop.f32.mrf.mxu0
    %v3953 = vadd.f32 %v3567, %v3952
    %v3954 = vpop.f32.mrf.mxu0
    %3955 = vdwg.mxu0
    %3956 = vmatpush.bf16.msra.mxu0 0
    %3957 = vmatpush.bf16.msra.mxu0 0
    %3958 = vmatpush.bf16.msra.mxu0 0
    %3959 = vmatpush.bf16.msra.mxu0 %v3854
    %3960 = vmatpush.bf16.msra.mxu0 %v3771
    %3961 = vmatpush.bf16.msra.mxu0 %v3761
    %3962 = vmatpush.bf16.msra.mxu0 %v3751
    %3963 = vmatpush.bf16.msra.mxu0 %v3741
    %3964 = vmatmul.bf16.gmra.mxu0 %v3830
    %v3965 = vpop.f32.mrf.mxu0
    %v3966 = vadd.f32 %v3567, %v3965
    %v3967 = vpop.f32.mrf.mxu0
    %3968 = vdwg.mxu0
    %3969 = vmatpush.bf16.msra.mxu0 0
    %3970 = vmatpush.bf16.msra.mxu0 0
    %3971 = vmatpush.bf16.msra.mxu0 0
    %3972 = vmatpush.bf16.msra.mxu0 %v3857
    %3973 = vmatpush.bf16.msra.mxu0 %v3772
    %3974 = vmatpush.bf16.msra.mxu0 %v3762
    %3975 = vmatpush.bf16.msra.mxu0 %v3752
    %3976 = vmatpush.bf16.msra.mxu0 %v3742
    %3977 = vmatmul.bf16.gmra.mxu0 %v3830
    %v3978 = vpop.f32.mrf.mxu0
    %v3979 = vadd.f32 %v3567, %v3978
    %v3980 = vpop.f32.mrf.mxu0
    %3981 = vdwg.mxu0
    %3982 = vmatpush.bf16.msra.mxu0 0
    %3983 = vmatpush.bf16.msra.mxu0 0
    %3984 = vmatpush.bf16.msra.mxu0 0
    %3985 = vmatpush.bf16.msra.mxu0 %v3860
    %3986 = vmatpush.bf16.msra.mxu0 %v3773
    %3987 = vmatpush.bf16.msra.mxu0 %v3763
    %3988 = vmatpush.bf16.msra.mxu0 %v3753
    %3989 = vmatpush.bf16.msra.mxu0 %v3743
    %3990 = vmatmul.bf16.gmra.mxu0 %v3830
    %v3991 = vpop.f32.mrf.mxu0
    %v3992 = vadd.f32 %v3567, %v3991
    %v3993 = vpop.f32.mrf.mxu0
    %3994 = vdwg.mxu0
    %3995 = vmatpush.bf16.msra.mxu0 0
    %3996 = vmatpush.bf16.msra.mxu0 0
    %3997 = vmatpush.bf16.msra.mxu0 0
    %3998 = vmatpush.bf16.msra.mxu0 %v3863
    %3999 = vmatpush.bf16.msra.mxu0 %v3711
    %4000 = vmatpush.bf16.msra.mxu0 %v3689
    %4001 = vmatpush.bf16.msra.mxu0 %v3667
    %4002 = vmatpush.bf16.msra.mxu0 %v3645
    %4003 = vmatmul.bf16.gmra.mxu0 %v3830
    %v4004 = vpop.f32.mrf.mxu0
    %v4005 = vadd.f32 %v3567, %v4004
    %v4006 = vpop.f32.mrf.mxu0
    %4007 = vdwg.mxu0
    %v4008 = vmax.f32 %v3875, 0.0
    %v4009 = vmax.f32 %v3888, 0.0
    %v4010 = vmax.f32 %v3901, 0.0
    %v4011 = vmax.f32 %v3914, 0.0
    %v4012 = vmax.f32 %v3927, 0.0
    %v4013 = vmax.f32 %v3940, 0.0
    %v4014 = vmax.f32 %v3953, 0.0
    %v4015 = vmax.f32 %v3966, 0.0
    %v4016 = vmax.f32 %v3979, 0.0
    %v4017 = vmax.f32 %v3992, 0.0
    %v4018 = vmax.f32 %v4005, 0.0
    %v4019 = vmul.f32 %v4008, %v942
    %v4020 = vmul.f32 %v4009, %v943
    %v4021 = vmul.f32 %v4010, %v944
    %v4022 = vmul.f32 %v4011, %v945
    %v4023 = vmul.f32 %v4012, %v946
    %v4024 = vmul.f32 %v4013, %v947
    %v4025 = vmul.f32 %v4014, %v948
    %v4026 = vmul.f32 %v4015, %v949
    %v4027 = vmul.f32 %v4016, %v950
    %v4028 = vmul.f32 %v4017, %v951
    %v4029 = vmul.f32 %v4018, %v952
    %v4030 = vadd.f32 %v4019, %v4020
    %v4031 = vadd.f32 %v4030, %v4021
    %v4032 = vadd.f32 %v4031, %v4022
    %v4033 = vadd.f32 %v4032, %v4023
    %v4034 = vadd.f32 %v4033, %v4024
    %v4035 = vadd.f32 %v4034, %v4025
    %v4036 = vadd.f32 %v4035, %v4026
    %v4037 = vadd.f32 %v4036, %v4027
    %v4038 = vadd.f32 %v4037, %v4028
    %v4039 = vsel %vm2562, %v4029, 0.0
    %v4040 = vadd.f32 %v4038, %v4039
    %4041 = vadd.xlane.f32.xlu0 %v4040
    %v4042 = vpop.xlane.xlu0 %4041
    %v4043 = vmul.f32 %v4042, %v1005
    %v4044 = vsub.f32 %v4008, %v4043
    %v4045 = vsub.f32 %v4009, %v4043
    %v4046 = vsub.f32 %v4010, %v4043
    %v4047 = vsub.f32 %v4011, %v4043
    %v4048 = vsub.f32 %v4012, %v4043
    %v4049 = vsub.f32 %v4013, %v4043
    %v4050 = vsub.f32 %v4014, %v4043
    %v4051 = vsub.f32 %v4015, %v4043
    %v4052 = vsub.f32 %v4016, %v4043
    %v4053 = vsub.f32 %v4017, %v4043
    %v4054 = vsub.f32 %v4018, %v4043
    %v4055 = vmul.f32 %v4044, %v4044
    %v4056 = vmul.f32 %v4045, %v4045
    %v4057 = vmul.f32 %v4046, %v4046
    %v4058 = vmul.f32 %v4047, %v4047
    %v4059 = vmul.f32 %v4048, %v4048
    %v4060 = vmul.f32 %v4049, %v4049
    %v4061 = vmul.f32 %v4050, %v4050
    %v4062 = vmul.f32 %v4051, %v4051
    %v4063 = vmul.f32 %v4052, %v4052
    %v4064 = vmul.f32 %v4053, %v4053
    %v4065 = vmul.f32 %v4054, %v4054
    %v4066 = vmul.f32 %v942, %v4055
    %v4067 = vmul.f32 %v943, %v4056
    %v4068 = vmul.f32 %v944, %v4057
    %v4069 = vmul.f32 %v945, %v4058
    %v4070 = vmul.f32 %v946, %v4059
    %v4071 = vmul.f32 %v947, %v4060
    %v4072 = vmul.f32 %v948, %v4061
    %v4073 = vmul.f32 %v949, %v4062
    %v4074 = vmul.f32 %v950, %v4063
    %v4075 = vmul.f32 %v951, %v4064
    %v4076 = vmul.f32 %v952, %v4065
    %v4077 = vadd.f32 %v4066, %v4067
    %v4078 = vadd.f32 %v4077, %v4068
    %v4079 = vadd.f32 %v4078, %v4069
    %v4080 = vadd.f32 %v4079, %v4070
    %v4081 = vadd.f32 %v4080, %v4071
    %v4082 = vadd.f32 %v4081, %v4072
    %v4083 = vadd.f32 %v4082, %v4073
    %v4084 = vadd.f32 %v4083, %v4074
    %v4085 = vadd.f32 %v4084, %v4075
    %v4086 = vsel %vm2562, %v4076, 0.0
    %v4087 = vadd.f32 %v4085, %v4086
    %4088 = vadd.xlane.f32.xlu0 %v4087
    %v4089 = vpop.xlane.xlu0 %4088
    %v4090 = vmul.f32 %v4089, %v1005
    %v4091 = vadd.f32 %v4090, 1e-05
    %v4092 = vrsqrt.pop %v4091
    %v4093 = vmul.f32 %v4092, %v4091
    %v4094 = vmul.f32 %v4093, %v4092
    %v4095 = vmul.f32 0.5, %v4094
    %v4096 = vsub.f32 1.5, %v4095
    %v4097 = vmul.f32 %v4092, %v4096
    %vm4098 = vweird.f32 %v4091
    %vm4099 = vweird.f32 %v4092
    %vm4100 = vmor %vm4098, %vm4099
    %v4101 = vsel %vm4100, %v4092, %v4097
    %v4102 = vmul.f32 %v3105, %v4101
    %v4103 = vmul.f32 %v4043, %v4102
    %v4104 = vsub.f32 %v3106, %v4103
    %v4105 = vmul.f32 %v4008, %v1080
    %v4106 = vmul.f32 %v4009, %v1081
    %v4107 = vmul.f32 %v4010, %v1082
    %v4108 = vmul.f32 %v4011, %v1083
    %v4109 = vmul.f32 %v4012, %v1084
    %v4110 = vmul.f32 %v4013, %v1085
    %v4111 = vmul.f32 %v4014, %v1086
    %v4112 = vmul.f32 %v4015, %v1087
    %v4113 = vmul.f32 %v4016, %v1088
    %v4114 = vmul.f32 %v4017, %v1089
    %v4115 = vmul.f32 %v4018, %v1090
    %v4116 = vadd.f32 %v4105, %v4106
    %v4117 = vadd.f32 %v4116, %v4107
    %v4118 = vadd.f32 %v4117, %v4108
    %v4119 = vadd.f32 %v4118, %v4109
    %v4120 = vadd.f32 %v4119, %v4110
    %v4121 = vadd.f32 %v4120, %v4111
    %v4122 = vadd.f32 %v4121, %v4112
    %v4123 = vadd.f32 %v4122, %v4113
    %v4124 = vadd.f32 %v4123, %v4114
    %v4125 = vsel %vm2562, %v4115, 0.0
    %v4126 = vadd.f32 %v4124, %v4125
    %4127 = vadd.xlane.f32.xlu0 %v4126
    %v4128 = vpop.xlane.xlu0 %4127
    %v4129 = vmul.f32 %v4128, %v1005
    %v4130 = vsub.f32 %v4008, %v4129
    %v4131 = vsub.f32 %v4009, %v4129
    %v4132 = vsub.f32 %v4010, %v4129
    %v4133 = vsub.f32 %v4011, %v4129
    %v4134 = vsub.f32 %v4012, %v4129
    %v4135 = vsub.f32 %v4013, %v4129
    %v4136 = vsub.f32 %v4014, %v4129
    %v4137 = vsub.f32 %v4015, %v4129
    %v4138 = vsub.f32 %v4016, %v4129
    %v4139 = vsub.f32 %v4017, %v4129
    %v4140 = vsub.f32 %v4018, %v4129
    %v4141 = vmul.f32 %v4130, %v4130
    %v4142 = vmul.f32 %v4131, %v4131
    %v4143 = vmul.f32 %v4132, %v4132
    %v4144 = vmul.f32 %v4133, %v4133
    %v4145 = vmul.f32 %v4134, %v4134
    %v4146 = vmul.f32 %v4135, %v4135
    %v4147 = vmul.f32 %v4136, %v4136
    %v4148 = vmul.f32 %v4137, %v4137
    %v4149 = vmul.f32 %v4138, %v4138
    %v4150 = vmul.f32 %v4139, %v4139
    %v4151 = vmul.f32 %v4140, %v4140
    %v4152 = vmul.f32 %v1080, %v4141
    %v4153 = vmul.f32 %v1081, %v4142
    %v4154 = vmul.f32 %v1082, %v4143
    %v4155 = vmul.f32 %v1083, %v4144
    %v4156 = vmul.f32 %v1084, %v4145
    %v4157 = vmul.f32 %v1085, %v4146
    %v4158 = vmul.f32 %v1086, %v4147
    %v4159 = vmul.f32 %v1087, %v4148
    %v4160 = vmul.f32 %v1088, %v4149
    %v4161 = vmul.f32 %v1089, %v4150
    %v4162 = vmul.f32 %v1090, %v4151
    %v4163 = vadd.f32 %v4152, %v4153
    %v4164 = vadd.f32 %v4163, %v4154
    %v4165 = vadd.f32 %v4164, %v4155
    %v4166 = vadd.f32 %v4165, %v4156
    %v4167 = vadd.f32 %v4166, %v4157
    %v4168 = vadd.f32 %v4167, %v4158
    %v4169 = vadd.f32 %v4168, %v4159
    %v4170 = vadd.f32 %v4169, %v4160
    %v4171 = vadd.f32 %v4170, %v4161
    %v4172 = vsel %vm2562, %v4162, 0.0
    %v4173 = vadd.f32 %v4171, %v4172
    %4174 = vadd.xlane.f32.xlu0 %v4173
    %v4175 = vpop.xlane.xlu0 %4174
    %v4176 = vmul.f32 %v4175, %v1005
    %v4177 = vadd.f32 %v4176, 1e-05
    %v4178 = vrsqrt.pop %v4177
    %v4179 = vmul.f32 %v4178, %v4177
    %v4180 = vmul.f32 %v4179, %v4178
    %v4181 = vmul.f32 0.5, %v4180
    %v4182 = vsub.f32 1.5, %v4181
    %v4183 = vmul.f32 %v4178, %v4182
    %vm4184 = vweird.f32 %v4177
    %vm4185 = vweird.f32 %v4178
    %vm4186 = vmor %vm4184, %vm4185
    %v4187 = vsel %vm4186, %v4178, %v4183
    %v4188 = vmul.f32 %v3105, %v4187
    %v4189 = vmul.f32 %v4129, %v4188
    %v4190 = vsub.f32 %v3106, %v4189
    %4192 = vset.pattern.permute.xlu0 0
    %4193 = vperm.xlu0 %4192, %v4102
    %v4194 = vpop.permute.xlu0 %4193
    %v4196 = vmul.f32 %v4194, %v942
    %v4197 = vmul.f32 %v4194, %v943
    %v4198 = vmul.f32 %v4194, %v944
    %v4199 = vmul.f32 %v4194, %v945
    %v4200 = vmul.f32 %v4194, %v946
    %v4201 = vmul.f32 %v4194, %v947
    %v4202 = vmul.f32 %v4194, %v948
    %v4203 = vmul.f32 %v4194, %v949
    %v4204 = vmul.f32 %v4194, %v950
    %v4205 = vmul.f32 %v4194, %v951
    %v4206 = vmul.f32 %v4194, %v952
    %4208 = vset.pattern.permute.xlu0 0
    %4209 = vperm.xlu0 %4208, %v4188
    %v4210 = vpop.permute.xlu0 %4209
    %v4212 = vmul.f32 %v4210, %v1080
    %v4213 = vmul.f32 %v4210, %v1081
    %v4214 = vmul.f32 %v4210, %v1082
    %v4215 = vmul.f32 %v4210, %v1083
    %v4216 = vmul.f32 %v4210, %v1084
    %v4217 = vmul.f32 %v4210, %v1085
    %v4218 = vmul.f32 %v4210, %v1086
    %v4219 = vmul.f32 %v4210, %v1087
    %v4220 = vmul.f32 %v4210, %v1088
    %v4221 = vmul.f32 %v4210, %v1089
    %v4222 = vmul.f32 %v4210, %v1090
    %v4223 = vadd.f32 %v4196, %v4212
    %v4224 = vadd.f32 %v4197, %v4213
    %v4225 = vadd.f32 %v4198, %v4214
    %v4226 = vadd.f32 %v4199, %v4215
    %v4227 = vadd.f32 %v4200, %v4216
    %v4228 = vadd.f32 %v4201, %v4217
    %v4229 = vadd.f32 %v4202, %v4218
    %v4230 = vadd.f32 %v4203, %v4219
    %v4231 = vadd.f32 %v4204, %v4220
    %v4232 = vadd.f32 %v4205, %v4221
    %v4233 = vadd.f32 %v4206, %v4222
    %v4234 = vmul.f32 %v4008, %v4223
    %v4235 = vmul.f32 %v4009, %v4224
    %v4236 = vmul.f32 %v4010, %v4225
    %v4237 = vmul.f32 %v4011, %v4226
    %v4238 = vmul.f32 %v4012, %v4227
    %v4239 = vmul.f32 %v4013, %v4228
    %v4240 = vmul.f32 %v4014, %v4229
    %v4241 = vmul.f32 %v4015, %v4230
    %v4242 = vmul.f32 %v4016, %v4231
    %v4243 = vmul.f32 %v4017, %v4232
    %v4244 = vmul.f32 %v4018, %v4233
    %4246 = vset.pattern.permute.xlu0 0
    %4247 = vperm.xlu0 %4246, %v4104
    %v4248 = vpop.permute.xlu0 %4247
    %v4250 = vmul.f32 %v4248, %v942
    %v4251 = vmul.f32 %v4248, %v943
    %v4252 = vmul.f32 %v4248, %v944
    %v4253 = vmul.f32 %v4248, %v945
    %v4254 = vmul.f32 %v4248, %v946
    %v4255 = vmul.f32 %v4248, %v947
    %v4256 = vmul.f32 %v4248, %v948
    %v4257 = vmul.f32 %v4248, %v949
    %v4258 = vmul.f32 %v4248, %v950
    %v4259 = vmul.f32 %v4248, %v951
    %v4260 = vmul.f32 %v4248, %v952
    %4262 = vset.pattern.permute.xlu0 0
    %4263 = vperm.xlu0 %4262, %v4190
    %v4264 = vpop.permute.xlu0 %4263
    %v4266 = vmul.f32 %v4264, %v1080
    %v4267 = vmul.f32 %v4264, %v1081
    %v4268 = vmul.f32 %v4264, %v1082
    %v4269 = vmul.f32 %v4264, %v1083
    %v4270 = vmul.f32 %v4264, %v1084
    %v4271 = vmul.f32 %v4264, %v1085
    %v4272 = vmul.f32 %v4264, %v1086
    %v4273 = vmul.f32 %v4264, %v1087
    %v4274 = vmul.f32 %v4264, %v1088
    %v4275 = vmul.f32 %v4264, %v1089
    %v4276 = vmul.f32 %v4264, %v1090
    %v4277 = vadd.f32 %v4250, %v4266
    %v4278 = vadd.f32 %v4251, %v4267
    %v4279 = vadd.f32 %v4252, %v4268
    %v4280 = vadd.f32 %v4253, %v4269
    %v4281 = vadd.f32 %v4254, %v4270
    %v4282 = vadd.f32 %v4255, %v4271
    %v4283 = vadd.f32 %v4256, %v4272
    %v4284 = vadd.f32 %v4257, %v4273
    %v4285 = vadd.f32 %v4258, %v4274
    %v4286 = vadd.f32 %v4259, %v4275
    %v4287 = vadd.f32 %v4260, %v4276
    %v4288 = vadd.f32 %v4234, %v4277
    %v4289 = vadd.f32 %v4235, %v4278
    %v4290 = vadd.f32 %v4236, %v4279
    %v4291 = vadd.f32 %v4237, %v4280
    %v4292 = vadd.f32 %v4238, %v4281
    %v4293 = vadd.f32 %v4239, %v4282
    %v4294 = vadd.f32 %v4240, %v4283
    %v4295 = vadd.f32 %v4241, %v4284
    %v4296 = vadd.f32 %v4242, %v4285
    %v4297 = vadd.f32 %v4243, %v4286
    %v4298 = vadd.f32 %v4244, %v4287
    %v4299 = vpack.c.bf16 %v4289, %v4288
    %v4300 = vpack.c.bf16 %v4291, %v4290
    %v4301 = vpack.c.bf16 %v4293, %v4292
    %v4302 = vpack.c.bf16 %v4295, %v4294
    %v4303 = vpack.c.bf16 %v4297, %v4296
    %v4304 = vpack.c.bf16 %v4298, %v4298
    %4305 = vst [vmem:[%s17] sm:$0xff] %v4299
    %4306 = vst [vmem:[%s17 + $0x8] sm:$0xff] %v4300
    %4307 = vst [vmem:[%s17 + $0x10] sm:$0xff] %v4301
    %4308 = vst [vmem:[%s17 + $0x18] sm:$0xff] %v4302
    %4309 = vst [vmem:[%s17 + $0x20] sm:$0xff] %v4303
    %4310 = vst.msk [vmem:[%s17 + $0x28] sm:$0xf] %vm994, %v4304
    // Predicated region
    $region82: #{siamese_forward.2} parent=1 // pred_check
      _
    $region83: #{siamese_forward.2} parent=1 // pred_check_branch
      %4312 = sbr.rel (0) target = $region85
    $region84: #{siamese_forward.2} parent=1 // pred_region
      _
    $region85: #{siamese_forward.2} parent=1 // pred_fallthru
      _
    // Predicated region
    $region86: #{siamese_forward.2} parent=1 // pred_check
      _
    $region87: #{siamese_forward.2} parent=1 // pred_check_branch
      %4314 = sbr.rel (0) target = $region89
    $region88: #{siamese_forward.2} parent=1 // pred_region
      _
    $region89: #{siamese_forward.2} parent=1 // pred_fallthru
      _
    %4315 = vsyncpa [#allocation3], 1
    %4316 = vsyncpa [#allocation5], 1

</llo_original>
